<compile_context>
chip_gen: v7x
topology: tpu7x:2x2x1
jax: 0.10.0
libtpu: 0.0.40
codegen_flags: <defaults>
</compile_context>

<pallas_src>
import functools

import jax
import jax.numpy as jnp
from jax.experimental import pallas as pl
from jax.experimental.pallas import tpu as pltpu


def _conv_block_kernel(x_ref, w1_ref, g1_ref, b1_ref, w2_ref, g2_ref, b2_ref,
                       gmat_ref, col_ref, o_ref, *,
                       H, W, C_in, C_out, eps, slope, fold1, fold2, mxu_dtype):
    """One batch sample per grid step; the whole block stays in VMEM.

    Flat "padded-width" row-major layout, channels on the lane dim:
      x_ref:    (1, LX, C_in)     reflect-padded input, Hp*Wp rows + slack tail (f32)
      w1_ref:   (9*C_in,  C_out)  conv1 weights, tap-major rows (bf16)
      w2_ref:   (9*C_out, C_out)  conv2 weights, tap-major rows (bf16)
      g*/b*:    (1, C_out)        GroupNorm affine (f32)
      gmat_ref: (C_out, C_out)    group-averaging matrix, 1/(g*H*W) within a group
      col_ref:  (L, 1)            column index (j mod Wp) of every flat row (f32)
      o_ref:    (1, L, C_out)     output in the same flat layout; junk columns
                                  are dropped by the wrapper.  L = H*(W+2).
    """
    Wp = W + 2
    Hp = H + 2
    L = H * Wp
    LX = x_ref.shape[1]

    col = col_ref[...]                                   # (L, 1) f32, values 0..Wp-1
    valid = (col < W).astype(jnp.float32)                # masks the 2 junk cols / row
    is_left = col == 0.0
    is_right = col == float(Wp - 1)

    def conv3x3(src, w_ref, cin, fold):
        # src: (>= 2*Wp+2 + L, cin) f32; each tap is a contiguous row-offset slice.
        def tap(t):
            off = (t // 3) * Wp + (t % 3)
            return src[off:off + L]

        if fold:
            # Fold the 9 taps into the contraction dim -> one well-fed MXU matmul.
            taps = jnp.concatenate([tap(t).astype(mxu_dtype) for t in range(9)],
                                   axis=1)               # (L, 9*cin) bf16
            return jnp.dot(taps, w_ref[...], preferred_element_type=jnp.float32)

        # Wide-channel fallback: 9 accumulating dots (K = cin each).
        # TODO(synk): switch to lax.fori_loop for very large tiles to bound live ranges.
        acc = jnp.zeros((L, C_out), jnp.float32)
        for t in range(9):
            acc = acc + jnp.dot(tap(t).astype(mxu_dtype),
                                w_ref[pl.ds(t * cin, cin), :],
                                preferred_element_type=jnp.float32)
        return acc

    def group_norm(acc, gamma, beta):
        # Stats over valid pixels only; sum & sum-of-squares share one matmul.
        masked = acc * valid                                           # (L, C_out)
        stats = jnp.concatenate(
            [jnp.sum(masked, axis=0, keepdims=True),
             jnp.sum(masked * acc, axis=0, keepdims=True)], axis=0)    # (2, C_out)
        gstats = jnp.dot(stats, gmat_ref[...], preferred_element_type=jnp.float32)
        mean = gstats[0:1]                                             # (1, C_out)
        var = jnp.maximum(gstats[1:2] - mean * mean, 0.0)              # clamp cancellation
        scale = gamma * jax.lax.rsqrt(var + eps)
        shift = beta - mean * scale
        return acc * scale + shift                                     # one FMA pass

    def leaky_relu(v):
        return jnp.where(v >= 0, v, slope * v)

    # ------------------------- conv1 + GN + LeakyReLU -------------------------
    xv = x_ref[0]                                                      # (LX, C_in) f32
    y = leaky_relu(group_norm(conv3x3(xv, w1_ref, C_in, fold1),
                              g1_ref[...], b1_ref[...]))
    # TODO(synk): Dropout2d(0.3) treated as identity (inference); training-mode
    # channel dropout would draw pltpu.prng_random_bits here.

    # ------- reflect-pad the intermediate (stays in VMEM, no HBM trip) --------
    # z[y*Wp + c] = intermediate(y, reflect(c-1)), built from 3 shifted copies;
    # the wrap rows of each shift are never selected.
    down1 = jnp.concatenate([y[:1], y[:-1]], axis=0)     # value at j: y[j-1]
    up1 = jnp.concatenate([y[1:], y[-1:]], axis=0)       # value at j: y[j+1]
    down3 = jnp.concatenate([y[:3], y[:-3]], axis=0)     # value at j: y[j-3]
    z = jnp.where(is_left, up1, jnp.where(is_right, down3, down1))     # (L, C_out)
    tail = jnp.zeros((LX - Hp * Wp, C_out), jnp.float32)
    pad_full = jnp.concatenate(
        [z[Wp:2 * Wp],                      # top pad row    = image row 1
         z,                                 # padded rows 1..H
         z[(H - 2) * Wp:(H - 1) * Wp],      # bottom pad row = image row H-2
         tail], axis=0)                     # slack so every tap slice is in-bounds

    # ------------------------- conv2 + GN + LeakyReLU -------------------------
    y2 = leaky_relu(group_norm(conv3x3(pad_full, w2_ref, C_out, fold2),
                               g2_ref[...], b2_ref[...]))
    # TODO(synk): second Dropout2d(0.3) is also identity (inference).

    o_ref[0] = y2.astype(o_ref.dtype)


def _round_up(x, m):
    return (x + m - 1) // m * m


def conv_block_forward(x, w1, gamma1, beta1, w2, gamma2, beta2, *,
                       num_groups=32, eps=1e-5, negative_slope=0.01,
                       mxu_dtype=jnp.bfloat16):
    """Pallas implementation of Conv_Block.forward (inference).

    x:  (N, C_in, H, W) f32 NCHW;  w1: (C_out, C_in, 3, 3);  w2: (C_out, C_out, 3, 3)
    gamma*, beta*: (C_out,).  Returns (N, C_out, H, W).
    """
    N, C_in, H, W = x.shape
    C_out = w1.shape[0]
    assert C_out % num_groups == 0, "GroupNorm(32, C_out) requires C_out % 32 == 0"
    assert H >= 2 and W >= 2, "reflect padding of 1 needs H, W >= 2"
    g = C_out // num_groups

    Hp, Wp = H + 2, W + 2
    L = H * Wp                               # flat rows the kernel computes per sample
    LX = _round_up(Hp * Wp + 2, 8)           # padded-input rows (+slack, 8-aligned)

    # Fold the 3x3 taps into the contraction dim when K stays MXU-friendly.
    fold1 = 9 * C_in <= 512
    fold2 = 9 * C_out <= 512

    # ---- glue (XLA): NCHW -> NHWC, reflect pad, flatten rows to (Hp*Wp, C) ----
    x_nhwc = jnp.transpose(x, (0, 2, 3, 1)).astype(jnp.float32)
    x_pad = jnp.pad(x_nhwc, ((0, 0), (1, 1), (1, 1), (0, 0)), mode="reflect")
    x_flat = x_pad.reshape(N, Hp * Wp, C_in)
    x_flat = jnp.pad(x_flat, ((0, 0), (0, LX - Hp * Wp), (0, 0)))

    # conv weights (C_out, C_in, 3, 3) -> tap-major (9*C_in, C_out), bf16 for the MXU.
    w1_t = jnp.transpose(w1, (2, 3, 1, 0)).reshape(9 * C_in, C_out).astype(mxu_dtype)
    w2_t = jnp.transpose(w2, (2, 3, 1, 0)).reshape(9 * C_out, C_out).astype(mxu_dtype)

    g1 = gamma1.reshape(1, C_out).astype(jnp.float32)
    b1 = beta1.reshape(1, C_out).astype(jnp.float32)
    g2 = gamma2.reshape(1, C_out).astype(jnp.float32)
    b2 = beta2.reshape(1, C_out).astype(jnp.float32)

    # group-averaging matrix: gmat[j, c] = 1/(g*H*W) iff j, c are in the same group.
    grp = jnp.arange(C_out) // g
    gmat = (grp[:, None] == grp[None, :]).astype(jnp.float32) / float(g * H * W)

    # per-flat-row column index (j mod Wp): lets the kernel mask junk columns and
    # build the reflect borders with plain compares (no in-kernel iota/rem needed).
    col = (jnp.arange(L, dtype=jnp.int32) % Wp).astype(jnp.float32).reshape(L, 1)

    kernel = functools.partial(
        _conv_block_kernel, H=H, W=W, C_in=C_in, C_out=C_out,
        eps=float(eps), slope=float(negative_slope),
        fold1=fold1, fold2=fold2, mxu_dtype=mxu_dtype)

    flops = 2 * N * H * W * 9 * (C_in * C_out + C_out * C_out)
    bytes_accessed = int(4 * x_flat.size + 2 * (w1_t.size + w2_t.size)
                         + 4 * (gmat.size + 4 * C_out + N * L * C_out))

    # VMEM budget: double-buffered in/out blocks + weights + in-kernel temporaries.
    vmem = 2 * (LX * C_in * 4 + L * C_out * 4)
    vmem += 2 * 2 * (w1_t.size + w2_t.size) + 4 * (gmat.size + 4 * C_out + L)
    vmem += LX * C_out * 4 + 6 * L * C_out * 4
    if fold1:
        vmem += L * 9 * C_in * 2
    if fold2:
        vmem += L * 9 * C_out * 2
    vmem_limit = int(max(32 * 1024 * 1024, min(int(vmem * 1.5), 64 * 1024 * 1024)))

    out_flat = pl.pallas_call(
        kernel,
        out_shape=jax.ShapeDtypeStruct((N, L, C_out), jnp.float32),
        grid_spec=pltpu.PrefetchScalarGridSpec(
            num_scalar_prefetch=0,
            grid=(N,),
            in_specs=[
                pl.BlockSpec((1, LX, C_in), lambda n: (n, 0, 0)),
                pl.BlockSpec((9 * C_in, C_out), lambda n: (0, 0)),
                pl.BlockSpec((1, C_out), lambda n: (0, 0)),
                pl.BlockSpec((1, C_out), lambda n: (0, 0)),
                pl.BlockSpec((9 * C_out, C_out), lambda n: (0, 0)),
                pl.BlockSpec((1, C_out), lambda n: (0, 0)),
                pl.BlockSpec((1, C_out), lambda n: (0, 0)),
                pl.BlockSpec((C_out, C_out), lambda n: (0, 0)),
                pl.BlockSpec((L, 1), lambda n: (0, 0)),
            ],
            out_specs=pl.BlockSpec((1, L, C_out), lambda n: (n, 0, 0)),
        ),
        compiler_params=pltpu.CompilerParams(
            # TODO(synk): for realistic UNet resolutions add an H-tile grid axis
            # (two-pass GroupNorm reduction) and mark it core-parallel so both
            # v7x TensorCores stay busy within its 64 MiB VMEM budget.
            dimension_semantics=("parallel",),
            vmem_limit_bytes=vmem_limit,
        ),
        cost_estimate=pl.CostEstimate(
            flops=flops, transcendentals=2 * N * C_out,
            bytes_accessed=bytes_accessed),
    )(x_flat, w1_t, g1, b1, w2_t, g2, b2, gmat, col)

    # ---- glue (XLA): drop the 2 junk columns per row, NHWC -> NCHW ----
    out = out_flat.reshape(N, H, Wp, C_out)[:, :, :W, :]
    return jnp.transpose(out, (0, 3, 1, 2)).astype(x.dtype)


def _reference_forward(x, w1, g1, b1, w2, g2, b2, *, num_groups=32, eps=1e-5,
                       slope=0.01, mxu_dtype=jnp.bfloat16):
    """Pure-JAX reference (bf16 conv operands, f32 accumulation — same as kernel)."""

    def conv(inp, w):
        xp = jnp.pad(inp, ((0, 0), (0, 0), (1, 1), (1, 1)), mode="reflect")
        return jax.lax.conv_general_dilated(
            xp.astype(mxu_dtype), w.astype(mxu_dtype), (1, 1), "VALID",
            dimension_numbers=("NCHW", "OIHW", "NCHW"),
            preferred_element_type=jnp.float32)

    def gn(inp, gamma, beta):
        n, c, hh, ww = inp.shape
        xg = inp.reshape(n, num_groups, (c // num_groups) * hh * ww)
        mean = xg.mean(axis=2, keepdims=True)
        var = xg.var(axis=2, keepdims=True)
        xn = ((xg - mean) / jnp.sqrt(var + eps)).reshape(n, c, hh, ww)
        return xn * gamma[None, :, None, None] + beta[None, :, None, None]

    def lrelu(v):
        return jnp.where(v >= 0, v, slope * v)

    y = lrelu(gn(conv(x, w1), g1, b1))          # Dropout2d = identity (eval)
    y = lrelu(gn(conv(y, w2), g2, b2))
    return y


if __name__ == "__main__":
    key = jax.random.PRNGKey(0)
    ks = jax.random.split(key, 7)

    # Small shapes consistent with the module: GroupNorm(32, C_out) needs C_out % 32 == 0.
    N, C_in, C_out, H, W = 2, 4, 32, 16, 16

    x = jax.random.normal(ks[0], (N, C_in, H, W), dtype=jnp.float32)
    w1 = jax.random.normal(ks[1], (C_out, C_in, 3, 3), dtype=jnp.float32) * 0.2
    w2 = jax.random.normal(ks[2], (C_out, C_out, 3, 3), dtype=jnp.float32) * 0.1
    gamma1 = 1.0 + 0.1 * jax.random.normal(ks[3], (C_out,), dtype=jnp.float32)
    beta1 = 0.1 * jax.random.normal(ks[4], (C_out,), dtype=jnp.float32)
    gamma2 = 1.0 + 0.1 * jax.random.normal(ks[5], (C_out,), dtype=jnp.float32)
    beta2 = 0.1 * jax.random.normal(ks[6], (C_out,), dtype=jnp.float32)

    out = conv_block_forward(x, w1, gamma1, beta1, w2, gamma2, beta2)
    jax.block_until_ready(out)

    ref = _reference_forward(x, w1, gamma1, beta1, w2, gamma2, beta2)
    assert out.shape == (N, C_out, H, W)
    err = jnp.max(jnp.abs(out - ref))
    assert jnp.allclose(out, ref, atol=1e-2, rtol=1e-2), f"max abs err = {err}"

    print("KERNEL_OK")
</pallas_src>

<mosaic_0001>
module attributes {stable_mosaic.version = 11 : i64} {
  func.func @_conv_block_kernel(%arg0: i32, %arg1: memref<1x328x4xf32, #tpu.memory_space<vmem>>, %arg2: memref<36x32xbf16, #tpu.memory_space<vmem>>, %arg3: memref<1x32xf32, #tpu.memory_space<vmem>>, %arg4: memref<1x32xf32, #tpu.memory_space<vmem>>, %arg5: memref<288x32xbf16, #tpu.memory_space<vmem>>, %arg6: memref<1x32xf32, #tpu.memory_space<vmem>>, %arg7: memref<1x32xf32, #tpu.memory_space<vmem>>, %arg8: memref<32x32xf32, #tpu.memory_space<vmem>>, %arg9: memref<288x1xf32, #tpu.memory_space<vmem>>, %arg10: memref<1x288x32xf32, #tpu.memory_space<vmem>>) attributes {dimension_semantics = [#tpu.dimension_semantics<parallel>], iteration_bounds = array<i64: 2>, scalar_prefetch = 0 : i64, scratch_operands = 0 : i64, tpu.core_type = #tpu.core_type<tc>, window_params = [{transform_indices = @transform_0, window_bounds = array<i64: 1, 328, 4>}, {pipeline_mode = #tpu.pipeline_mode<synchronous>, transform_indices = @transform_1, window_bounds = array<i64: 36, 32>}, {pipeline_mode = #tpu.pipeline_mode<synchronous>, transform_indices = @transform_2, window_bounds = array<i64: 1, 32>}, {pipeline_mode = #tpu.pipeline_mode<synchronous>, transform_indices = @transform_3, window_bounds = array<i64: 1, 32>}, {pipeline_mode = #tpu.pipeline_mode<synchronous>, transform_indices = @transform_4, window_bounds = array<i64: 288, 32>}, {pipeline_mode = #tpu.pipeline_mode<synchronous>, transform_indices = @transform_5, window_bounds = array<i64: 1, 32>}, {pipeline_mode = #tpu.pipeline_mode<synchronous>, transform_indices = @transform_6, window_bounds = array<i64: 1, 32>}, {pipeline_mode = #tpu.pipeline_mode<synchronous>, transform_indices = @transform_7, window_bounds = array<i64: 32, 32>}, {pipeline_mode = #tpu.pipeline_mode<synchronous>, transform_indices = @transform_8, window_bounds = array<i64: 288, 1>}, {transform_indices = @transform_9, window_bounds = array<i64: 1, 288, 32>}]} {
    %c0 = arith.constant 0 : index
    %c0_0 = arith.constant 0 : index
    %0 = vector.load %arg9[%c0, %c0_0] : memref<288x1xf32, #tpu.memory_space<vmem>>, vector<288x1xf32>
    %cst = arith.constant 1.600000e+01 : f32
    %1 = vector.broadcast %cst : f32 to vector<288x1xf32>
    %2 = arith.cmpf olt, %0, %1 : vector<288x1xf32>
    %3 = arith.extui %2 : vector<288x1xi1> to vector<288x1xi32>
    %4 = arith.sitofp %3 : vector<288x1xi32> to vector<288x1xf32>
    %cst_1 = arith.constant 0.000000e+00 : f32
    %5 = vector.broadcast %cst_1 : f32 to vector<288x1xf32>
    %6 = arith.cmpf oeq, %0, %5 : vector<288x1xf32>
    %cst_2 = arith.constant 1.700000e+01 : f32
    %7 = vector.broadcast %cst_2 : f32 to vector<288x1xf32>
    %8 = arith.cmpf oeq, %0, %7 : vector<288x1xf32>
    %c0_3 = arith.constant 0 : index
    %c0_4 = arith.constant 0 : index
    %c0_5 = arith.constant 0 : index
    %9 = vector.load %arg1[%c0_3, %c0_4, %c0_5] : memref<1x328x4xf32, #tpu.memory_space<vmem>>, vector<1x328x4xf32>
    %10 = vector.shape_cast %9 : vector<1x328x4xf32> to vector<328x4xf32>
    %11 = vector.extract_strided_slice %10 {offsets = [0, 0], sizes = [288, 4], strides = [1, 1]} : vector<328x4xf32> to vector<288x4xf32>
    %12 = arith.truncf %11 : vector<288x4xf32> to vector<288x4xbf16>
    %13 = vector.extract_strided_slice %10 {offsets = [1, 0], sizes = [288, 4], strides = [1, 1]} : vector<328x4xf32> to vector<288x4xf32>
    %14 = arith.truncf %13 : vector<288x4xf32> to vector<288x4xbf16>
    %15 = vector.extract_strided_slice %10 {offsets = [2, 0], sizes = [288, 4], strides = [1, 1]} : vector<328x4xf32> to vector<288x4xf32>
    %16 = arith.truncf %15 : vector<288x4xf32> to vector<288x4xbf16>
    %17 = vector.extract_strided_slice %10 {offsets = [18, 0], sizes = [288, 4], strides = [1, 1]} : vector<328x4xf32> to vector<288x4xf32>
    %18 = arith.truncf %17 : vector<288x4xf32> to vector<288x4xbf16>
    %19 = vector.extract_strided_slice %10 {offsets = [19, 0], sizes = [288, 4], strides = [1, 1]} : vector<328x4xf32> to vector<288x4xf32>
    %20 = arith.truncf %19 : vector<288x4xf32> to vector<288x4xbf16>
    %21 = vector.extract_strided_slice %10 {offsets = [20, 0], sizes = [288, 4], strides = [1, 1]} : vector<328x4xf32> to vector<288x4xf32>
    %22 = arith.truncf %21 : vector<288x4xf32> to vector<288x4xbf16>
    %23 = vector.extract_strided_slice %10 {offsets = [36, 0], sizes = [288, 4], strides = [1, 1]} : vector<328x4xf32> to vector<288x4xf32>
    %24 = arith.truncf %23 : vector<288x4xf32> to vector<288x4xbf16>
    %25 = vector.extract_strided_slice %10 {offsets = [37, 0], sizes = [288, 4], strides = [1, 1]} : vector<328x4xf32> to vector<288x4xf32>
    %26 = arith.truncf %25 : vector<288x4xf32> to vector<288x4xbf16>
    %27 = vector.extract_strided_slice %10 {offsets = [38, 0], sizes = [288, 4], strides = [1, 1]} : vector<328x4xf32> to vector<288x4xf32>
    %28 = arith.truncf %27 : vector<288x4xf32> to vector<288x4xbf16>
    %29 = tpu.concatenate %12, %14, %16, %18, %20, %22, %24, %26, %28 in 1 : vector<288x4xbf16>, vector<288x4xbf16>, vector<288x4xbf16>, vector<288x4xbf16>, vector<288x4xbf16>, vector<288x4xbf16>, vector<288x4xbf16>, vector<288x4xbf16>, vector<288x4xbf16> -> vector<288x36xbf16>
    %c0_6 = arith.constant 0 : index
    %c0_7 = arith.constant 0 : index
    %30 = vector.load %arg2[%c0_6, %c0_7] : memref<36x32xbf16, #tpu.memory_space<vmem>>, vector<36x32xbf16>
    %cst_8 = arith.constant dense<0.000000e+00> : vector<288x32xf32>
    %31 = tpu.matmul %29, %30, %cst_8 {dimension_numbers = #tpu.dot_dimension_numbers<[1], [0], [0], [1], [0, 0, 1, 1], [], []>} : vector<288x36xbf16>, vector<36x32xbf16>, vector<288x32xf32> -> vector<288x32xf32>
    %c0_9 = arith.constant 0 : index
    %c0_10 = arith.constant 0 : index
    %32 = vector.load %arg3[%c0_9, %c0_10] : memref<1x32xf32, #tpu.memory_space<vmem>>, vector<1x32xf32>
    %c0_11 = arith.constant 0 : index
    %c0_12 = arith.constant 0 : index
    %33 = vector.load %arg4[%c0_11, %c0_12] : memref<1x32xf32, #tpu.memory_space<vmem>>, vector<1x32xf32>
    %34 = vector.broadcast %4 : vector<288x1xf32> to vector<288x32xf32>
    %35 = arith.mulf %31, %34 : vector<288x32xf32>
    %cst_13 = arith.constant dense<0.000000e+00> : vector<32xf32>
    %36 = vector.multi_reduction <add>, %35, %cst_13 [0] : vector<288x32xf32> to vector<32xf32>
    %37 = vector.shape_cast %36 : vector<32xf32> to vector<1x32xf32>
    %38 = arith.mulf %35, %31 : vector<288x32xf32>
    %cst_14 = arith.constant dense<0.000000e+00> : vector<32xf32>
    %39 = vector.multi_reduction <add>, %38, %cst_14 [0] : vector<288x32xf32> to vector<32xf32>
    %40 = vector.shape_cast %39 : vector<32xf32> to vector<1x32xf32>
    %41 = tpu.concatenate %37, %40 in 0 : vector<1x32xf32>, vector<1x32xf32> -> vector<2x32xf32>
    %c0_15 = arith.constant 0 : index
    %c0_16 = arith.constant 0 : index
    %42 = vector.load %arg8[%c0_15, %c0_16] : memref<32x32xf32, #tpu.memory_space<vmem>>, vector<32x32xf32>
    %cst_17 = arith.constant dense<0.000000e+00> : vector<2x32xf32>
    %43 = tpu.matmul %41, %42, %cst_17 {dimension_numbers = #tpu.dot_dimension_numbers<[1], [0], [0], [1], [0, 0, 1, 1], [], []>} : vector<2x32xf32>, vector<32x32xf32>, vector<2x32xf32> -> vector<2x32xf32>
    %44 = vector.extract_strided_slice %43 {offsets = [0, 0], sizes = [1, 32], strides = [1, 1]} : vector<2x32xf32> to vector<1x32xf32>
    %45 = vector.extract_strided_slice %43 {offsets = [1, 0], sizes = [1, 32], strides = [1, 1]} : vector<2x32xf32> to vector<1x32xf32>
    %46 = arith.mulf %44, %44 : vector<1x32xf32>
    %47 = arith.subf %45, %46 : vector<1x32xf32>
    %cst_18 = arith.constant 0.000000e+00 : f32
    %48 = vector.broadcast %cst_18 : f32 to vector<1x32xf32>
    %49 = arith.maximumf %47, %48 : vector<1x32xf32>
    %cst_19 = arith.constant 9.99999974E-6 : f32
    %50 = vector.broadcast %cst_19 : f32 to vector<1x32xf32>
    %51 = arith.addf %49, %50 : vector<1x32xf32>
    %52 = math.rsqrt %51 : vector<1x32xf32>
    %53 = arith.mulf %32, %52 : vector<1x32xf32>
    %54 = arith.mulf %44, %53 : vector<1x32xf32>
    %55 = arith.subf %33, %54 : vector<1x32xf32>
    %56 = vector.broadcast %53 : vector<1x32xf32> to vector<288x32xf32>
    %57 = arith.mulf %31, %56 : vector<288x32xf32>
    %58 = vector.broadcast %55 : vector<1x32xf32> to vector<288x32xf32>
    %59 = arith.addf %57, %58 : vector<288x32xf32>
    %cst_20 = arith.constant 0.000000e+00 : f32
    %60 = vector.broadcast %cst_20 : f32 to vector<288x32xf32>
    %61 = arith.cmpf oge, %59, %60 : vector<288x32xf32>
    %cst_21 = arith.constant 0.00999999977 : f32
    %62 = vector.broadcast %cst_21 : f32 to vector<288x32xf32>
    %63 = arith.mulf %62, %59 : vector<288x32xf32>
    %64 = arith.select %61, %59, %63 : vector<288x32xi1>, vector<288x32xf32>
    %65 = vector.extract_strided_slice %64 {offsets = [0, 0], sizes = [1, 32], strides = [1, 1]} : vector<288x32xf32> to vector<1x32xf32>
    %66 = vector.extract_strided_slice %64 {offsets = [0, 0], sizes = [287, 32], strides = [1, 1]} : vector<288x32xf32> to vector<287x32xf32>
    %67 = tpu.concatenate %65, %66 in 0 : vector<1x32xf32>, vector<287x32xf32> -> vector<288x32xf32>
    %68 = vector.extract_strided_slice %64 {offsets = [1, 0], sizes = [287, 32], strides = [1, 1]} : vector<288x32xf32> to vector<287x32xf32>
    %69 = vector.extract_strided_slice %64 {offsets = [287, 0], sizes = [1, 32], strides = [1, 1]} : vector<288x32xf32> to vector<1x32xf32>
    %70 = tpu.concatenate %68, %69 in 0 : vector<287x32xf32>, vector<1x32xf32> -> vector<288x32xf32>
    %71 = vector.extract_strided_slice %64 {offsets = [0, 0], sizes = [3, 32], strides = [1, 1]} : vector<288x32xf32> to vector<3x32xf32>
    %72 = vector.extract_strided_slice %64 {offsets = [0, 0], sizes = [285, 32], strides = [1, 1]} : vector<288x32xf32> to vector<285x32xf32>
    %73 = tpu.concatenate %71, %72 in 0 : vector<3x32xf32>, vector<285x32xf32> -> vector<288x32xf32>
    %74 = vector.shape_cast %8 : vector<288x1xi1> to vector<288x1xi1>
    %75 = vector.broadcast %74 : vector<288x1xi1> to vector<288x32xi1>
    %76 = arith.select %75, %73, %67 : vector<288x32xi1>, vector<288x32xf32>
    %77 = vector.shape_cast %6 : vector<288x1xi1> to vector<288x1xi1>
    %78 = vector.broadcast %77 : vector<288x1xi1> to vector<288x32xi1>
    %79 = arith.select %78, %70, %76 : vector<288x32xi1>, vector<288x32xf32>
    %cst_22 = arith.constant 0.000000e+00 : f32
    %80 = vector.broadcast %cst_22 : f32 to vector<4x32xf32>
    %81 = vector.extract_strided_slice %79 {offsets = [18, 0], sizes = [18, 32], strides = [1, 1]} : vector<288x32xf32> to vector<18x32xf32>
    %82 = vector.extract_strided_slice %79 {offsets = [252, 0], sizes = [18, 32], strides = [1, 1]} : vector<288x32xf32> to vector<18x32xf32>
    %83 = tpu.concatenate %81, %79, %82, %80 in 0 : vector<18x32xf32>, vector<288x32xf32>, vector<18x32xf32>, vector<4x32xf32> -> vector<328x32xf32>
    %84 = vector.extract_strided_slice %83 {offsets = [0, 0], sizes = [288, 32], strides = [1, 1]} : vector<328x32xf32> to vector<288x32xf32>
    %85 = arith.truncf %84 : vector<288x32xf32> to vector<288x32xbf16>
    %86 = vector.extract_strided_slice %83 {offsets = [1, 0], sizes = [288, 32], strides = [1, 1]} : vector<328x32xf32> to vector<288x32xf32>
    %87 = arith.truncf %86 : vector<288x32xf32> to vector<288x32xbf16>
    %88 = vector.extract_strided_slice %83 {offsets = [2, 0], sizes = [288, 32], strides = [1, 1]} : vector<328x32xf32> to vector<288x32xf32>
    %89 = arith.truncf %88 : vector<288x32xf32> to vector<288x32xbf16>
    %90 = vector.extract_strided_slice %83 {offsets = [18, 0], sizes = [288, 32], strides = [1, 1]} : vector<328x32xf32> to vector<288x32xf32>
    %91 = arith.truncf %90 : vector<288x32xf32> to vector<288x32xbf16>
    %92 = vector.extract_strided_slice %83 {offsets = [19, 0], sizes = [288, 32], strides = [1, 1]} : vector<328x32xf32> to vector<288x32xf32>
    %93 = arith.truncf %92 : vector<288x32xf32> to vector<288x32xbf16>
    %94 = vector.extract_strided_slice %83 {offsets = [20, 0], sizes = [288, 32], strides = [1, 1]} : vector<328x32xf32> to vector<288x32xf32>
    %95 = arith.truncf %94 : vector<288x32xf32> to vector<288x32xbf16>
    %96 = vector.extract_strided_slice %83 {offsets = [36, 0], sizes = [288, 32], strides = [1, 1]} : vector<328x32xf32> to vector<288x32xf32>
    %97 = arith.truncf %96 : vector<288x32xf32> to vector<288x32xbf16>
    %98 = vector.extract_strided_slice %83 {offsets = [37, 0], sizes = [288, 32], strides = [1, 1]} : vector<328x32xf32> to vector<288x32xf32>
    %99 = arith.truncf %98 : vector<288x32xf32> to vector<288x32xbf16>
    %100 = vector.extract_strided_slice %83 {offsets = [38, 0], sizes = [288, 32], strides = [1, 1]} : vector<328x32xf32> to vector<288x32xf32>
    %101 = arith.truncf %100 : vector<288x32xf32> to vector<288x32xbf16>
    %102 = tpu.concatenate %85, %87, %89, %91, %93, %95, %97, %99, %101 in 1 : vector<288x32xbf16>, vector<288x32xbf16>, vector<288x32xbf16>, vector<288x32xbf16>, vector<288x32xbf16>, vector<288x32xbf16>, vector<288x32xbf16>, vector<288x32xbf16>, vector<288x32xbf16> -> vector<288x288xbf16>
    %c0_23 = arith.constant 0 : index
    %c0_24 = arith.constant 0 : index
    %103 = vector.load %arg5[%c0_23, %c0_24] : memref<288x32xbf16, #tpu.memory_space<vmem>>, vector<288x32xbf16>
    %cst_25 = arith.constant dense<0.000000e+00> : vector<288x32xf32>
    %104 = tpu.matmul %102, %103, %cst_25 {dimension_numbers = #tpu.dot_dimension_numbers<[1], [0], [0], [1], [0, 0, 1, 1], [], []>} : vector<288x288xbf16>, vector<288x32xbf16>, vector<288x32xf32> -> vector<288x32xf32>
    %c0_26 = arith.constant 0 : index
    %c0_27 = arith.constant 0 : index
    %105 = vector.load %arg6[%c0_26, %c0_27] : memref<1x32xf32, #tpu.memory_space<vmem>>, vector<1x32xf32>
    %c0_28 = arith.constant 0 : index
    %c0_29 = arith.constant 0 : index
    %106 = vector.load %arg7[%c0_28, %c0_29] : memref<1x32xf32, #tpu.memory_space<vmem>>, vector<1x32xf32>
    %107 = vector.broadcast %4 : vector<288x1xf32> to vector<288x32xf32>
    %108 = arith.mulf %104, %107 : vector<288x32xf32>
    %cst_30 = arith.constant dense<0.000000e+00> : vector<32xf32>
    %109 = vector.multi_reduction <add>, %108, %cst_30 [0] : vector<288x32xf32> to vector<32xf32>
    %110 = vector.shape_cast %109 : vector<32xf32> to vector<1x32xf32>
    %111 = arith.mulf %108, %104 : vector<288x32xf32>
    %cst_31 = arith.constant dense<0.000000e+00> : vector<32xf32>
    %112 = vector.multi_reduction <add>, %111, %cst_31 [0] : vector<288x32xf32> to vector<32xf32>
    %113 = vector.shape_cast %112 : vector<32xf32> to vector<1x32xf32>
    %114 = tpu.concatenate %110, %113 in 0 : vector<1x32xf32>, vector<1x32xf32> -> vector<2x32xf32>
    %c0_32 = arith.constant 0 : index
    %c0_33 = arith.constant 0 : index
    %115 = vector.load %arg8[%c0_32, %c0_33] : memref<32x32xf32, #tpu.memory_space<vmem>>, vector<32x32xf32>
    %cst_34 = arith.constant dense<0.000000e+00> : vector<2x32xf32>
    %116 = tpu.matmul %114, %115, %cst_34 {dimension_numbers = #tpu.dot_dimension_numbers<[1], [0], [0], [1], [0, 0, 1, 1], [], []>} : vector<2x32xf32>, vector<32x32xf32>, vector<2x32xf32> -> vector<2x32xf32>
    %117 = vector.extract_strided_slice %116 {offsets = [0, 0], sizes = [1, 32], strides = [1, 1]} : vector<2x32xf32> to vector<1x32xf32>
    %118 = vector.extract_strided_slice %116 {offsets = [1, 0], sizes = [1, 32], strides = [1, 1]} : vector<2x32xf32> to vector<1x32xf32>
    %119 = arith.mulf %117, %117 : vector<1x32xf32>
    %120 = arith.subf %118, %119 : vector<1x32xf32>
    %cst_35 = arith.constant 0.000000e+00 : f32
    %121 = vector.broadcast %cst_35 : f32 to vector<1x32xf32>
    %122 = arith.maximumf %120, %121 : vector<1x32xf32>
    %cst_36 = arith.constant 9.99999974E-6 : f32
    %123 = vector.broadcast %cst_36 : f32 to vector<1x32xf32>
    %124 = arith.addf %122, %123 : vector<1x32xf32>
    %125 = math.rsqrt %124 : vector<1x32xf32>
    %126 = arith.mulf %105, %125 : vector<1x32xf32>
    %127 = arith.mulf %117, %126 : vector<1x32xf32>
    %128 = arith.subf %106, %127 : vector<1x32xf32>
    %129 = vector.broadcast %126 : vector<1x32xf32> to vector<288x32xf32>
    %130 = arith.mulf %104, %129 : vector<288x32xf32>
    %131 = vector.broadcast %128 : vector<1x32xf32> to vector<288x32xf32>
    %132 = arith.addf %130, %131 : vector<288x32xf32>
    %cst_37 = arith.constant 0.000000e+00 : f32
    %133 = vector.broadcast %cst_37 : f32 to vector<288x32xf32>
    %134 = arith.cmpf oge, %132, %133 : vector<288x32xf32>
    %cst_38 = arith.constant 0.00999999977 : f32
    %135 = vector.broadcast %cst_38 : f32 to vector<288x32xf32>
    %136 = arith.mulf %135, %132 : vector<288x32xf32>
    %137 = arith.select %134, %132, %136 : vector<288x32xi1>, vector<288x32xf32>
    %c0_39 = arith.constant 0 : index
    %c0_40 = arith.constant 0 : index
    %c0_41 = arith.constant 0 : index
    %138 = vector.load %arg10[%c0_39, %c0_40, %c0_41] : memref<1x288x32xf32, #tpu.memory_space<vmem>>, vector<1x288x32xf32>
    %139 = vector.shape_cast %138 : vector<1x288x32xf32> to vector<288x32xf32>
    %140 = vector.shape_cast %137 : vector<288x32xf32> to vector<1x288x32xf32>
    tpu.vector_store %arg10[%c0_39, %c0_40, %c0_41], %140 {strides = array<i32>} : memref<1x288x32xf32, #tpu.memory_space<vmem>>, vector<1x288x32xf32>,
    return
  }
  func.func @transform_0(%arg0: i32) -> (i32, i32, i32) {
    %c0_i32 = arith.constant 0 : i32
    %c0_i32_0 = arith.constant 0 : i32
    %c0_i32_1 = arith.constant 0 : i32
    return %arg0, %c0_i32, %c0_i32_0 : i32, i32, i32
  }
  func.func @transform_1(%arg0: i32) -> (i32, i32) {
    %c0_i32 = arith.constant 0 : i32
    %c0_i32_0 = arith.constant 0 : i32
    %c0_i32_1 = arith.constant 0 : i32
    return %c0_i32, %c0_i32_0 : i32, i32
  }
  func.func @transform_2(%arg0: i32) -> (i32, i32) {
    %c0_i32 = arith.constant 0 : i32
    %c0_i32_0 = arith.constant 0 : i32
    %c0_i32_1 = arith.constant 0 : i32
    return %c0_i32, %c0_i32_0 : i32, i32
  }
  func.func @transform_3(%arg0: i32) -> (i32, i32) {
    %c0_i32 = arith.constant 0 : i32
    %c0_i32_0 = arith.constant 0 : i32
    %c0_i32_1 = arith.constant 0 : i32
    return %c0_i32, %c0_i32_0 : i32, i32
  }
  func.func @transform_4(%arg0: i32) -> (i32, i32) {
    %c0_i32 = arith.constant 0 : i32
    %c0_i32_0 = arith.constant 0 : i32
    %c0_i32_1 = arith.constant 0 : i32
    return %c0_i32, %c0_i32_0 : i32, i32
  }
  func.func @transform_5(%arg0: i32) -> (i32, i32) {
    %c0_i32 = arith.constant 0 : i32
    %c0_i32_0 = arith.constant 0 : i32
    %c0_i32_1 = arith.constant 0 : i32
    return %c0_i32, %c0_i32_0 : i32, i32
  }
  func.func @transform_6(%arg0: i32) -> (i32, i32) {
    %c0_i32 = arith.constant 0 : i32
    %c0_i32_0 = arith.constant 0 : i32
    %c0_i32_1 = arith.constant 0 : i32
    return %c0_i32, %c0_i32_0 : i32, i32
  }
  func.func @transform_7(%arg0: i32) -> (i32, i32) {
    %c0_i32 = arith.constant 0 : i32
    %c0_i32_0 = arith.constant 0 : i32
    %c0_i32_1 = arith.constant 0 : i32
    return %c0_i32, %c0_i32_0 : i32, i32
  }
  func.func @transform_8(%arg0: i32) -> (i32, i32) {
    %c0_i32 = arith.constant 0 : i32
    %c0_i32_0 = arith.constant 0 : i32
    %c0_i32_1 = arith.constant 0 : i32
    return %c0_i32, %c0_i32_0 : i32, i32
  }
  func.func @transform_9(%arg0: i32) -> (i32, i32, i32) {
    %c0_i32 = arith.constant 0 : i32
    %c0_i32_0 = arith.constant 0 : i32
    %c0_i32_1 = arith.constant 0 : i32
    return %arg0, %c0_i32, %c0_i32_0 : i32, i32, i32
  }
}

</mosaic_0001>

<llo_original>
// kernel: tpu_custom_call.1
$region0: #{tpu_custom_call.1}
  #allocation0 [shape = 'u32[]', space=smem, size = 0x4, offset = 0x4, fixed_abs, tag = 'smem constant byte address 0x4 - core index']
  #allocation1 [shape = 'u32[144,128]{1,0:T(1,128)}', space=vmem, size = 0x12000, scoped, tag = 'internal scratch']
  %s0 = inlined_call_operand.vmem [shape: f32[2,328,4], index: 0, kind: input, shape index: {}]
  %s1 = inlined_call_operand.vmem [shape: bf16[36,32], index: 1, kind: input, shape index: {}]
  %s2 = inlined_call_operand.vmem [shape: f32[1,32], index: 2, kind: input, shape index: {}]
  %s3 = inlined_call_operand.vmem [shape: f32[1,32], index: 3, kind: input, shape index: {}]
  %s4 = inlined_call_operand.vmem [shape: bf16[288,32], index: 4, kind: input, shape index: {}]
  %s5 = inlined_call_operand.vmem [shape: f32[1,32], index: 5, kind: input, shape index: {}]
  %s6 = inlined_call_operand.vmem [shape: f32[1,32], index: 6, kind: input, shape index: {}]
  %s7 = inlined_call_operand.vmem [shape: f32[32,32], index: 7, kind: input, shape index: {}]
  %s8 = inlined_call_operand.vmem [shape: f32[288,1], index: 8, kind: input, shape index: {}]
  %s9 = inlined_call_operand.vmem [shape: f32[2,288,32], index: 9, kind: output, shape index: {}]
  %s10 = sld [smem:[#allocation0]]
  $region69: #{tpu_custom_call.1} parent=0
    _
  %s12 = ssub.s32 1, %s10
  %s13 = scalar_select 0, %s12, %s10
  loop: start=0, step=1, limit=4
  $region2: #{tpu_custom_call.1} parent=0 // loop_pre_header
    _
  $region3: #{tpu_custom_call.1} parent=0 // loop_header
    %s15 = sphi 0, %s19
    %p16 = scmp.ge.s32.totalorder %s15, 4
    %s25 = sphi 0, %s27
    %s28 = sphi 0, %s25
    %s29 = sphi 0, %s28
    %s45 = sphi 0, %s29
    %s49 = sphi 0, %s49
    %s51 = sphi 0, %s49
    %s52 = sphi 0, %s51
    %s66 = sphi 0, %s52
    %s70 = sphi 0, %s70
    %s72 = sphi 0, %s70
    %s73 = sphi 0, %s72
    %s87 = sphi 0, %s73
    %s91 = sphi 0, %s91
    %s93 = sphi 0, %s91
    %s94 = sphi 0, %s93
    %s108 = sphi 0, %s94
    %s112 = sphi 0, %s112
    %s114 = sphi 0, %s112
    %s115 = sphi 0, %s114
    %s129 = sphi 0, %s115
    %s133 = sphi 0, %s133
    %s135 = sphi 0, %s133
    %s136 = sphi 0, %s135
    %s150 = sphi 0, %s136
    %s154 = sphi 0, %s154
    %s156 = sphi 0, %s154
    %s157 = sphi 0, %s156
    %s171 = sphi 0, %s157
    %s175 = sphi 0, %s175
    %s177 = sphi 0, %s175
    %s178 = sphi 0, %s177
    %s192 = sphi 0, %s178
    %s196 = sphi 0, %s196
    %s198 = sphi 0, %s196
    %s199 = sphi 0, %s198
    %s213 = sphi 0, %s199
    %s219 = sphi 0, %s221
    %s222 = sphi 0, %s219
    %s223 = sphi 0, %s222
    %s239 = sphi 0, %s223
  $region4: #{tpu_custom_call.1} parent=0 // loop_header_branch
    %18 = sbr.rel (%p16) target = $region8
  $region5: #{tpu_custom_call.1} parent=0 // loop_body
    %s20 = ssub.s32 %s15, 1
    %s21 = ssub.s32 %s15, 2
    %s22 = sadd.s32 %s15, 1
    %s23 = ssub.s32 %s15, %s22
    %p24 = scmp.eq.s32.totalorder %s23, 0
    %s26 = sadd.s32 %s25, 1
    %s27 = scalar_select %p24, %s25, %s26
    %p30 = pneg %p24
    %p31 = scmp.eq.s32.totalorder %s15, 1
    %p32 = por %p30, %p31
    %p33 = scmp.ne.s32.totalorder %s25, %s28
    %p34 = scmp.eq.s32.totalorder %s15, 0
    %p35 = por %p33, %p34
    %p36 = scmp.ne.s32.totalorder %s25, %s28
    %p37 = scmp.eq.s32.totalorder %s20, 1
    %p38 = por %p36, %p37
    %p39 = scmp.ne.s32.totalorder %s28, %s29
    %p40 = scmp.eq.s32.totalorder %s20, 0
    %p41 = por %p39, %p40
    %p42 = scmp.ne.s32.totalorder %s28, %s29
    %p43 = scmp.eq.s32.totalorder %s21, 1
    %p44 = por %p42, %p43
    %p46 = scmp.ne.s32.totalorder %s29, %s45
    %p47 = scmp.eq.s32.totalorder %s21, 0
    %p48 = por %p46, %p47
    %s50 = sadd.s32 %s49, 1
    %p53 = scmp.eq.s32.totalorder %s15, 1
    %p54 = scmp.ne.s32.totalorder %s49, %s51
    %p55 = scmp.eq.s32.totalorder %s15, 0
    %p56 = por %p54, %p55
    %p57 = scmp.ne.s32.totalorder %s49, %s51
    %p58 = scmp.eq.s32.totalorder %s20, 1
    %p59 = por %p57, %p58
    %p60 = scmp.ne.s32.totalorder %s51, %s52
    %p61 = scmp.eq.s32.totalorder %s20, 0
    %p62 = por %p60, %p61
    %p63 = scmp.ne.s32.totalorder %s51, %s52
    %p64 = scmp.eq.s32.totalorder %s21, 1
    %p65 = por %p63, %p64
    %p67 = scmp.ne.s32.totalorder %s52, %s66
    %p68 = scmp.eq.s32.totalorder %s21, 0
    %p69 = por %p67, %p68
    %s71 = sadd.s32 %s70, 1
    %p74 = scmp.eq.s32.totalorder %s15, 1
    %p75 = scmp.ne.s32.totalorder %s70, %s72
    %p76 = scmp.eq.s32.totalorder %s15, 0
    %p77 = por %p75, %p76
    %p78 = scmp.ne.s32.totalorder %s70, %s72
    %p79 = scmp.eq.s32.totalorder %s20, 1
    %p80 = por %p78, %p79
    %p81 = scmp.ne.s32.totalorder %s72, %s73
    %p82 = scmp.eq.s32.totalorder %s20, 0
    %p83 = por %p81, %p82
    %p84 = scmp.ne.s32.totalorder %s72, %s73
    %p85 = scmp.eq.s32.totalorder %s21, 1
    %p86 = por %p84, %p85
    %p88 = scmp.ne.s32.totalorder %s73, %s87
    %p89 = scmp.eq.s32.totalorder %s21, 0
    %p90 = por %p88, %p89
    %s92 = sadd.s32 %s91, 1
    %p95 = scmp.eq.s32.totalorder %s15, 1
    %p96 = scmp.ne.s32.totalorder %s91, %s93
    %p97 = scmp.eq.s32.totalorder %s15, 0
    %p98 = por %p96, %p97
    %p99 = scmp.ne.s32.totalorder %s91, %s93
    %p100 = scmp.eq.s32.totalorder %s20, 1
    %p101 = por %p99, %p100
    %p102 = scmp.ne.s32.totalorder %s93, %s94
    %p103 = scmp.eq.s32.totalorder %s20, 0
    %p104 = por %p102, %p103
    %p105 = scmp.ne.s32.totalorder %s93, %s94
    %p106 = scmp.eq.s32.totalorder %s21, 1
    %p107 = por %p105, %p106
    %p109 = scmp.ne.s32.totalorder %s94, %s108
    %p110 = scmp.eq.s32.totalorder %s21, 0
    %p111 = por %p109, %p110
    %s113 = sadd.s32 %s112, 1
    %p116 = scmp.eq.s32.totalorder %s15, 1
    %p117 = scmp.ne.s32.totalorder %s112, %s114
    %p118 = scmp.eq.s32.totalorder %s15, 0
    %p119 = por %p117, %p118
    %p120 = scmp.ne.s32.totalorder %s112, %s114
    %p121 = scmp.eq.s32.totalorder %s20, 1
    %p122 = por %p120, %p121
    %p123 = scmp.ne.s32.totalorder %s114, %s115
    %p124 = scmp.eq.s32.totalorder %s20, 0
    %p125 = por %p123, %p124
    %p126 = scmp.ne.s32.totalorder %s114, %s115
    %p127 = scmp.eq.s32.totalorder %s21, 1
    %p128 = por %p126, %p127
    %p130 = scmp.ne.s32.totalorder %s115, %s129
    %p131 = scmp.eq.s32.totalorder %s21, 0
    %p132 = por %p130, %p131
    %s134 = sadd.s32 %s133, 1
    %p137 = scmp.eq.s32.totalorder %s15, 1
    %p138 = scmp.ne.s32.totalorder %s133, %s135
    %p139 = scmp.eq.s32.totalorder %s15, 0
    %p140 = por %p138, %p139
    %p141 = scmp.ne.s32.totalorder %s133, %s135
    %p142 = scmp.eq.s32.totalorder %s20, 1
    %p143 = por %p141, %p142
    %p144 = scmp.ne.s32.totalorder %s135, %s136
    %p145 = scmp.eq.s32.totalorder %s20, 0
    %p146 = por %p144, %p145
    %p147 = scmp.ne.s32.totalorder %s135, %s136
    %p148 = scmp.eq.s32.totalorder %s21, 1
    %p149 = por %p147, %p148
    %p151 = scmp.ne.s32.totalorder %s136, %s150
    %p152 = scmp.eq.s32.totalorder %s21, 0
    %p153 = por %p151, %p152
    %s155 = sadd.s32 %s154, 1
    %p158 = scmp.eq.s32.totalorder %s15, 1
    %p159 = scmp.ne.s32.totalorder %s154, %s156
    %p160 = scmp.eq.s32.totalorder %s15, 0
    %p161 = por %p159, %p160
    %p162 = scmp.ne.s32.totalorder %s154, %s156
    %p163 = scmp.eq.s32.totalorder %s20, 1
    %p164 = por %p162, %p163
    %p165 = scmp.ne.s32.totalorder %s156, %s157
    %p166 = scmp.eq.s32.totalorder %s20, 0
    %p167 = por %p165, %p166
    %p168 = scmp.ne.s32.totalorder %s156, %s157
    %p169 = scmp.eq.s32.totalorder %s21, 1
    %p170 = por %p168, %p169
    %p172 = scmp.ne.s32.totalorder %s157, %s171
    %p173 = scmp.eq.s32.totalorder %s21, 0
    %p174 = por %p172, %p173
    %s176 = sadd.s32 %s175, 1
    %p179 = scmp.eq.s32.totalorder %s15, 1
    %p180 = scmp.ne.s32.totalorder %s175, %s177
    %p181 = scmp.eq.s32.totalorder %s15, 0
    %p182 = por %p180, %p181
    %p183 = scmp.ne.s32.totalorder %s175, %s177
    %p184 = scmp.eq.s32.totalorder %s20, 1
    %p185 = por %p183, %p184
    %p186 = scmp.ne.s32.totalorder %s177, %s178
    %p187 = scmp.eq.s32.totalorder %s20, 0
    %p188 = por %p186, %p187
    %p189 = scmp.ne.s32.totalorder %s177, %s178
    %p190 = scmp.eq.s32.totalorder %s21, 1
    %p191 = por %p189, %p190
    %p193 = scmp.ne.s32.totalorder %s178, %s192
    %p194 = scmp.eq.s32.totalorder %s21, 0
    %p195 = por %p193, %p194
    %s197 = sadd.s32 %s196, 1
    %p200 = scmp.eq.s32.totalorder %s15, 1
    %p201 = scmp.ne.s32.totalorder %s196, %s198
    %p202 = scmp.eq.s32.totalorder %s15, 0
    %p203 = por %p201, %p202
    %p204 = scmp.ne.s32.totalorder %s196, %s198
    %p205 = scmp.eq.s32.totalorder %s20, 1
    %p206 = por %p204, %p205
    %p207 = scmp.ne.s32.totalorder %s198, %s199
    %p208 = scmp.eq.s32.totalorder %s20, 0
    %p209 = por %p207, %p208
    %p210 = scmp.ne.s32.totalorder %s198, %s199
    %p211 = scmp.eq.s32.totalorder %s21, 1
    %p212 = por %p210, %p211
    %p214 = scmp.ne.s32.totalorder %s199, %s213
    %p215 = scmp.eq.s32.totalorder %s21, 0
    %p216 = por %p214, %p215
    %s217 = ssub.s32 %s15, %s22
    %p218 = scmp.eq.s32.totalorder %s217, 0
    %s220 = sadd.s32 %s219, 1
    %s221 = scalar_select %p218, %s219, %s220
    %p224 = pneg %p218
    %p225 = scmp.eq.s32.totalorder %s15, 1
    %p226 = por %p224, %p225
    %p227 = scmp.ne.s32.totalorder %s219, %s222
    %p228 = scmp.eq.s32.totalorder %s15, 0
    %p229 = por %p227, %p228
    %p230 = scmp.ne.s32.totalorder %s219, %s222
    %p231 = scmp.eq.s32.totalorder %s20, 1
    %p232 = por %p230, %p231
    %p233 = scmp.ne.s32.totalorder %s222, %s223
    %p234 = scmp.eq.s32.totalorder %s20, 0
    %p235 = por %p233, %p234
    %p236 = scmp.ne.s32.totalorder %s222, %s223
    %p237 = scmp.eq.s32.totalorder %s21, 1
    %p238 = por %p236, %p237
    %p240 = scmp.ne.s32.totalorder %s223, %s239
    %p241 = scmp.eq.s32.totalorder %s21, 0
    %p242 = por %p240, %p241
    %p243 = scmp.le.s32.totalorder 1, %s15
    %p244 = scmp.lt.s32.totalorder %s15, 3
    %p245 = pnand %p243, %p244
    %p246 = pneg %p245
    // Predicated region
    $region9: #{tpu_custom_call.1} parent=5 // pred_check
      _
    $region10: #{tpu_custom_call.1} parent=5 // pred_check_branch
      %248 = sbr.rel (%p245) target = $region12
    $region11: #{tpu_custom_call.1} parent=5 // pred_region
      %s249 = ssub.s32 %s15, 1
      // Predicated region
      $region13: #{tpu_custom_call.1} parent=11 // pred_check
        %p250 = pneg %p62
      $region14: #{tpu_custom_call.1} parent=11 // pred_check_branch
        %252 = sbr.rel (%p250) target = $region16
      $region15: #{tpu_custom_call.1} parent=11 // pred_region
        _
      $region16: #{tpu_custom_call.1} parent=11 // pred_fallthru
        _
      // Predicated region
      $region17: #{tpu_custom_call.1} parent=11 // pred_check
        %p253 = pneg %p83
      $region18: #{tpu_custom_call.1} parent=11 // pred_check_branch
        %255 = sbr.rel (%p253) target = $region20
      $region19: #{tpu_custom_call.1} parent=11 // pred_region
        _
      $region20: #{tpu_custom_call.1} parent=11 // pred_fallthru
        _
      // Predicated region
      $region21: #{tpu_custom_call.1} parent=11 // pred_check
        %p256 = pneg %p104
      $region22: #{tpu_custom_call.1} parent=11 // pred_check_branch
        %258 = sbr.rel (%p256) target = $region24
      $region23: #{tpu_custom_call.1} parent=11 // pred_region
        _
      $region24: #{tpu_custom_call.1} parent=11 // pred_fallthru
        _
      // Predicated region
      $region25: #{tpu_custom_call.1} parent=11 // pred_check
        %p259 = pneg %p125
      $region26: #{tpu_custom_call.1} parent=11 // pred_check_branch
        %261 = sbr.rel (%p259) target = $region28
      $region27: #{tpu_custom_call.1} parent=11 // pred_region
        _
      $region28: #{tpu_custom_call.1} parent=11 // pred_fallthru
        _
      // Predicated region
      $region29: #{tpu_custom_call.1} parent=11 // pred_check
        %p262 = pneg %p146
      $region30: #{tpu_custom_call.1} parent=11 // pred_check_branch
        %264 = sbr.rel (%p262) target = $region32
      $region31: #{tpu_custom_call.1} parent=11 // pred_region
        _
      $region32: #{tpu_custom_call.1} parent=11 // pred_fallthru
        _
      // Predicated region
      $region33: #{tpu_custom_call.1} parent=11 // pred_check
        %p265 = pneg %p167
      $region34: #{tpu_custom_call.1} parent=11 // pred_check_branch
        %267 = sbr.rel (%p265) target = $region36
      $region35: #{tpu_custom_call.1} parent=11 // pred_region
        _
      $region36: #{tpu_custom_call.1} parent=11 // pred_fallthru
        _
      // Predicated region
      $region37: #{tpu_custom_call.1} parent=11 // pred_check
        %p268 = pneg %p188
      $region38: #{tpu_custom_call.1} parent=11 // pred_check_branch
        %270 = sbr.rel (%p268) target = $region40
      $region39: #{tpu_custom_call.1} parent=11 // pred_region
        _
      $region40: #{tpu_custom_call.1} parent=11 // pred_fallthru
        _
      // Predicated region
      $region41: #{tpu_custom_call.1} parent=11 // pred_check
        %p271 = pneg %p209
      $region42: #{tpu_custom_call.1} parent=11 // pred_check_branch
        %273 = sbr.rel (%p271) target = $region44
      $region43: #{tpu_custom_call.1} parent=11 // pred_region
        _
      $region44: #{tpu_custom_call.1} parent=11 // pred_fallthru
        _
    $region12: #{tpu_custom_call.1} parent=5 // pred_fallthru
      _
    %p274 = scmp.lt.s32.totalorder %s15, 2
    // Predicated region
    $region45: #{tpu_custom_call.1} parent=5 // pred_check
      %p275 = pneg %p274
    $region46: #{tpu_custom_call.1} parent=5 // pred_check_branch
      %277 = sbr.rel (%p275) target = $region48
    $region47: #{tpu_custom_call.1} parent=5 // pred_region
      // Predicated region
      $region49: #{tpu_custom_call.1} parent=47 // pred_check
        %p278 = pneg %p35
      $region50: #{tpu_custom_call.1} parent=47 // pred_check_branch
        %280 = sbr.rel (%p278) target = $region52
      $region51: #{tpu_custom_call.1} parent=47 // pred_region
        %p281 = scmp.lt.s32.totalorder %s15, 1
        %s282 = scalar_select %p281, %s15, 1
        %s283 = smul.addr %s282, 41
        %s284 = smul.addr %s283, 8
        %s285 = scalar_lea.vmem %s0, %s284
      $region52: #{tpu_custom_call.1} parent=47 // pred_fallthru
        _
    $region48: #{tpu_custom_call.1} parent=5 // pred_fallthru
      _
    %p286 = scmp.le.s32.totalorder 1, %s15
    %p287 = scmp.lt.s32.totalorder %s15, 3
    %p288 = pnand %p286, %p287
    %p289 = pneg %p288
    // Predicated region
    $region53: #{tpu_custom_call.1} parent=5 // pred_check
      _
    $region54: #{tpu_custom_call.1} parent=5 // pred_check_branch
      %291 = sbr.rel (%p288) target = $region56
    $region55: #{tpu_custom_call.1} parent=5 // pred_region
      %s292 = ssub.s32 %s15, 1
      %p293 = scmp.lt.s32.totalorder %s20, 1
      %s294 = scalar_select %p293, %s20, 1
      %s295 = smul.addr %s294, 41
      %s296 = smul.addr %s295, 8
      %s297 = scalar_lea.vmem %s0, %s296
      %p298 = pneg %p41
      %p299 = pneg %p38
      %p300 = pneg %p62
      %p301 = pneg %p59
      %p302 = pneg %p83
      %p303 = pneg %p80
      %p304 = pneg %p104
      %p305 = pneg %p101
      %p306 = pneg %p125
      %p307 = pneg %p122
      %p308 = pneg %p146
      %p309 = pneg %p143
      %p310 = pneg %p167
      %p311 = pneg %p164
      %p312 = pneg %p188
      %p313 = pneg %p185
      %p314 = pneg %p209
      %p315 = pneg %p206
      %p316 = pneg %p235
      %p317 = pneg %p232
      %p318 = scmp.lt.s32.totalorder %s20, 1
      %s319 = scalar_select %p318, %s20, 1
      %s320 = smul.addr %s319, 36
      %s321 = smul.addr %s320, 8
      %s322 = scalar_lea.vmem %s9, %s321
      %p323 = scmp.lt.s32.totalorder %s20, 1
      %s324 = scalar_select %p323, %s20, 1
      %s325 = smul.addr %s324, 41
      %s326 = smul.addr %s325, 8
      %s327 = scalar_lea.vmem %s0, %s326
      %p328 = scmp.lt.s32.totalorder %s20, 1
      %s329 = scalar_select %p328, %s20, 1
      %s330 = smul.addr %s329, 36
      %s331 = smul.addr %s330, 8
      %s332 = scalar_lea.vmem %s9, %s331
      %v334 = vld [vmem:[%s8] sm:$0xff]
      %v335 = vld [vmem:[%s8 + $0x8] sm:$0xff]
      %v336 = vld [vmem:[%s8 + $0x10] sm:$0xff]
      %v337 = vld [vmem:[%s8 + $0x18] sm:$0xff]
      %v338 = vld [vmem:[%s8 + $0x20] sm:$0xff]
      %v339 = vld [vmem:[%s8 + $0x28] sm:$0xff]
      %v340 = vld [vmem:[%s8 + $0x30] sm:$0xff]
      %v341 = vld [vmem:[%s8 + $0x38] sm:$0xff]
      %v342 = vld [vmem:[%s8 + $0x40] sm:$0xff]
      %v343 = vld [vmem:[%s8 + $0x48] sm:$0xff]
      %v344 = vld [vmem:[%s8 + $0x50] sm:$0xff]
      %v345 = vld [vmem:[%s8 + $0x58] sm:$0xff]
      %v346 = vld [vmem:[%s8 + $0x60] sm:$0xff]
      %v347 = vld [vmem:[%s8 + $0x68] sm:$0xff]
      %v348 = vld [vmem:[%s8 + $0x70] sm:$0xff]
      %v349 = vld [vmem:[%s8 + $0x78] sm:$0xff]
      %v350 = vld [vmem:[%s8 + $0x80] sm:$0xff]
      %v351 = vld [vmem:[%s8 + $0x88] sm:$0xff]
      %v352 = vld [vmem:[%s8 + $0x90] sm:$0xff]
      %v353 = vld [vmem:[%s8 + $0x98] sm:$0xff]
      %v354 = vld [vmem:[%s8 + $0xa0] sm:$0xff]
      %v355 = vld [vmem:[%s8 + $0xa8] sm:$0xff]
      %v356 = vld [vmem:[%s8 + $0xb0] sm:$0xff]
      %v357 = vld [vmem:[%s8 + $0xb8] sm:$0xff]
      %v358 = vld [vmem:[%s8 + $0xc0] sm:$0xff]
      %v359 = vld [vmem:[%s8 + $0xc8] sm:$0xff]
      %v360 = vld [vmem:[%s8 + $0xd0] sm:$0xff]
      %v361 = vld [vmem:[%s8 + $0xd8] sm:$0xff]
      %v362 = vld [vmem:[%s8 + $0xe0] sm:$0xff]
      %v363 = vld [vmem:[%s8 + $0xe8] sm:$0xff]
      %v364 = vld [vmem:[%s8 + $0xf0] sm:$0xff]
      %v365 = vld [vmem:[%s8 + $0xf8] sm:$0xff]
      %v366 = vld [vmem:[%s8 + $0x100] sm:$0xff]
      %v367 = vld [vmem:[%s8 + $0x108] sm:$0xff]
      %v368 = vld [vmem:[%s8 + $0x110] sm:$0xff]
      %v369 = vld [vmem:[%s8 + $0x118] sm:$0xff]
      %vm370 = vcmp.lt.f32.partialorder %v334, 16.0
      %vm371 = vcmp.lt.f32.partialorder %v335, 16.0
      %vm372 = vcmp.lt.f32.partialorder %v336, 16.0
      %vm373 = vcmp.lt.f32.partialorder %v337, 16.0
      %vm374 = vcmp.lt.f32.partialorder %v338, 16.0
      %vm375 = vcmp.lt.f32.partialorder %v339, 16.0
      %vm376 = vcmp.lt.f32.partialorder %v340, 16.0
      %vm377 = vcmp.lt.f32.partialorder %v341, 16.0
      %vm378 = vcmp.lt.f32.partialorder %v342, 16.0
      %vm379 = vcmp.lt.f32.partialorder %v343, 16.0
      %vm380 = vcmp.lt.f32.partialorder %v344, 16.0
      %vm381 = vcmp.lt.f32.partialorder %v345, 16.0
      %vm382 = vcmp.lt.f32.partialorder %v346, 16.0
      %vm383 = vcmp.lt.f32.partialorder %v347, 16.0
      %vm384 = vcmp.lt.f32.partialorder %v348, 16.0
      %vm385 = vcmp.lt.f32.partialorder %v349, 16.0
      %vm386 = vcmp.lt.f32.partialorder %v350, 16.0
      %vm387 = vcmp.lt.f32.partialorder %v351, 16.0
      %vm388 = vcmp.lt.f32.partialorder %v352, 16.0
      %vm389 = vcmp.lt.f32.partialorder %v353, 16.0
      %vm390 = vcmp.lt.f32.partialorder %v354, 16.0
      %vm391 = vcmp.lt.f32.partialorder %v355, 16.0
      %vm392 = vcmp.lt.f32.partialorder %v356, 16.0
      %vm393 = vcmp.lt.f32.partialorder %v357, 16.0
      %vm394 = vcmp.lt.f32.partialorder %v358, 16.0
      %vm395 = vcmp.lt.f32.partialorder %v359, 16.0
      %vm396 = vcmp.lt.f32.partialorder %v360, 16.0
      %vm397 = vcmp.lt.f32.partialorder %v361, 16.0
      %vm398 = vcmp.lt.f32.partialorder %v362, 16.0
      %vm399 = vcmp.lt.f32.partialorder %v363, 16.0
      %vm400 = vcmp.lt.f32.partialorder %v364, 16.0
      %vm401 = vcmp.lt.f32.partialorder %v365, 16.0
      %vm402 = vcmp.lt.f32.partialorder %v366, 16.0
      %vm403 = vcmp.lt.f32.partialorder %v367, 16.0
      %vm404 = vcmp.lt.f32.partialorder %v368, 16.0
      %vm405 = vcmp.lt.f32.partialorder %v369, 16.0
      %v406 = vsel %vm370, 1, 0
      %v407 = vsel %vm371, 1, 0
      %v408 = vsel %vm372, 1, 0
      %v409 = vsel %vm373, 1, 0
      %v410 = vsel %vm374, 1, 0
      %v411 = vsel %vm375, 1, 0
      %v412 = vsel %vm376, 1, 0
      %v413 = vsel %vm377, 1, 0
      %v414 = vsel %vm378, 1, 0
      %v415 = vsel %vm379, 1, 0
      %v416 = vsel %vm380, 1, 0
      %v417 = vsel %vm381, 1, 0
      %v418 = vsel %vm382, 1, 0
      %v419 = vsel %vm383, 1, 0
      %v420 = vsel %vm384, 1, 0
      %v421 = vsel %vm385, 1, 0
      %v422 = vsel %vm386, 1, 0
      %v423 = vsel %vm387, 1, 0
      %v424 = vsel %vm388, 1, 0
      %v425 = vsel %vm389, 1, 0
      %v426 = vsel %vm390, 1, 0
      %v427 = vsel %vm391, 1, 0
      %v428 = vsel %vm392, 1, 0
      %v429 = vsel %vm393, 1, 0
      %v430 = vsel %vm394, 1, 0
      %v431 = vsel %vm395, 1, 0
      %v432 = vsel %vm396, 1, 0
      %v433 = vsel %vm397, 1, 0
      %v434 = vsel %vm398, 1, 0
      %v435 = vsel %vm399, 1, 0
      %v436 = vsel %vm400, 1, 0
      %v437 = vsel %vm401, 1, 0
      %v438 = vsel %vm402, 1, 0
      %v439 = vsel %vm403, 1, 0
      %v440 = vsel %vm404, 1, 0
      %v441 = vsel %vm405, 1, 0
      %v442 = vcvt.s32.f32 %v406
      %v443 = vcvt.s32.f32 %v407
      %v444 = vcvt.s32.f32 %v408
      %v445 = vcvt.s32.f32 %v409
      %v446 = vcvt.s32.f32 %v410
      %v447 = vcvt.s32.f32 %v411
      %v448 = vcvt.s32.f32 %v412
      %v449 = vcvt.s32.f32 %v413
      %v450 = vcvt.s32.f32 %v414
      %v451 = vcvt.s32.f32 %v415
      %v452 = vcvt.s32.f32 %v416
      %v453 = vcvt.s32.f32 %v417
      %v454 = vcvt.s32.f32 %v418
      %v455 = vcvt.s32.f32 %v419
      %v456 = vcvt.s32.f32 %v420
      %v457 = vcvt.s32.f32 %v421
      %v458 = vcvt.s32.f32 %v422
      %v459 = vcvt.s32.f32 %v423
      %v460 = vcvt.s32.f32 %v424
      %v461 = vcvt.s32.f32 %v425
      %v462 = vcvt.s32.f32 %v426
      %v463 = vcvt.s32.f32 %v427
      %v464 = vcvt.s32.f32 %v428
      %v465 = vcvt.s32.f32 %v429
      %v466 = vcvt.s32.f32 %v430
      %v467 = vcvt.s32.f32 %v431
      %v468 = vcvt.s32.f32 %v432
      %v469 = vcvt.s32.f32 %v433
      %v470 = vcvt.s32.f32 %v434
      %v471 = vcvt.s32.f32 %v435
      %v472 = vcvt.s32.f32 %v436
      %v473 = vcvt.s32.f32 %v437
      %v474 = vcvt.s32.f32 %v438
      %v475 = vcvt.s32.f32 %v439
      %v476 = vcvt.s32.f32 %v440
      %v477 = vcvt.s32.f32 %v441
      %vm478 = vcmp.eq.f32.partialorder %v334, 0.0
      %vm479 = vcmp.eq.f32.partialorder %v335, 0.0
      %vm480 = vcmp.eq.f32.partialorder %v336, 0.0
      %vm481 = vcmp.eq.f32.partialorder %v337, 0.0
      %vm482 = vcmp.eq.f32.partialorder %v338, 0.0
      %vm483 = vcmp.eq.f32.partialorder %v339, 0.0
      %vm484 = vcmp.eq.f32.partialorder %v340, 0.0
      %vm485 = vcmp.eq.f32.partialorder %v341, 0.0
      %vm486 = vcmp.eq.f32.partialorder %v342, 0.0
      %vm487 = vcmp.eq.f32.partialorder %v343, 0.0
      %vm488 = vcmp.eq.f32.partialorder %v344, 0.0
      %vm489 = vcmp.eq.f32.partialorder %v345, 0.0
      %vm490 = vcmp.eq.f32.partialorder %v346, 0.0
      %vm491 = vcmp.eq.f32.partialorder %v347, 0.0
      %vm492 = vcmp.eq.f32.partialorder %v348, 0.0
      %vm493 = vcmp.eq.f32.partialorder %v349, 0.0
      %vm494 = vcmp.eq.f32.partialorder %v350, 0.0
      %vm495 = vcmp.eq.f32.partialorder %v351, 0.0
      %vm496 = vcmp.eq.f32.partialorder %v352, 0.0
      %vm497 = vcmp.eq.f32.partialorder %v353, 0.0
      %vm498 = vcmp.eq.f32.partialorder %v354, 0.0
      %vm499 = vcmp.eq.f32.partialorder %v355, 0.0
      %vm500 = vcmp.eq.f32.partialorder %v356, 0.0
      %vm501 = vcmp.eq.f32.partialorder %v357, 0.0
      %vm502 = vcmp.eq.f32.partialorder %v358, 0.0
      %vm503 = vcmp.eq.f32.partialorder %v359, 0.0
      %vm504 = vcmp.eq.f32.partialorder %v360, 0.0
      %vm505 = vcmp.eq.f32.partialorder %v361, 0.0
      %vm506 = vcmp.eq.f32.partialorder %v362, 0.0
      %vm507 = vcmp.eq.f32.partialorder %v363, 0.0
      %vm508 = vcmp.eq.f32.partialorder %v364, 0.0
      %vm509 = vcmp.eq.f32.partialorder %v365, 0.0
      %vm510 = vcmp.eq.f32.partialorder %v366, 0.0
      %vm511 = vcmp.eq.f32.partialorder %v367, 0.0
      %vm512 = vcmp.eq.f32.partialorder %v368, 0.0
      %vm513 = vcmp.eq.f32.partialorder %v369, 0.0
      %vm514 = vcmp.eq.f32.partialorder %v334, 17.0
      %vm515 = vcmp.eq.f32.partialorder %v335, 17.0
      %vm516 = vcmp.eq.f32.partialorder %v336, 17.0
      %vm517 = vcmp.eq.f32.partialorder %v337, 17.0
      %vm518 = vcmp.eq.f32.partialorder %v338, 17.0
      %vm519 = vcmp.eq.f32.partialorder %v339, 17.0
      %vm520 = vcmp.eq.f32.partialorder %v340, 17.0
      %vm521 = vcmp.eq.f32.partialorder %v341, 17.0
      %vm522 = vcmp.eq.f32.partialorder %v342, 17.0
      %vm523 = vcmp.eq.f32.partialorder %v343, 17.0
      %vm524 = vcmp.eq.f32.partialorder %v344, 17.0
      %vm525 = vcmp.eq.f32.partialorder %v345, 17.0
      %vm526 = vcmp.eq.f32.partialorder %v346, 17.0
      %vm527 = vcmp.eq.f32.partialorder %v347, 17.0
      %vm528 = vcmp.eq.f32.partialorder %v348, 17.0
      %vm529 = vcmp.eq.f32.partialorder %v349, 17.0
      %vm530 = vcmp.eq.f32.partialorder %v350, 17.0
      %vm531 = vcmp.eq.f32.partialorder %v351, 17.0
      %vm532 = vcmp.eq.f32.partialorder %v352, 17.0
      %vm533 = vcmp.eq.f32.partialorder %v353, 17.0
      %vm534 = vcmp.eq.f32.partialorder %v354, 17.0
      %vm535 = vcmp.eq.f32.partialorder %v355, 17.0
      %vm536 = vcmp.eq.f32.partialorder %v356, 17.0
      %vm537 = vcmp.eq.f32.partialorder %v357, 17.0
      %vm538 = vcmp.eq.f32.partialorder %v358, 17.0
      %vm539 = vcmp.eq.f32.partialorder %v359, 17.0
      %vm540 = vcmp.eq.f32.partialorder %v360, 17.0
      %vm541 = vcmp.eq.f32.partialorder %v361, 17.0
      %vm542 = vcmp.eq.f32.partialorder %v362, 17.0
      %vm543 = vcmp.eq.f32.partialorder %v363, 17.0
      %vm544 = vcmp.eq.f32.partialorder %v364, 17.0
      %vm545 = vcmp.eq.f32.partialorder %v365, 17.0
      %vm546 = vcmp.eq.f32.partialorder %v366, 17.0
      %vm547 = vcmp.eq.f32.partialorder %v367, 17.0
      %vm548 = vcmp.eq.f32.partialorder %v368, 17.0
      %vm549 = vcmp.eq.f32.partialorder %v369, 17.0
      %v550 = vld [vmem:[%s327] sm:$0xff]
      %v551 = vld [vmem:[%s327 + $0x8] sm:$0xff]
      %v552 = vld [vmem:[%s327 + $0x10] sm:$0xff]
      %v553 = vld [vmem:[%s327 + $0x18] sm:$0xff]
      %v554 = vld [vmem:[%s327 + $0x20] sm:$0xff]
      %v555 = vld [vmem:[%s327 + $0x28] sm:$0xff]
      %v556 = vld [vmem:[%s327 + $0x30] sm:$0xff]
      %v557 = vld [vmem:[%s327 + $0x38] sm:$0xff]
      %v558 = vld [vmem:[%s327 + $0x40] sm:$0xff]
      %v559 = vld [vmem:[%s327 + $0x48] sm:$0xff]
      %v560 = vld [vmem:[%s327 + $0x50] sm:$0xff]
      %v561 = vld [vmem:[%s327 + $0x58] sm:$0xff]
      %v562 = vld [vmem:[%s327 + $0x60] sm:$0xff]
      %v563 = vld [vmem:[%s327 + $0x68] sm:$0xff]
      %v564 = vld [vmem:[%s327 + $0x70] sm:$0xff]
      %v565 = vld [vmem:[%s327 + $0x78] sm:$0xff]
      %v566 = vld [vmem:[%s327 + $0x80] sm:$0xff]
      %v567 = vld [vmem:[%s327 + $0x88] sm:$0xff]
      %v568 = vld [vmem:[%s327 + $0x90] sm:$0xff]
      %v569 = vld [vmem:[%s327 + $0x98] sm:$0xff]
      %v570 = vld [vmem:[%s327 + $0xa0] sm:$0xff]
      %v571 = vld [vmem:[%s327 + $0xa8] sm:$0xff]
      %v572 = vld [vmem:[%s327 + $0xb0] sm:$0xff]
      %v573 = vld [vmem:[%s327 + $0xb8] sm:$0xff]
      %v574 = vld [vmem:[%s327 + $0xc0] sm:$0xff]
      %v575 = vld [vmem:[%s327 + $0xc8] sm:$0xff]
      %v576 = vld [vmem:[%s327 + $0xd0] sm:$0xff]
      %v577 = vld [vmem:[%s327 + $0xd8] sm:$0xff]
      %v578 = vld [vmem:[%s327 + $0xe0] sm:$0xff]
      %v579 = vld [vmem:[%s327 + $0xe8] sm:$0xff]
      %v580 = vld [vmem:[%s327 + $0xf0] sm:$0xff]
      %v581 = vld [vmem:[%s327 + $0xf8] sm:$0xff]
      %v582 = vld [vmem:[%s327 + $0x100] sm:$0xff]
      %v583 = vld [vmem:[%s327 + $0x108] sm:$0xff]
      %v584 = vld [vmem:[%s327 + $0x110] sm:$0xff]
      %v585 = vld [vmem:[%s327 + $0x118] sm:$0xff]
      %v586 = vld [vmem:[%s327 + $0x120] sm:$0xff]
      %v587 = vld [vmem:[%s327 + $0x128] sm:$0xff]
      %v588 = vld [vmem:[%s327 + $0x130] sm:$0xff]
      %v589 = vld [vmem:[%s327 + $0x138] sm:$0xff]
      %v590 = vld [vmem:[%s327 + $0x140] sm:$0xff]
      %v591 = vpack.c.bf16 %v551, %v550
      %v592 = vpack.c.bf16 %v553, %v552
      %v593 = vpack.c.bf16 %v555, %v554
      %v594 = vpack.c.bf16 %v557, %v556
      %v595 = vpack.c.bf16 %v559, %v558
      %v596 = vpack.c.bf16 %v561, %v560
      %v597 = vpack.c.bf16 %v563, %v562
      %v598 = vpack.c.bf16 %v565, %v564
      %v599 = vpack.c.bf16 %v567, %v566
      %v600 = vpack.c.bf16 %v569, %v568
      %v601 = vpack.c.bf16 %v571, %v570
      %v602 = vpack.c.bf16 %v573, %v572
      %v603 = vpack.c.bf16 %v575, %v574
      %v604 = vpack.c.bf16 %v577, %v576
      %v605 = vpack.c.bf16 %v579, %v578
      %v606 = vpack.c.bf16 %v581, %v580
      %v607 = vpack.c.bf16 %v583, %v582
      %v608 = vpack.c.bf16 %v585, %v584
      %v609 = vpack.c.bf16 %v586, %v586
      %v610 = vpack.c.bf16 %v587, %v586
      %v611 = vpack.c.bf16 %v588, %v588
      %v612 = vpack.c.bf16 %v589, %v588
      %v613 = vpack.c.bf16 %v590, %v590
      %vm614 = vsmask.f32 7424
      %v616 = vshrl.u32 %v591, 16
      %v618 = vshll.u32 %v591, 16
      %v620 = vrot.slane %v618, 1
      %v621 = vor.u32 %v616, %v620
      %v623 = vshll.u32 %v592, 16
      %v625 = vrot.slane %v623, 1
      %v626 = vsel %vm614, %v621, %v625
      %v627 = vshrl.u32 %v592, 16
      %v629 = vor.u32 %v627, %v625
      %v631 = vshll.u32 %v593, 16
      %v633 = vrot.slane %v631, 1
      %v634 = vsel %vm614, %v629, %v633
      %v635 = vshrl.u32 %v593, 16
      %v637 = vor.u32 %v635, %v633
      %v639 = vshll.u32 %v594, 16
      %v641 = vrot.slane %v639, 1
      %v642 = vsel %vm614, %v637, %v641
      %v643 = vshrl.u32 %v594, 16
      %v645 = vor.u32 %v643, %v641
      %v647 = vshll.u32 %v595, 16
      %v649 = vrot.slane %v647, 1
      %v650 = vsel %vm614, %v645, %v649
      %v651 = vshrl.u32 %v595, 16
      %v653 = vor.u32 %v651, %v649
      %v655 = vshll.u32 %v596, 16
      %v657 = vrot.slane %v655, 1
      %v658 = vsel %vm614, %v653, %v657
      %v659 = vshrl.u32 %v596, 16
      %v661 = vor.u32 %v659, %v657
      %v663 = vshll.u32 %v597, 16
      %v665 = vrot.slane %v663, 1
      %v666 = vsel %vm614, %v661, %v665
      %v667 = vshrl.u32 %v597, 16
      %v669 = vor.u32 %v667, %v665
      %v671 = vshll.u32 %v598, 16
      %v673 = vrot.slane %v671, 1
      %v674 = vsel %vm614, %v669, %v673
      %v675 = vshrl.u32 %v598, 16
      %v677 = vor.u32 %v675, %v673
      %v679 = vshll.u32 %v599, 16
      %v681 = vrot.slane %v679, 1
      %v682 = vsel %vm614, %v677, %v681
      %v683 = vshrl.u32 %v599, 16
      %v685 = vor.u32 %v683, %v681
      %v687 = vshll.u32 %v600, 16
      %v689 = vrot.slane %v687, 1
      %v690 = vsel %vm614, %v685, %v689
      %v691 = vshrl.u32 %v600, 16
      %v693 = vor.u32 %v691, %v689
      %v695 = vshll.u32 %v601, 16
      %v697 = vrot.slane %v695, 1
      %v698 = vsel %vm614, %v693, %v697
      %v699 = vshrl.u32 %v601, 16
      %v701 = vor.u32 %v699, %v697
      %v703 = vshll.u32 %v602, 16
      %v705 = vrot.slane %v703, 1
      %v706 = vsel %vm614, %v701, %v705
      %v707 = vshrl.u32 %v602, 16
      %v709 = vor.u32 %v707, %v705
      %v711 = vshll.u32 %v603, 16
      %v713 = vrot.slane %v711, 1
      %v714 = vsel %vm614, %v709, %v713
      %v715 = vshrl.u32 %v603, 16
      %v717 = vor.u32 %v715, %v713
      %v719 = vshll.u32 %v604, 16
      %v721 = vrot.slane %v719, 1
      %v722 = vsel %vm614, %v717, %v721
      %v723 = vshrl.u32 %v604, 16
      %v725 = vor.u32 %v723, %v721
      %v727 = vshll.u32 %v605, 16
      %v729 = vrot.slane %v727, 1
      %v730 = vsel %vm614, %v725, %v729
      %v731 = vshrl.u32 %v605, 16
      %v733 = vor.u32 %v731, %v729
      %v735 = vshll.u32 %v606, 16
      %v737 = vrot.slane %v735, 1
      %v738 = vsel %vm614, %v733, %v737
      %v739 = vshrl.u32 %v606, 16
      %v741 = vor.u32 %v739, %v737
      %v743 = vshll.u32 %v607, 16
      %v745 = vrot.slane %v743, 1
      %v746 = vsel %vm614, %v741, %v745
      %v747 = vshrl.u32 %v607, 16
      %v749 = vor.u32 %v747, %v745
      %v751 = vshll.u32 %v608, 16
      %v753 = vrot.slane %v751, 1
      %v754 = vsel %vm614, %v749, %v753
      %v755 = vshrl.u32 %v608, 16
      %v757 = vor.u32 %v755, %v753
      %v759 = vshll.u32 %v609, 16
      %v761 = vrot.slane %v759, 1
      %v762 = vsel %vm614, %v757, %v761
      %763 = vrot.lane.b32.xlu0 %v626, 4
      %v764 = vpop.permute.xlu0 %763
      %765 = vrot.lane.b32.xlu0 %v634, 4
      %v766 = vpop.permute.xlu0 %765
      %767 = vrot.lane.b32.xlu0 %v642, 4
      %v768 = vpop.permute.xlu0 %767
      %769 = vrot.lane.b32.xlu0 %v650, 4
      %v770 = vpop.permute.xlu0 %769
      %771 = vrot.lane.b32.xlu0 %v658, 4
      %v772 = vpop.permute.xlu0 %771
      %773 = vrot.lane.b32.xlu0 %v666, 4
      %v774 = vpop.permute.xlu0 %773
      %775 = vrot.lane.b32.xlu0 %v674, 4
      %v776 = vpop.permute.xlu0 %775
      %777 = vrot.lane.b32.xlu0 %v682, 4
      %v778 = vpop.permute.xlu0 %777
      %779 = vrot.lane.b32.xlu0 %v690, 4
      %v780 = vpop.permute.xlu0 %779
      %781 = vrot.lane.b32.xlu0 %v698, 4
      %v782 = vpop.permute.xlu0 %781
      %783 = vrot.lane.b32.xlu0 %v706, 4
      %v784 = vpop.permute.xlu0 %783
      %785 = vrot.lane.b32.xlu0 %v714, 4
      %v786 = vpop.permute.xlu0 %785
      %787 = vrot.lane.b32.xlu0 %v722, 4
      %v788 = vpop.permute.xlu0 %787
      %789 = vrot.lane.b32.xlu0 %v730, 4
      %v790 = vpop.permute.xlu0 %789
      %791 = vrot.lane.b32.xlu0 %v738, 4
      %v792 = vpop.permute.xlu0 %791
      %793 = vrot.lane.b32.xlu0 %v746, 4
      %v794 = vpop.permute.xlu0 %793
      %795 = vrot.lane.b32.xlu0 %v754, 4
      %v796 = vpop.permute.xlu0 %795
      %797 = vrot.lane.b32.xlu0 %v762, 4
      %v798 = vpop.permute.xlu0 %797
      %vm818 = vcmask 1046528
      %v819 = vrot.slane %v591, 1
      %v820 = vrot.slane %v592, 1
      %v821 = vsel %vm818, %v819, %v820
      %v822 = vrot.slane %v593, 1
      %v823 = vsel %vm818, %v820, %v822
      %v824 = vrot.slane %v594, 1
      %v825 = vsel %vm818, %v822, %v824
      %v826 = vrot.slane %v595, 1
      %v827 = vsel %vm818, %v824, %v826
      %v828 = vrot.slane %v596, 1
      %v829 = vsel %vm818, %v826, %v828
      %v830 = vrot.slane %v597, 1
      %v831 = vsel %vm818, %v828, %v830
      %v832 = vrot.slane %v598, 1
      %v833 = vsel %vm818, %v830, %v832
      %v834 = vrot.slane %v599, 1
      %v835 = vsel %vm818, %v832, %v834
      %v836 = vrot.slane %v600, 1
      %v837 = vsel %vm818, %v834, %v836
      %v838 = vrot.slane %v601, 1
      %v839 = vsel %vm818, %v836, %v838
      %v840 = vrot.slane %v602, 1
      %v841 = vsel %vm818, %v838, %v840
      %v842 = vrot.slane %v603, 1
      %v843 = vsel %vm818, %v840, %v842
      %v844 = vrot.slane %v604, 1
      %v845 = vsel %vm818, %v842, %v844
      %v846 = vrot.slane %v605, 1
      %v847 = vsel %vm818, %v844, %v846
      %v848 = vrot.slane %v606, 1
      %v849 = vsel %vm818, %v846, %v848
      %v850 = vrot.slane %v607, 1
      %v851 = vsel %vm818, %v848, %v850
      %v852 = vrot.slane %v608, 1
      %v853 = vsel %vm818, %v850, %v852
      %v854 = vrot.slane %v609, 1
      %v855 = vsel %vm818, %v852, %v854
      %856 = vrot.lane.b32.xlu0 %v821, 8
      %v857 = vpop.permute.xlu0 %856
      %858 = vrot.lane.b32.xlu0 %v823, 8
      %v859 = vpop.permute.xlu0 %858
      %860 = vrot.lane.b32.xlu0 %v825, 8
      %v861 = vpop.permute.xlu0 %860
      %862 = vrot.lane.b32.xlu0 %v827, 8
      %v863 = vpop.permute.xlu0 %862
      %864 = vrot.lane.b32.xlu0 %v829, 8
      %v865 = vpop.permute.xlu0 %864
      %866 = vrot.lane.b32.xlu0 %v831, 8
      %v867 = vpop.permute.xlu0 %866
      %868 = vrot.lane.b32.xlu0 %v833, 8
      %v869 = vpop.permute.xlu0 %868
      %870 = vrot.lane.b32.xlu0 %v835, 8
      %v871 = vpop.permute.xlu0 %870
      %872 = vrot.lane.b32.xlu0 %v837, 8
      %v873 = vpop.permute.xlu0 %872
      %874 = vrot.lane.b32.xlu0 %v839, 8
      %v875 = vpop.permute.xlu0 %874
      %876 = vrot.lane.b32.xlu0 %v841, 8
      %v877 = vpop.permute.xlu0 %876
      %878 = vrot.lane.b32.xlu0 %v843, 8
      %v879 = vpop.permute.xlu0 %878
      %880 = vrot.lane.b32.xlu0 %v845, 8
      %v881 = vpop.permute.xlu0 %880
      %882 = vrot.lane.b32.xlu0 %v847, 8
      %v883 = vpop.permute.xlu0 %882
      %884 = vrot.lane.b32.xlu0 %v849, 8
      %v885 = vpop.permute.xlu0 %884
      %886 = vrot.lane.b32.xlu0 %v851, 8
      %v887 = vpop.permute.xlu0 %886
      %888 = vrot.lane.b32.xlu0 %v853, 8
      %v889 = vpop.permute.xlu0 %888
      %890 = vrot.lane.b32.xlu0 %v855, 8
      %v891 = vpop.permute.xlu0 %890
      %v894 = vrot.slane %v610, 1
      %v895 = vsel %vm818, %v852, %v894
      %v896 = vrot.slane %v611, 1
      %v897 = vsel %vm818, %v894, %v896
      %898 = vrot.lane.b32.xlu0 %v823, 12
      %v899 = vpop.permute.xlu0 %898
      %900 = vrot.lane.b32.xlu0 %v825, 12
      %v901 = vpop.permute.xlu0 %900
      %902 = vrot.lane.b32.xlu0 %v827, 12
      %v903 = vpop.permute.xlu0 %902
      %904 = vrot.lane.b32.xlu0 %v829, 12
      %v905 = vpop.permute.xlu0 %904
      %906 = vrot.lane.b32.xlu0 %v831, 12
      %v907 = vpop.permute.xlu0 %906
      %908 = vrot.lane.b32.xlu0 %v833, 12
      %v909 = vpop.permute.xlu0 %908
      %910 = vrot.lane.b32.xlu0 %v835, 12
      %v911 = vpop.permute.xlu0 %910
      %912 = vrot.lane.b32.xlu0 %v837, 12
      %v913 = vpop.permute.xlu0 %912
      %914 = vrot.lane.b32.xlu0 %v839, 12
      %v915 = vpop.permute.xlu0 %914
      %916 = vrot.lane.b32.xlu0 %v841, 12
      %v917 = vpop.permute.xlu0 %916
      %918 = vrot.lane.b32.xlu0 %v843, 12
      %v919 = vpop.permute.xlu0 %918
      %920 = vrot.lane.b32.xlu0 %v845, 12
      %v921 = vpop.permute.xlu0 %920
      %922 = vrot.lane.b32.xlu0 %v847, 12
      %v923 = vpop.permute.xlu0 %922
      %924 = vrot.lane.b32.xlu0 %v849, 12
      %v925 = vpop.permute.xlu0 %924
      %926 = vrot.lane.b32.xlu0 %v851, 12
      %v927 = vpop.permute.xlu0 %926
      %928 = vrot.lane.b32.xlu0 %v853, 12
      %v929 = vpop.permute.xlu0 %928
      %930 = vrot.lane.b32.xlu0 %v895, 12
      %v931 = vpop.permute.xlu0 %930
      %932 = vrot.lane.b32.xlu0 %v897, 12
      %v933 = vpop.permute.xlu0 %932
      %vm934 = vsmask.f32 6400
      %v935 = vrot.slane %v627, 1
      %v936 = vrot.slane %v623, 2
      %v937 = vor.u32 %v935, %v936
      %v938 = vrot.slane %v635, 1
      %v939 = vrot.slane %v631, 2
      %v940 = vor.u32 %v938, %v939
      %v941 = vsel %vm934, %v937, %v940
      %v942 = vrot.slane %v643, 1
      %v943 = vrot.slane %v639, 2
      %v944 = vor.u32 %v942, %v943
      %v945 = vsel %vm934, %v940, %v944
      %v946 = vrot.slane %v651, 1
      %v947 = vrot.slane %v647, 2
      %v948 = vor.u32 %v946, %v947
      %v949 = vsel %vm934, %v944, %v948
      %v950 = vrot.slane %v659, 1
      %v951 = vrot.slane %v655, 2
      %v952 = vor.u32 %v950, %v951
      %v953 = vsel %vm934, %v948, %v952
      %v954 = vrot.slane %v667, 1
      %v955 = vrot.slane %v663, 2
      %v956 = vor.u32 %v954, %v955
      %v957 = vsel %vm934, %v952, %v956
      %v958 = vrot.slane %v675, 1
      %v959 = vrot.slane %v671, 2
      %v960 = vor.u32 %v958, %v959
      %v961 = vsel %vm934, %v956, %v960
      %v962 = vrot.slane %v683, 1
      %v963 = vrot.slane %v679, 2
      %v964 = vor.u32 %v962, %v963
      %v965 = vsel %vm934, %v960, %v964
      %v966 = vrot.slane %v691, 1
      %v967 = vrot.slane %v687, 2
      %v968 = vor.u32 %v966, %v967
      %v969 = vsel %vm934, %v964, %v968
      %v970 = vrot.slane %v699, 1
      %v971 = vrot.slane %v695, 2
      %v972 = vor.u32 %v970, %v971
      %v973 = vsel %vm934, %v968, %v972
      %v974 = vrot.slane %v707, 1
      %v975 = vrot.slane %v703, 2
      %v976 = vor.u32 %v974, %v975
      %v977 = vsel %vm934, %v972, %v976
      %v978 = vrot.slane %v715, 1
      %v979 = vrot.slane %v711, 2
      %v980 = vor.u32 %v978, %v979
      %v981 = vsel %vm934, %v976, %v980
      %v982 = vrot.slane %v723, 1
      %v983 = vrot.slane %v719, 2
      %v984 = vor.u32 %v982, %v983
      %v985 = vsel %vm934, %v980, %v984
      %v986 = vrot.slane %v731, 1
      %v987 = vrot.slane %v727, 2
      %v988 = vor.u32 %v986, %v987
      %v989 = vsel %vm934, %v984, %v988
      %v990 = vrot.slane %v739, 1
      %v991 = vrot.slane %v735, 2
      %v992 = vor.u32 %v990, %v991
      %v993 = vsel %vm934, %v988, %v992
      %v994 = vrot.slane %v747, 1
      %v995 = vrot.slane %v743, 2
      %v996 = vor.u32 %v994, %v995
      %v997 = vsel %vm934, %v992, %v996
      %v998 = vrot.slane %v755, 1
      %v999 = vrot.slane %v751, 2
      %v1000 = vor.u32 %v998, %v999
      %v1001 = vsel %vm934, %v996, %v1000
      %v1003 = vshrl.u32 %v610, 16
      %v1005 = vrot.slane %v1003, 1
      %v1006 = vshll.u32 %v610, 16
      %v1008 = vrot.slane %v1006, 2
      %v1009 = vor.u32 %v1005, %v1008
      %v1010 = vsel %vm934, %v1000, %v1009
      %v1012 = vshrl.u32 %v611, 16
      %v1014 = vrot.slane %v1012, 1
      %v1015 = vshll.u32 %v611, 16
      %v1017 = vrot.slane %v1015, 2
      %v1018 = vor.u32 %v1014, %v1017
      %v1019 = vsel %vm934, %v1009, %v1018
      %1020 = vrot.lane.b32.xlu0 %v941, 16
      %v1021 = vpop.permute.xlu0 %1020
      %1022 = vrot.lane.b32.xlu0 %v945, 16
      %v1023 = vpop.permute.xlu0 %1022
      %1024 = vrot.lane.b32.xlu0 %v949, 16
      %v1025 = vpop.permute.xlu0 %1024
      %1026 = vrot.lane.b32.xlu0 %v953, 16
      %v1027 = vpop.permute.xlu0 %1026
      %1028 = vrot.lane.b32.xlu0 %v957, 16
      %v1029 = vpop.permute.xlu0 %1028
      %1030 = vrot.lane.b32.xlu0 %v961, 16
      %v1031 = vpop.permute.xlu0 %1030
      %1032 = vrot.lane.b32.xlu0 %v965, 16
      %v1033 = vpop.permute.xlu0 %1032
      %1034 = vrot.lane.b32.xlu0 %v969, 16
      %v1035 = vpop.permute.xlu0 %1034
      %1036 = vrot.lane.b32.xlu0 %v973, 16
      %v1037 = vpop.permute.xlu0 %1036
      %1038 = vrot.lane.b32.xlu0 %v977, 16
      %v1039 = vpop.permute.xlu0 %1038
      %1040 = vrot.lane.b32.xlu0 %v981, 16
      %v1041 = vpop.permute.xlu0 %1040
      %1042 = vrot.lane.b32.xlu0 %v985, 16
      %v1043 = vpop.permute.xlu0 %1042
      %1044 = vrot.lane.b32.xlu0 %v989, 16
      %v1045 = vpop.permute.xlu0 %1044
      %1046 = vrot.lane.b32.xlu0 %v993, 16
      %v1047 = vpop.permute.xlu0 %1046
      %1048 = vrot.lane.b32.xlu0 %v997, 16
      %v1049 = vpop.permute.xlu0 %1048
      %1050 = vrot.lane.b32.xlu0 %v1001, 16
      %v1051 = vpop.permute.xlu0 %1050
      %1052 = vrot.lane.b32.xlu0 %v1010, 16
      %v1053 = vpop.permute.xlu0 %1052
      %1054 = vrot.lane.b32.xlu0 %v1019, 16
      %v1055 = vpop.permute.xlu0 %1054
      %vm1056 = vcmask 1045504
      %v1057 = vrot.slane %v592, 2
      %v1058 = vrot.slane %v593, 2
      %v1059 = vsel %vm1056, %v1057, %v1058
      %v1060 = vrot.slane %v594, 2
      %v1061 = vsel %vm1056, %v1058, %v1060
      %v1062 = vrot.slane %v595, 2
      %v1063 = vsel %vm1056, %v1060, %v1062
      %v1064 = vrot.slane %v596, 2
      %v1065 = vsel %vm1056, %v1062, %v1064
      %v1066 = vrot.slane %v597, 2
      %v1067 = vsel %vm1056, %v1064, %v1066
      %v1068 = vrot.slane %v598, 2
      %v1069 = vsel %vm1056, %v1066, %v1068
      %v1070 = vrot.slane %v599, 2
      %v1071 = vsel %vm1056, %v1068, %v1070
      %v1072 = vrot.slane %v600, 2
      %v1073 = vsel %vm1056, %v1070, %v1072
      %v1074 = vrot.slane %v601, 2
      %v1075 = vsel %vm1056, %v1072, %v1074
      %v1076 = vrot.slane %v602, 2
      %v1077 = vsel %vm1056, %v1074, %v1076
      %v1078 = vrot.slane %v603, 2
      %v1079 = vsel %vm1056, %v1076, %v1078
      %v1080 = vrot.slane %v604, 2
      %v1081 = vsel %vm1056, %v1078, %v1080
      %v1082 = vrot.slane %v605, 2
      %v1083 = vsel %vm1056, %v1080, %v1082
      %v1084 = vrot.slane %v606, 2
      %v1085 = vsel %vm1056, %v1082, %v1084
      %v1086 = vrot.slane %v607, 2
      %v1087 = vsel %vm1056, %v1084, %v1086
      %v1088 = vrot.slane %v608, 2
      %v1089 = vsel %vm1056, %v1086, %v1088
      %v1090 = vrot.slane %v610, 2
      %v1091 = vsel %vm1056, %v1088, %v1090
      %v1092 = vrot.slane %v611, 2
      %v1093 = vsel %vm1056, %v1090, %v1092
      %1094 = vrot.lane.b32.xlu0 %v1059, 20
      %v1095 = vpop.permute.xlu0 %1094
      %1096 = vrot.lane.b32.xlu0 %v1061, 20
      %v1097 = vpop.permute.xlu0 %1096
      %1098 = vrot.lane.b32.xlu0 %v1063, 20
      %v1099 = vpop.permute.xlu0 %1098
      %1100 = vrot.lane.b32.xlu0 %v1065, 20
      %v1101 = vpop.permute.xlu0 %1100
      %1102 = vrot.lane.b32.xlu0 %v1067, 20
      %v1103 = vpop.permute.xlu0 %1102
      %1104 = vrot.lane.b32.xlu0 %v1069, 20
      %v1105 = vpop.permute.xlu0 %1104
      %1106 = vrot.lane.b32.xlu0 %v1071, 20
      %v1107 = vpop.permute.xlu0 %1106
      %1108 = vrot.lane.b32.xlu0 %v1073, 20
      %v1109 = vpop.permute.xlu0 %1108
      %1110 = vrot.lane.b32.xlu0 %v1075, 20
      %v1111 = vpop.permute.xlu0 %1110
      %1112 = vrot.lane.b32.xlu0 %v1077, 20
      %v1113 = vpop.permute.xlu0 %1112
      %1114 = vrot.lane.b32.xlu0 %v1079, 20
      %v1115 = vpop.permute.xlu0 %1114
      %1116 = vrot.lane.b32.xlu0 %v1081, 20
      %v1117 = vpop.permute.xlu0 %1116
      %1118 = vrot.lane.b32.xlu0 %v1083, 20
      %v1119 = vpop.permute.xlu0 %1118
      %1120 = vrot.lane.b32.xlu0 %v1085, 20
      %v1121 = vpop.permute.xlu0 %1120
      %1122 = vrot.lane.b32.xlu0 %v1087, 20
      %v1123 = vpop.permute.xlu0 %1122
      %1124 = vrot.lane.b32.xlu0 %v1089, 20
      %v1125 = vpop.permute.xlu0 %1124
      %1126 = vrot.lane.b32.xlu0 %v1091, 20
      %v1127 = vpop.permute.xlu0 %1126
      %1128 = vrot.lane.b32.xlu0 %v1093, 20
      %v1129 = vpop.permute.xlu0 %1128
      %v1132 = vrot.slane %v612, 2
      %v1133 = vsel %vm1056, %v1090, %v1132
      %v1134 = vrot.slane %v613, 2
      %v1135 = vsel %vm1056, %v1132, %v1134
      %1136 = vrot.lane.b32.xlu0 %v1061, 24
      %v1137 = vpop.permute.xlu0 %1136
      %1138 = vrot.lane.b32.xlu0 %v1063, 24
      %v1139 = vpop.permute.xlu0 %1138
      %1140 = vrot.lane.b32.xlu0 %v1065, 24
      %v1141 = vpop.permute.xlu0 %1140
      %1142 = vrot.lane.b32.xlu0 %v1067, 24
      %v1143 = vpop.permute.xlu0 %1142
      %1144 = vrot.lane.b32.xlu0 %v1069, 24
      %v1145 = vpop.permute.xlu0 %1144
      %1146 = vrot.lane.b32.xlu0 %v1071, 24
      %v1147 = vpop.permute.xlu0 %1146
      %1148 = vrot.lane.b32.xlu0 %v1073, 24
      %v1149 = vpop.permute.xlu0 %1148
      %1150 = vrot.lane.b32.xlu0 %v1075, 24
      %v1151 = vpop.permute.xlu0 %1150
      %1152 = vrot.lane.b32.xlu0 %v1077, 24
      %v1153 = vpop.permute.xlu0 %1152
      %1154 = vrot.lane.b32.xlu0 %v1079, 24
      %v1155 = vpop.permute.xlu0 %1154
      %1156 = vrot.lane.b32.xlu0 %v1081, 24
      %v1157 = vpop.permute.xlu0 %1156
      %1158 = vrot.lane.b32.xlu0 %v1083, 24
      %v1159 = vpop.permute.xlu0 %1158
      %1160 = vrot.lane.b32.xlu0 %v1085, 24
      %v1161 = vpop.permute.xlu0 %1160
      %1162 = vrot.lane.b32.xlu0 %v1087, 24
      %v1163 = vpop.permute.xlu0 %1162
      %1164 = vrot.lane.b32.xlu0 %v1089, 24
      %v1165 = vpop.permute.xlu0 %1164
      %1166 = vrot.lane.b32.xlu0 %v1091, 24
      %v1167 = vpop.permute.xlu0 %1166
      %1168 = vrot.lane.b32.xlu0 %v1133, 24
      %v1169 = vpop.permute.xlu0 %1168
      %1170 = vrot.lane.b32.xlu0 %v1135, 24
      %v1171 = vpop.permute.xlu0 %1170
      %vm1172 = vsmask.f32 5376
      %v1173 = vrot.slane %v635, 2
      %v1174 = vrot.slane %v631, 3
      %v1175 = vor.u32 %v1173, %v1174
      %v1176 = vrot.slane %v643, 2
      %v1177 = vrot.slane %v639, 3
      %v1178 = vor.u32 %v1176, %v1177
      %v1179 = vsel %vm1172, %v1175, %v1178
      %v1180 = vrot.slane %v651, 2
      %v1181 = vrot.slane %v647, 3
      %v1182 = vor.u32 %v1180, %v1181
      %v1183 = vsel %vm1172, %v1178, %v1182
      %v1184 = vrot.slane %v659, 2
      %v1185 = vrot.slane %v655, 3
      %v1186 = vor.u32 %v1184, %v1185
      %v1187 = vsel %vm1172, %v1182, %v1186
      %v1188 = vrot.slane %v667, 2
      %v1189 = vrot.slane %v663, 3
      %v1190 = vor.u32 %v1188, %v1189
      %v1191 = vsel %vm1172, %v1186, %v1190
      %v1192 = vrot.slane %v675, 2
      %v1193 = vrot.slane %v671, 3
      %v1194 = vor.u32 %v1192, %v1193
      %v1195 = vsel %vm1172, %v1190, %v1194
      %v1196 = vrot.slane %v683, 2
      %v1197 = vrot.slane %v679, 3
      %v1198 = vor.u32 %v1196, %v1197
      %v1199 = vsel %vm1172, %v1194, %v1198
      %v1200 = vrot.slane %v691, 2
      %v1201 = vrot.slane %v687, 3
      %v1202 = vor.u32 %v1200, %v1201
      %v1203 = vsel %vm1172, %v1198, %v1202
      %v1204 = vrot.slane %v699, 2
      %v1205 = vrot.slane %v695, 3
      %v1206 = vor.u32 %v1204, %v1205
      %v1207 = vsel %vm1172, %v1202, %v1206
      %v1208 = vrot.slane %v707, 2
      %v1209 = vrot.slane %v703, 3
      %v1210 = vor.u32 %v1208, %v1209
      %v1211 = vsel %vm1172, %v1206, %v1210
      %v1212 = vrot.slane %v715, 2
      %v1213 = vrot.slane %v711, 3
      %v1214 = vor.u32 %v1212, %v1213
      %v1215 = vsel %vm1172, %v1210, %v1214
      %v1216 = vrot.slane %v723, 2
      %v1217 = vrot.slane %v719, 3
      %v1218 = vor.u32 %v1216, %v1217
      %v1219 = vsel %vm1172, %v1214, %v1218
      %v1220 = vrot.slane %v731, 2
      %v1221 = vrot.slane %v727, 3
      %v1222 = vor.u32 %v1220, %v1221
      %v1223 = vsel %vm1172, %v1218, %v1222
      %v1224 = vrot.slane %v739, 2
      %v1225 = vrot.slane %v735, 3
      %v1226 = vor.u32 %v1224, %v1225
      %v1227 = vsel %vm1172, %v1222, %v1226
      %v1228 = vrot.slane %v747, 2
      %v1229 = vrot.slane %v743, 3
      %v1230 = vor.u32 %v1228, %v1229
      %v1231 = vsel %vm1172, %v1226, %v1230
      %v1232 = vrot.slane %v755, 2
      %v1233 = vrot.slane %v751, 3
      %v1234 = vor.u32 %v1232, %v1233
      %v1235 = vsel %vm1172, %v1230, %v1234
      %v1236 = vrot.slane %v1003, 2
      %v1237 = vrot.slane %v1006, 3
      %v1238 = vor.u32 %v1236, %v1237
      %v1239 = vsel %vm1172, %v1234, %v1238
      %v1241 = vshrl.u32 %v612, 16
      %v1243 = vrot.slane %v1241, 2
      %v1244 = vshll.u32 %v612, 16
      %v1246 = vrot.slane %v1244, 3
      %v1247 = vor.u32 %v1243, %v1246
      %v1248 = vsel %vm1172, %v1238, %v1247
      %v1250 = vshrl.u32 %v613, 16
      %v1252 = vrot.slane %v1250, 2
      %v1253 = vshll.u32 %v613, 16
      %v1255 = vrot.slane %v1253, 3
      %v1256 = vor.u32 %v1252, %v1255
      %v1257 = vsel %vm1172, %v1247, %v1256
      %1258 = vrot.lane.b32.xlu0 %v1179, 28
      %v1259 = vpop.permute.xlu0 %1258
      %1260 = vrot.lane.b32.xlu0 %v1183, 28
      %v1261 = vpop.permute.xlu0 %1260
      %1262 = vrot.lane.b32.xlu0 %v1187, 28
      %v1263 = vpop.permute.xlu0 %1262
      %1264 = vrot.lane.b32.xlu0 %v1191, 28
      %v1265 = vpop.permute.xlu0 %1264
      %1266 = vrot.lane.b32.xlu0 %v1195, 28
      %v1267 = vpop.permute.xlu0 %1266
      %1268 = vrot.lane.b32.xlu0 %v1199, 28
      %v1269 = vpop.permute.xlu0 %1268
      %1270 = vrot.lane.b32.xlu0 %v1203, 28
      %v1271 = vpop.permute.xlu0 %1270
      %1272 = vrot.lane.b32.xlu0 %v1207, 28
      %v1273 = vpop.permute.xlu0 %1272
      %1274 = vrot.lane.b32.xlu0 %v1211, 28
      %v1275 = vpop.permute.xlu0 %1274
      %1276 = vrot.lane.b32.xlu0 %v1215, 28
      %v1277 = vpop.permute.xlu0 %1276
      %1278 = vrot.lane.b32.xlu0 %v1219, 28
      %v1279 = vpop.permute.xlu0 %1278
      %1280 = vrot.lane.b32.xlu0 %v1223, 28
      %v1281 = vpop.permute.xlu0 %1280
      %1282 = vrot.lane.b32.xlu0 %v1227, 28
      %v1283 = vpop.permute.xlu0 %1282
      %1284 = vrot.lane.b32.xlu0 %v1231, 28
      %v1285 = vpop.permute.xlu0 %1284
      %1286 = vrot.lane.b32.xlu0 %v1235, 28
      %v1287 = vpop.permute.xlu0 %1286
      %1288 = vrot.lane.b32.xlu0 %v1239, 28
      %v1289 = vpop.permute.xlu0 %1288
      %1290 = vrot.lane.b32.xlu0 %v1248, 28
      %v1291 = vpop.permute.xlu0 %1290
      %1292 = vrot.lane.b32.xlu0 %v1257, 28
      %v1293 = vpop.permute.xlu0 %1292
      %vm1294 = vcmask 1044480
      %v1295 = vrot.slane %v593, 3
      %v1296 = vrot.slane %v594, 3
      %v1297 = vsel %vm1294, %v1295, %v1296
      %v1298 = vrot.slane %v595, 3
      %v1299 = vsel %vm1294, %v1296, %v1298
      %v1300 = vrot.slane %v596, 3
      %v1301 = vsel %vm1294, %v1298, %v1300
      %v1302 = vrot.slane %v597, 3
      %v1303 = vsel %vm1294, %v1300, %v1302
      %v1304 = vrot.slane %v598, 3
      %v1305 = vsel %vm1294, %v1302, %v1304
      %v1306 = vrot.slane %v599, 3
      %v1307 = vsel %vm1294, %v1304, %v1306
      %v1308 = vrot.slane %v600, 3
      %v1309 = vsel %vm1294, %v1306, %v1308
      %v1310 = vrot.slane %v601, 3
      %v1311 = vsel %vm1294, %v1308, %v1310
      %v1312 = vrot.slane %v602, 3
      %v1313 = vsel %vm1294, %v1310, %v1312
      %v1314 = vrot.slane %v603, 3
      %v1315 = vsel %vm1294, %v1312, %v1314
      %v1316 = vrot.slane %v604, 3
      %v1317 = vsel %vm1294, %v1314, %v1316
      %v1318 = vrot.slane %v605, 3
      %v1319 = vsel %vm1294, %v1316, %v1318
      %v1320 = vrot.slane %v606, 3
      %v1321 = vsel %vm1294, %v1318, %v1320
      %v1322 = vrot.slane %v607, 3
      %v1323 = vsel %vm1294, %v1320, %v1322
      %v1324 = vrot.slane %v608, 3
      %v1325 = vsel %vm1294, %v1322, %v1324
      %v1326 = vrot.slane %v610, 3
      %v1327 = vsel %vm1294, %v1324, %v1326
      %v1328 = vrot.slane %v612, 3
      %v1329 = vsel %vm1294, %v1326, %v1328
      %v1330 = vrot.slane %v613, 3
      %v1331 = vsel %vm1294, %v1328, %v1330
      %1332 = vrot.lane.b32.xlu0 %v1297, 32
      %v1333 = vpop.permute.xlu0 %1332
      %1334 = vrot.lane.b32.xlu0 %v1299, 32
      %v1335 = vpop.permute.xlu0 %1334
      %1336 = vrot.lane.b32.xlu0 %v1301, 32
      %v1337 = vpop.permute.xlu0 %1336
      %1338 = vrot.lane.b32.xlu0 %v1303, 32
      %v1339 = vpop.permute.xlu0 %1338
      %1340 = vrot.lane.b32.xlu0 %v1305, 32
      %v1341 = vpop.permute.xlu0 %1340
      %1342 = vrot.lane.b32.xlu0 %v1307, 32
      %v1343 = vpop.permute.xlu0 %1342
      %1344 = vrot.lane.b32.xlu0 %v1309, 32
      %v1345 = vpop.permute.xlu0 %1344
      %1346 = vrot.lane.b32.xlu0 %v1311, 32
      %v1347 = vpop.permute.xlu0 %1346
      %1348 = vrot.lane.b32.xlu0 %v1313, 32
      %v1349 = vpop.permute.xlu0 %1348
      %1350 = vrot.lane.b32.xlu0 %v1315, 32
      %v1351 = vpop.permute.xlu0 %1350
      %1352 = vrot.lane.b32.xlu0 %v1317, 32
      %v1353 = vpop.permute.xlu0 %1352
      %1354 = vrot.lane.b32.xlu0 %v1319, 32
      %v1355 = vpop.permute.xlu0 %1354
      %1356 = vrot.lane.b32.xlu0 %v1321, 32
      %v1357 = vpop.permute.xlu0 %1356
      %1358 = vrot.lane.b32.xlu0 %v1323, 32
      %v1359 = vpop.permute.xlu0 %1358
      %1360 = vrot.lane.b32.xlu0 %v1325, 32
      %v1361 = vpop.permute.xlu0 %1360
      %1362 = vrot.lane.b32.xlu0 %v1327, 32
      %v1363 = vpop.permute.xlu0 %1362
      %1364 = vrot.lane.b32.xlu0 %v1329, 32
      %v1365 = vpop.permute.xlu0 %1364
      %1366 = vrot.lane.b32.xlu0 %v1331, 32
      %v1367 = vpop.permute.xlu0 %1366
      %vm1368 = vcmask 31744
      %v1370 = vsel %vm1368, %v591, %v764
      %v1372 = vsel %vm1368, %v592, %v766
      %v1374 = vsel %vm1368, %v593, %v768
      %v1376 = vsel %vm1368, %v594, %v770
      %v1378 = vsel %vm1368, %v595, %v772
      %v1380 = vsel %vm1368, %v596, %v774
      %v1382 = vsel %vm1368, %v597, %v776
      %v1384 = vsel %vm1368, %v598, %v778
      %v1386 = vsel %vm1368, %v599, %v780
      %v1388 = vsel %vm1368, %v600, %v782
      %v1390 = vsel %vm1368, %v601, %v784
      %v1392 = vsel %vm1368, %v602, %v786
      %v1394 = vsel %vm1368, %v603, %v788
      %v1396 = vsel %vm1368, %v604, %v790
      %v1398 = vsel %vm1368, %v605, %v792
      %v1400 = vsel %vm1368, %v606, %v794
      %v1402 = vsel %vm1368, %v607, %v796
      %v1404 = vsel %vm1368, %v608, %v798
      %vm1405 = vcmask 64512
      %v1407 = vsel %vm1405, %v1370, %v857
      %v1409 = vsel %vm1405, %v1372, %v859
      %v1411 = vsel %vm1405, %v1374, %v861
      %v1413 = vsel %vm1405, %v1376, %v863
      %v1415 = vsel %vm1405, %v1378, %v865
      %v1417 = vsel %vm1405, %v1380, %v867
      %v1419 = vsel %vm1405, %v1382, %v869
      %v1421 = vsel %vm1405, %v1384, %v871
      %v1423 = vsel %vm1405, %v1386, %v873
      %v1425 = vsel %vm1405, %v1388, %v875
      %v1427 = vsel %vm1405, %v1390, %v877
      %v1429 = vsel %vm1405, %v1392, %v879
      %v1431 = vsel %vm1405, %v1394, %v881
      %v1433 = vsel %vm1405, %v1396, %v883
      %v1435 = vsel %vm1405, %v1398, %v885
      %v1437 = vsel %vm1405, %v1400, %v887
      %v1439 = vsel %vm1405, %v1402, %v889
      %v1441 = vsel %vm1405, %v1404, %v891
      %vm1442 = vcmask 97280
      %v1444 = vsel %vm1442, %v1407, %v899
      %v1446 = vsel %vm1442, %v1409, %v901
      %v1448 = vsel %vm1442, %v1411, %v903
      %v1450 = vsel %vm1442, %v1413, %v905
      %v1452 = vsel %vm1442, %v1415, %v907
      %v1454 = vsel %vm1442, %v1417, %v909
      %v1456 = vsel %vm1442, %v1419, %v911
      %v1458 = vsel %vm1442, %v1421, %v913
      %v1460 = vsel %vm1442, %v1423, %v915
      %v1462 = vsel %vm1442, %v1425, %v917
      %v1464 = vsel %vm1442, %v1427, %v919
      %v1466 = vsel %vm1442, %v1429, %v921
      %v1468 = vsel %vm1442, %v1431, %v923
      %v1470 = vsel %vm1442, %v1433, %v925
      %v1472 = vsel %vm1442, %v1435, %v927
      %v1474 = vsel %vm1442, %v1437, %v929
      %v1476 = vsel %vm1442, %v1439, %v931
      %v1478 = vsel %vm1442, %v1441, %v933
      %vm1479 = vcmask 130048
      %v1481 = vsel %vm1479, %v1444, %v1021
      %v1483 = vsel %vm1479, %v1446, %v1023
      %v1485 = vsel %vm1479, %v1448, %v1025
      %v1487 = vsel %vm1479, %v1450, %v1027
      %v1489 = vsel %vm1479, %v1452, %v1029
      %v1491 = vsel %vm1479, %v1454, %v1031
      %v1493 = vsel %vm1479, %v1456, %v1033
      %v1495 = vsel %vm1479, %v1458, %v1035
      %v1497 = vsel %vm1479, %v1460, %v1037
      %v1499 = vsel %vm1479, %v1462, %v1039
      %v1501 = vsel %vm1479, %v1464, %v1041
      %v1503 = vsel %vm1479, %v1466, %v1043
      %v1505 = vsel %vm1479, %v1468, %v1045
      %v1507 = vsel %vm1479, %v1470, %v1047
      %v1509 = vsel %vm1479, %v1472, %v1049
      %v1511 = vsel %vm1479, %v1474, %v1051
      %v1513 = vsel %vm1479, %v1476, %v1053
      %v1515 = vsel %vm1479, %v1478, %v1055
      %vm1516 = vcmask 162816
      %v1518 = vsel %vm1516, %v1481, %v1095
      %v1520 = vsel %vm1516, %v1483, %v1097
      %v1522 = vsel %vm1516, %v1485, %v1099
      %v1524 = vsel %vm1516, %v1487, %v1101
      %v1526 = vsel %vm1516, %v1489, %v1103
      %v1528 = vsel %vm1516, %v1491, %v1105
      %v1530 = vsel %vm1516, %v1493, %v1107
      %v1532 = vsel %vm1516, %v1495, %v1109
      %v1534 = vsel %vm1516, %v1497, %v1111
      %v1536 = vsel %vm1516, %v1499, %v1113
      %v1538 = vsel %vm1516, %v1501, %v1115
      %v1540 = vsel %vm1516, %v1503, %v1117
      %v1542 = vsel %vm1516, %v1505, %v1119
      %v1544 = vsel %vm1516, %v1507, %v1121
      %v1546 = vsel %vm1516, %v1509, %v1123
      %v1548 = vsel %vm1516, %v1511, %v1125
      %v1550 = vsel %vm1516, %v1513, %v1127
      %v1552 = vsel %vm1516, %v1515, %v1129
      %vm1553 = vcmask 195584
      %v1555 = vsel %vm1553, %v1518, %v1137
      %v1557 = vsel %vm1553, %v1520, %v1139
      %v1559 = vsel %vm1553, %v1522, %v1141
      %v1561 = vsel %vm1553, %v1524, %v1143
      %v1563 = vsel %vm1553, %v1526, %v1145
      %v1565 = vsel %vm1553, %v1528, %v1147
      %v1567 = vsel %vm1553, %v1530, %v1149
      %v1569 = vsel %vm1553, %v1532, %v1151
      %v1571 = vsel %vm1553, %v1534, %v1153
      %v1573 = vsel %vm1553, %v1536, %v1155
      %v1575 = vsel %vm1553, %v1538, %v1157
      %v1577 = vsel %vm1553, %v1540, %v1159
      %v1579 = vsel %vm1553, %v1542, %v1161
      %v1581 = vsel %vm1553, %v1544, %v1163
      %v1583 = vsel %vm1553, %v1546, %v1165
      %v1585 = vsel %vm1553, %v1548, %v1167
      %v1587 = vsel %vm1553, %v1550, %v1169
      %v1589 = vsel %vm1553, %v1552, %v1171
      %vm1590 = vcmask 228352
      %v1592 = vsel %vm1590, %v1555, %v1259
      %v1594 = vsel %vm1590, %v1557, %v1261
      %v1596 = vsel %vm1590, %v1559, %v1263
      %v1598 = vsel %vm1590, %v1561, %v1265
      %v1600 = vsel %vm1590, %v1563, %v1267
      %v1602 = vsel %vm1590, %v1565, %v1269
      %v1604 = vsel %vm1590, %v1567, %v1271
      %v1606 = vsel %vm1590, %v1569, %v1273
      %v1608 = vsel %vm1590, %v1571, %v1275
      %v1610 = vsel %vm1590, %v1573, %v1277
      %v1612 = vsel %vm1590, %v1575, %v1279
      %v1614 = vsel %vm1590, %v1577, %v1281
      %v1616 = vsel %vm1590, %v1579, %v1283
      %v1618 = vsel %vm1590, %v1581, %v1285
      %v1620 = vsel %vm1590, %v1583, %v1287
      %v1622 = vsel %vm1590, %v1585, %v1289
      %v1624 = vsel %vm1590, %v1587, %v1291
      %v1626 = vsel %vm1590, %v1589, %v1293
      %vm1627 = vcmask 261120
      %v1629 = vsel %vm1627, %v1592, %v1333
      %v1631 = vsel %vm1627, %v1594, %v1335
      %v1633 = vsel %vm1627, %v1596, %v1337
      %v1635 = vsel %vm1627, %v1598, %v1339
      %v1637 = vsel %vm1627, %v1600, %v1341
      %v1639 = vsel %vm1627, %v1602, %v1343
      %v1641 = vsel %vm1627, %v1604, %v1345
      %v1643 = vsel %vm1627, %v1606, %v1347
      %v1645 = vsel %vm1627, %v1608, %v1349
      %v1647 = vsel %vm1627, %v1610, %v1351
      %v1649 = vsel %vm1627, %v1612, %v1353
      %v1651 = vsel %vm1627, %v1614, %v1355
      %v1653 = vsel %vm1627, %v1616, %v1357
      %v1655 = vsel %vm1627, %v1618, %v1359
      %v1657 = vsel %vm1627, %v1620, %v1361
      %v1659 = vsel %vm1627, %v1622, %v1363
      %v1661 = vsel %vm1627, %v1624, %v1365
      %v1663 = vsel %vm1627, %v1626, %v1367
      %v1664 = vld [vmem:[%s1] sm:$0xf]
      %v1665 = vld [vmem:[%s1 + $0x4] sm:$0xf]
      %v1666 = vld [vmem:[%s1 + $0x8] sm:$0xf]
      %v1667 = vld [vmem:[%s1 + $0xc] sm:$0xf]
      %v1668 = vld [vmem:[%s1 + $0x10] sm:$0x3]
      %v1674 = vunpack.c.l.b16 %v1664
      %v1675 = vunpack.c.l.b16 %v1665
      %v1676 = vunpack.c.l.b16 %v1666
      %v1677 = vunpack.c.l.b16 %v1667
      %v1678 = vunpack.c.l.b16 %v1668
      %v1679 = vpack.c.b16 %v1675, %v1674
      %v1680 = vpack.c.b16 %v1677, %v1676
      %v1681 = vpack.c.b16 %v1678, %v1678
      %vm1684 = vcmask 293888
      %v1685 = vsel %vm1684, %v1629, 0
      %v1687 = vsel %vm1684, %v1631, 0
      %v1689 = vsel %vm1684, %v1633, 0
      %v1691 = vsel %vm1684, %v1635, 0
      %v1693 = vsel %vm1684, %v1637, 0
      %v1695 = vsel %vm1684, %v1639, 0
      %v1697 = vsel %vm1684, %v1641, 0
      %v1699 = vsel %vm1684, %v1643, 0
      %v1701 = vsel %vm1684, %v1645, 0
      %v1703 = vsel %vm1684, %v1647, 0
      %v1705 = vsel %vm1684, %v1649, 0
      %v1707 = vsel %vm1684, %v1651, 0
      %v1709 = vsel %vm1684, %v1653, 0
      %v1711 = vsel %vm1684, %v1655, 0
      %v1713 = vsel %vm1684, %v1657, 0
      %v1715 = vsel %vm1684, %v1659, 0
      %v1717 = vsel %vm1684, %v1661, 0
      %v1719 = vsel %vm1684, %v1663, 0
      %vm1721 = vcmask 1041408
      %v1723 = vsel %vm1721, %v1681, 0
      %1725 = vmatprep.subr.bf16.mxu0 0
      %1726 = vmatpush1.bf16.msra.mxu0 %v1679
      %1727 = vmatprep.subr.bf16.mxu0 0
      %1728 = vmatpush1.bf16.msra.mxu0 %v1680
      %1729 = vmatprep.subr.bf16.mxu0 0
      %1730 = vmatpush1.bf16.msra.mxu0 %v1723
      %1731 = vmatprep.subr.bf16.mxu0 0
      %1732 = vmatpush1.bf16.msra.mxu0 0
      %1733 = vmatprep.subr.bf16.mxu0 0
      %1734 = vmatpush1.bf16.msra.mxu0 0
      %1735 = vmatprep.subr.bf16.mxu0 0
      %1736 = vmatpush1.bf16.msra.mxu0 0
      %1737 = vmatprep.subr.bf16.mxu0 0
      %1738 = vmatpush1.bf16.msra.mxu0 0
      %1739 = vmatprep.subr.bf16.mxu0 0
      %1740 = vmatpush1.bf16.msra.mxu0 0
      %1741 = vmatprep.subr.bf16.mxu0 0
      %1742 = vmatpush1.bf16.msra.mxu0 0
      %1743 = vmatprep.subr.bf16.mxu0 0
      %1744 = vmatpush1.bf16.msra.mxu0 0
      %1745 = vmatprep.subr.bf16.mxu0 0
      %1746 = vmatpush1.bf16.msra.mxu0 0
      %1747 = vmatprep.subr.bf16.mxu0 0
      %1748 = vmatpush1.bf16.msra.mxu0 0
      %1749 = vmatprep.subr.bf16.mxu0 0
      %1750 = vmatpush1.bf16.msra.mxu0 0
      %1751 = vmatprep.subr.bf16.mxu0 0
      %1752 = vmatpush1.bf16.msra.mxu0 0
      %1753 = vmatprep.subr.bf16.mxu0 0
      %1754 = vmatpush1.bf16.msra.mxu0 0
      %1755 = vmatprep.subr.bf16.mxu0 0
      %1756 = vmatpush1.bf16.msra.mxu0 0
      %1757 = vmatprep.mubr.bf16.mxu0 0
      %1758 = vmatmul.mubr.bf16.gmra.mrb[0].mxu0 %v1685
      %v1759 = vpop.f32.mrb[0].mxu0
      %v1760 = vadd.f32 0.0, %v1759
      %v1761 = vpop.f32.mrb[0].mxu0
      %v1762 = vpop.f32.mrb[0].mxu0
      %v1763 = vadd.f32 0.0, %v1762
      %v1764 = vpop.f32.mrb[0].mxu0
      %1765 = vmatprep.mubr.bf16.mxu0 0
      %1766 = vmatmul.mubr.bf16.gmra.mrb[0].mxu0 %v1687
      %v1767 = vpop.f32.mrb[0].mxu0
      %v1768 = vadd.f32 0.0, %v1767
      %v1769 = vpop.f32.mrb[0].mxu0
      %v1770 = vpop.f32.mrb[0].mxu0
      %v1771 = vadd.f32 0.0, %v1770
      %v1772 = vpop.f32.mrb[0].mxu0
      %1773 = vmatprep.mubr.bf16.mxu0 0
      %1774 = vmatmul.mubr.bf16.gmra.mrb[0].mxu0 %v1689
      %v1775 = vpop.f32.mrb[0].mxu0
      %v1776 = vadd.f32 0.0, %v1775
      %v1777 = vpop.f32.mrb[0].mxu0
      %v1778 = vpop.f32.mrb[0].mxu0
      %v1779 = vadd.f32 0.0, %v1778
      %v1780 = vpop.f32.mrb[0].mxu0
      %1781 = vmatprep.mubr.bf16.mxu0 0
      %1782 = vmatmul.mubr.bf16.gmra.mrb[0].mxu0 %v1691
      %v1783 = vpop.f32.mrb[0].mxu0
      %v1784 = vadd.f32 0.0, %v1783
      %v1785 = vpop.f32.mrb[0].mxu0
      %v1786 = vpop.f32.mrb[0].mxu0
      %v1787 = vadd.f32 0.0, %v1786
      %v1788 = vpop.f32.mrb[0].mxu0
      %1789 = vmatprep.mubr.bf16.mxu0 0
      %1790 = vmatmul.mubr.bf16.gmra.mrb[0].mxu0 %v1693
      %v1791 = vpop.f32.mrb[0].mxu0
      %v1792 = vadd.f32 0.0, %v1791
      %v1793 = vpop.f32.mrb[0].mxu0
      %v1794 = vpop.f32.mrb[0].mxu0
      %v1795 = vadd.f32 0.0, %v1794
      %v1796 = vpop.f32.mrb[0].mxu0
      %1797 = vmatprep.mubr.bf16.mxu0 0
      %1798 = vmatmul.mubr.bf16.gmra.mrb[0].mxu0 %v1695
      %v1799 = vpop.f32.mrb[0].mxu0
      %v1800 = vadd.f32 0.0, %v1799
      %v1801 = vpop.f32.mrb[0].mxu0
      %v1802 = vpop.f32.mrb[0].mxu0
      %v1803 = vadd.f32 0.0, %v1802
      %v1804 = vpop.f32.mrb[0].mxu0
      %1805 = vmatprep.mubr.bf16.mxu0 0
      %1806 = vmatmul.mubr.bf16.gmra.mrb[0].mxu0 %v1697
      %v1807 = vpop.f32.mrb[0].mxu0
      %v1808 = vadd.f32 0.0, %v1807
      %v1809 = vpop.f32.mrb[0].mxu0
      %v1810 = vpop.f32.mrb[0].mxu0
      %v1811 = vadd.f32 0.0, %v1810
      %v1812 = vpop.f32.mrb[0].mxu0
      %1813 = vmatprep.mubr.bf16.mxu0 0
      %1814 = vmatmul.mubr.bf16.gmra.mrb[0].mxu0 %v1699
      %v1815 = vpop.f32.mrb[0].mxu0
      %v1816 = vadd.f32 0.0, %v1815
      %v1817 = vpop.f32.mrb[0].mxu0
      %v1818 = vpop.f32.mrb[0].mxu0
      %v1819 = vadd.f32 0.0, %v1818
      %v1820 = vpop.f32.mrb[0].mxu0
      %1821 = vmatprep.mubr.bf16.mxu0 0
      %1822 = vmatmul.mubr.bf16.gmra.mrb[0].mxu0 %v1701
      %v1823 = vpop.f32.mrb[0].mxu0
      %v1824 = vadd.f32 0.0, %v1823
      %v1825 = vpop.f32.mrb[0].mxu0
      %v1826 = vpop.f32.mrb[0].mxu0
      %v1827 = vadd.f32 0.0, %v1826
      %v1828 = vpop.f32.mrb[0].mxu0
      %1829 = vmatprep.mubr.bf16.mxu0 0
      %1830 = vmatmul.mubr.bf16.gmra.mrb[0].mxu0 %v1703
      %v1831 = vpop.f32.mrb[0].mxu0
      %v1832 = vadd.f32 0.0, %v1831
      %v1833 = vpop.f32.mrb[0].mxu0
      %v1834 = vpop.f32.mrb[0].mxu0
      %v1835 = vadd.f32 0.0, %v1834
      %v1836 = vpop.f32.mrb[0].mxu0
      %1837 = vmatprep.mubr.bf16.mxu0 0
      %1838 = vmatmul.mubr.bf16.gmra.mrb[0].mxu0 %v1705
      %v1839 = vpop.f32.mrb[0].mxu0
      %v1840 = vadd.f32 0.0, %v1839
      %v1841 = vpop.f32.mrb[0].mxu0
      %v1842 = vpop.f32.mrb[0].mxu0
      %v1843 = vadd.f32 0.0, %v1842
      %v1844 = vpop.f32.mrb[0].mxu0
      %1845 = vmatprep.mubr.bf16.mxu0 0
      %1846 = vmatmul.mubr.bf16.gmra.mrb[0].mxu0 %v1707
      %v1847 = vpop.f32.mrb[0].mxu0
      %v1848 = vadd.f32 0.0, %v1847
      %v1849 = vpop.f32.mrb[0].mxu0
      %v1850 = vpop.f32.mrb[0].mxu0
      %v1851 = vadd.f32 0.0, %v1850
      %v1852 = vpop.f32.mrb[0].mxu0
      %1853 = vmatprep.mubr.bf16.mxu0 0
      %1854 = vmatmul.mubr.bf16.gmra.mrb[0].mxu0 %v1709
      %v1855 = vpop.f32.mrb[0].mxu0
      %v1856 = vadd.f32 0.0, %v1855
      %v1857 = vpop.f32.mrb[0].mxu0
      %v1858 = vpop.f32.mrb[0].mxu0
      %v1859 = vadd.f32 0.0, %v1858
      %v1860 = vpop.f32.mrb[0].mxu0
      %1861 = vmatprep.mubr.bf16.mxu0 0
      %1862 = vmatmul.mubr.bf16.gmra.mrb[0].mxu0 %v1711
      %v1863 = vpop.f32.mrb[0].mxu0
      %v1864 = vadd.f32 0.0, %v1863
      %v1865 = vpop.f32.mrb[0].mxu0
      %v1866 = vpop.f32.mrb[0].mxu0
      %v1867 = vadd.f32 0.0, %v1866
      %v1868 = vpop.f32.mrb[0].mxu0
      %1869 = vmatprep.mubr.bf16.mxu0 0
      %1870 = vmatmul.mubr.bf16.gmra.mrb[0].mxu0 %v1713
      %v1871 = vpop.f32.mrb[0].mxu0
      %v1872 = vadd.f32 0.0, %v1871
      %v1873 = vpop.f32.mrb[0].mxu0
      %v1874 = vpop.f32.mrb[0].mxu0
      %v1875 = vadd.f32 0.0, %v1874
      %v1876 = vpop.f32.mrb[0].mxu0
      %1877 = vmatprep.mubr.bf16.mxu0 0
      %1878 = vmatmul.mubr.bf16.gmra.mrb[0].mxu0 %v1715
      %v1879 = vpop.f32.mrb[0].mxu0
      %v1880 = vadd.f32 0.0, %v1879
      %v1881 = vpop.f32.mrb[0].mxu0
      %v1882 = vpop.f32.mrb[0].mxu0
      %v1883 = vadd.f32 0.0, %v1882
      %v1884 = vpop.f32.mrb[0].mxu0
      %1885 = vmatprep.mubr.bf16.mxu0 0
      %1886 = vmatmul.mubr.bf16.gmra.mrb[0].mxu0 %v1717
      %v1887 = vpop.f32.mrb[0].mxu0
      %v1888 = vadd.f32 0.0, %v1887
      %v1889 = vpop.f32.mrb[0].mxu0
      %v1890 = vpop.f32.mrb[0].mxu0
      %v1891 = vadd.f32 0.0, %v1890
      %v1892 = vpop.f32.mrb[0].mxu0
      %1893 = vmatprep.mubr.bf16.mxu0 0
      %1894 = vmatmul.mubr.bf16.gmra.mrb[0].mxu0 %v1719
      %v1895 = vpop.f32.mrb[0].mxu0
      %v1896 = vadd.f32 0.0, %v1895
      %v1897 = vpop.f32.mrb[0].mxu0
      %v1898 = vpop.f32.mrb[0].mxu0
      %v1899 = vadd.f32 0.0, %v1898
      %v1900 = vpop.f32.mrb[0].mxu0
      %1901 = vdwg.mxu0
      %v1902 = vld [vmem:[%s2] sm:$0x1]
      %v1903 = vld [vmem:[%s3] sm:$0x1]
      %1905 = vset.pattern.permute.xlu0 0
      %1906 = vperm.xlu0 %1905, %v442
      %v1907 = vpop.permute.xlu0 %1906
      %1910 = vset.pattern.permute.xlu0 0
      %1911 = vperm.xlu0 %1910, %v443
      %v1912 = vpop.permute.xlu0 %1911
      %1915 = vset.pattern.permute.xlu0 0
      %1916 = vperm.xlu0 %1915, %v444
      %v1917 = vpop.permute.xlu0 %1916
      %1920 = vset.pattern.permute.xlu0 0
      %1921 = vperm.xlu0 %1920, %v445
      %v1922 = vpop.permute.xlu0 %1921
      %1925 = vset.pattern.permute.xlu0 0
      %1926 = vperm.xlu0 %1925, %v446
      %v1927 = vpop.permute.xlu0 %1926
      %1930 = vset.pattern.permute.xlu0 0
      %1931 = vperm.xlu0 %1930, %v447
      %v1932 = vpop.permute.xlu0 %1931
      %1935 = vset.pattern.permute.xlu0 0
      %1936 = vperm.xlu0 %1935, %v448
      %v1937 = vpop.permute.xlu0 %1936
      %1940 = vset.pattern.permute.xlu0 0
      %1941 = vperm.xlu0 %1940, %v449
      %v1942 = vpop.permute.xlu0 %1941
      %1945 = vset.pattern.permute.xlu0 0
      %1946 = vperm.xlu0 %1945, %v450
      %v1947 = vpop.permute.xlu0 %1946
      %1950 = vset.pattern.permute.xlu0 0
      %1951 = vperm.xlu0 %1950, %v451
      %v1952 = vpop.permute.xlu0 %1951
      %1955 = vset.pattern.permute.xlu0 0
      %1956 = vperm.xlu0 %1955, %v452
      %v1957 = vpop.permute.xlu0 %1956
      %1960 = vset.pattern.permute.xlu0 0
      %1961 = vperm.xlu0 %1960, %v453
      %v1962 = vpop.permute.xlu0 %1961
      %1965 = vset.pattern.permute.xlu0 0
      %1966 = vperm.xlu0 %1965, %v454
      %v1967 = vpop.permute.xlu0 %1966
      %1970 = vset.pattern.permute.xlu0 0
      %1971 = vperm.xlu0 %1970, %v455
      %v1972 = vpop.permute.xlu0 %1971
      %1975 = vset.pattern.permute.xlu0 0
      %1976 = vperm.xlu0 %1975, %v456
      %v1977 = vpop.permute.xlu0 %1976
      %1980 = vset.pattern.permute.xlu0 0
      %1981 = vperm.xlu0 %1980, %v457
      %v1982 = vpop.permute.xlu0 %1981
      %1985 = vset.pattern.permute.xlu0 0
      %1986 = vperm.xlu0 %1985, %v458
      %v1987 = vpop.permute.xlu0 %1986
      %1990 = vset.pattern.permute.xlu0 0
      %1991 = vperm.xlu0 %1990, %v459
      %v1992 = vpop.permute.xlu0 %1991
      %1995 = vset.pattern.permute.xlu0 0
      %1996 = vperm.xlu0 %1995, %v460
      %v1997 = vpop.permute.xlu0 %1996
      %2000 = vset.pattern.permute.xlu0 0
      %2001 = vperm.xlu0 %2000, %v461
      %v2002 = vpop.permute.xlu0 %2001
      %2005 = vset.pattern.permute.xlu0 0
      %2006 = vperm.xlu0 %2005, %v462
      %v2007 = vpop.permute.xlu0 %2006
      %2010 = vset.pattern.permute.xlu0 0
      %2011 = vperm.xlu0 %2010, %v463
      %v2012 = vpop.permute.xlu0 %2011
      %2015 = vset.pattern.permute.xlu0 0
      %2016 = vperm.xlu0 %2015, %v464
      %v2017 = vpop.permute.xlu0 %2016
      %2020 = vset.pattern.permute.xlu0 0
      %2021 = vperm.xlu0 %2020, %v465
      %v2022 = vpop.permute.xlu0 %2021
      %2025 = vset.pattern.permute.xlu0 0
      %2026 = vperm.xlu0 %2025, %v466
      %v2027 = vpop.permute.xlu0 %2026
      %2030 = vset.pattern.permute.xlu0 0
      %2031 = vperm.xlu0 %2030, %v467
      %v2032 = vpop.permute.xlu0 %2031
      %2035 = vset.pattern.permute.xlu0 0
      %2036 = vperm.xlu0 %2035, %v468
      %v2037 = vpop.permute.xlu0 %2036
      %2040 = vset.pattern.permute.xlu0 0
      %2041 = vperm.xlu0 %2040, %v469
      %v2042 = vpop.permute.xlu0 %2041
      %2045 = vset.pattern.permute.xlu0 0
      %2046 = vperm.xlu0 %2045, %v470
      %v2047 = vpop.permute.xlu0 %2046
      %2050 = vset.pattern.permute.xlu0 0
      %2051 = vperm.xlu0 %2050, %v471
      %v2052 = vpop.permute.xlu0 %2051
      %2055 = vset.pattern.permute.xlu0 0
      %2056 = vperm.xlu0 %2055, %v472
      %v2057 = vpop.permute.xlu0 %2056
      %2060 = vset.pattern.permute.xlu0 0
      %2061 = vperm.xlu0 %2060, %v473
      %v2062 = vpop.permute.xlu0 %2061
      %2065 = vset.pattern.permute.xlu0 0
      %2066 = vperm.xlu0 %2065, %v474
      %v2067 = vpop.permute.xlu0 %2066
      %2070 = vset.pattern.permute.xlu0 0
      %2071 = vperm.xlu0 %2070, %v475
      %v2072 = vpop.permute.xlu0 %2071
      %2075 = vset.pattern.permute.xlu0 0
      %2076 = vperm.xlu0 %2075, %v476
      %v2077 = vpop.permute.xlu0 %2076
      %2080 = vset.pattern.permute.xlu0 0
      %2081 = vperm.xlu0 %2080, %v477
      %v2082 = vpop.permute.xlu0 %2081
      %v2084 = vmul.f32 %v1760, %v1907
      %v2085 = vmul.f32 %v1763, %v1912
      %v2086 = vmul.f32 %v1768, %v1917
      %v2087 = vmul.f32 %v1771, %v1922
      %v2088 = vmul.f32 %v1776, %v1927
      %v2089 = vmul.f32 %v1779, %v1932
      %v2090 = vmul.f32 %v1784, %v1937
      %v2091 = vmul.f32 %v1787, %v1942
      %v2092 = vmul.f32 %v1792, %v1947
      %v2093 = vmul.f32 %v1795, %v1952
      %v2094 = vmul.f32 %v1800, %v1957
      %v2095 = vmul.f32 %v1803, %v1962
      %v2096 = vmul.f32 %v1808, %v1967
      %v2097 = vmul.f32 %v1811, %v1972
      %v2098 = vmul.f32 %v1816, %v1977
      %v2099 = vmul.f32 %v1819, %v1982
      %v2100 = vmul.f32 %v1824, %v1987
      %v2101 = vmul.f32 %v1827, %v1992
      %v2102 = vmul.f32 %v1832, %v1997
      %v2103 = vmul.f32 %v1835, %v2002
      %v2104 = vmul.f32 %v1840, %v2007
      %v2105 = vmul.f32 %v1843, %v2012
      %v2106 = vmul.f32 %v1848, %v2017
      %v2107 = vmul.f32 %v1851, %v2022
      %v2108 = vmul.f32 %v1856, %v2027
      %v2109 = vmul.f32 %v1859, %v2032
      %v2110 = vmul.f32 %v1864, %v2037
      %v2111 = vmul.f32 %v1867, %v2042
      %v2112 = vmul.f32 %v1872, %v2047
      %v2113 = vmul.f32 %v1875, %v2052
      %v2114 = vmul.f32 %v1880, %v2057
      %v2115 = vmul.f32 %v1883, %v2062
      %v2116 = vmul.f32 %v1888, %v2067
      %v2117 = vmul.f32 %v1891, %v2072
      %v2118 = vmul.f32 %v1896, %v2077
      %v2119 = vmul.f32 %v1899, %v2082
      %v2120 = vsel %vm1627, %v2084, 0.0
      %v2121 = vsel %vm1627, %v2085, 0.0
      %v2122 = vadd.f32 %v2120, %v2121
      %v2123 = vsel %vm1627, %v2086, 0.0
      %v2124 = vadd.f32 %v2122, %v2123
      %v2125 = vsel %vm1627, %v2087, 0.0
      %v2126 = vadd.f32 %v2124, %v2125
      %v2127 = vsel %vm1627, %v2088, 0.0
      %v2128 = vadd.f32 %v2126, %v2127
      %v2129 = vsel %vm1627, %v2089, 0.0
      %v2130 = vadd.f32 %v2128, %v2129
      %v2131 = vsel %vm1627, %v2090, 0.0
      %v2132 = vadd.f32 %v2130, %v2131
      %v2133 = vsel %vm1627, %v2091, 0.0
      %v2134 = vadd.f32 %v2132, %v2133
      %v2135 = vsel %vm1627, %v2092, 0.0
      %v2136 = vadd.f32 %v2134, %v2135
      %v2137 = vsel %vm1627, %v2093, 0.0
      %v2138 = vadd.f32 %v2136, %v2137
      %v2139 = vsel %vm1627, %v2094, 0.0
      %v2140 = vadd.f32 %v2138, %v2139
      %v2141 = vsel %vm1627, %v2095, 0.0
      %v2142 = vadd.f32 %v2140, %v2141
      %v2143 = vsel %vm1627, %v2096, 0.0
      %v2144 = vadd.f32 %v2142, %v2143
      %v2145 = vsel %vm1627, %v2097, 0.0
      %v2146 = vadd.f32 %v2144, %v2145
      %v2147 = vsel %vm1627, %v2098, 0.0
      %v2148 = vadd.f32 %v2146, %v2147
      %v2149 = vsel %vm1627, %v2099, 0.0
      %v2150 = vadd.f32 %v2148, %v2149
      %v2151 = vsel %vm1627, %v2100, 0.0
      %v2152 = vadd.f32 %v2150, %v2151
      %v2153 = vsel %vm1627, %v2101, 0.0
      %v2154 = vadd.f32 %v2152, %v2153
      %v2155 = vsel %vm1627, %v2102, 0.0
      %v2156 = vadd.f32 %v2154, %v2155
      %v2157 = vsel %vm1627, %v2103, 0.0
      %v2158 = vadd.f32 %v2156, %v2157
      %v2159 = vsel %vm1627, %v2104, 0.0
      %v2160 = vadd.f32 %v2158, %v2159
      %v2161 = vsel %vm1627, %v2105, 0.0
      %v2162 = vadd.f32 %v2160, %v2161
      %v2163 = vsel %vm1627, %v2106, 0.0
      %v2164 = vadd.f32 %v2162, %v2163
      %v2165 = vsel %vm1627, %v2107, 0.0
      %v2166 = vadd.f32 %v2164, %v2165
      %v2167 = vsel %vm1627, %v2108, 0.0
      %v2168 = vadd.f32 %v2166, %v2167
      %v2169 = vsel %vm1627, %v2109, 0.0
      %v2170 = vadd.f32 %v2168, %v2169
      %v2171 = vsel %vm1627, %v2110, 0.0
      %v2172 = vadd.f32 %v2170, %v2171
      %v2173 = vsel %vm1627, %v2111, 0.0
      %v2174 = vadd.f32 %v2172, %v2173
      %v2175 = vsel %vm1627, %v2112, 0.0
      %v2176 = vadd.f32 %v2174, %v2175
      %v2177 = vsel %vm1627, %v2113, 0.0
      %v2178 = vadd.f32 %v2176, %v2177
      %v2179 = vsel %vm1627, %v2114, 0.0
      %v2180 = vadd.f32 %v2178, %v2179
      %v2181 = vsel %vm1627, %v2115, 0.0
      %v2182 = vadd.f32 %v2180, %v2181
      %v2183 = vsel %vm1627, %v2116, 0.0
      %v2184 = vadd.f32 %v2182, %v2183
      %v2185 = vsel %vm1627, %v2117, 0.0
      %v2186 = vadd.f32 %v2184, %v2185
      %v2187 = vsel %vm1627, %v2118, 0.0
      %v2188 = vadd.f32 %v2186, %v2187
      %v2189 = vsel %vm1627, %v2119, 0.0
      %v2190 = vadd.f32 %v2188, %v2189
      %v2191 = vrot.slane %v2190, 4
      %v2192 = vadd.f32 %v2190, %v2191
      %v2193 = vrot.slane %v2192, 2
      %v2194 = vadd.f32 %v2192, %v2193
      %v2195 = vrot.slane %v2194, 1
      %v2196 = vadd.f32 %v2194, %v2195
      %v2197 = vmul.f32 %v2084, %v1760
      %v2198 = vmul.f32 %v2085, %v1763
      %v2199 = vmul.f32 %v2086, %v1768
      %v2200 = vmul.f32 %v2087, %v1771
      %v2201 = vmul.f32 %v2088, %v1776
      %v2202 = vmul.f32 %v2089, %v1779
      %v2203 = vmul.f32 %v2090, %v1784
      %v2204 = vmul.f32 %v2091, %v1787
      %v2205 = vmul.f32 %v2092, %v1792
      %v2206 = vmul.f32 %v2093, %v1795
      %v2207 = vmul.f32 %v2094, %v1800
      %v2208 = vmul.f32 %v2095, %v1803
      %v2209 = vmul.f32 %v2096, %v1808
      %v2210 = vmul.f32 %v2097, %v1811
      %v2211 = vmul.f32 %v2098, %v1816
      %v2212 = vmul.f32 %v2099, %v1819
      %v2213 = vmul.f32 %v2100, %v1824
      %v2214 = vmul.f32 %v2101, %v1827
      %v2215 = vmul.f32 %v2102, %v1832
      %v2216 = vmul.f32 %v2103, %v1835
      %v2217 = vmul.f32 %v2104, %v1840
      %v2218 = vmul.f32 %v2105, %v1843
      %v2219 = vmul.f32 %v2106, %v1848
      %v2220 = vmul.f32 %v2107, %v1851
      %v2221 = vmul.f32 %v2108, %v1856
      %v2222 = vmul.f32 %v2109, %v1859
      %v2223 = vmul.f32 %v2110, %v1864
      %v2224 = vmul.f32 %v2111, %v1867
      %v2225 = vmul.f32 %v2112, %v1872
      %v2226 = vmul.f32 %v2113, %v1875
      %v2227 = vmul.f32 %v2114, %v1880
      %v2228 = vmul.f32 %v2115, %v1883
      %v2229 = vmul.f32 %v2116, %v1888
      %v2230 = vmul.f32 %v2117, %v1891
      %v2231 = vmul.f32 %v2118, %v1896
      %v2232 = vmul.f32 %v2119, %v1899
      %v2233 = vsel %vm1627, %v2197, 0.0
      %v2234 = vsel %vm1627, %v2198, 0.0
      %v2235 = vadd.f32 %v2233, %v2234
      %v2236 = vsel %vm1627, %v2199, 0.0
      %v2237 = vadd.f32 %v2235, %v2236
      %v2238 = vsel %vm1627, %v2200, 0.0
      %v2239 = vadd.f32 %v2237, %v2238
      %v2240 = vsel %vm1627, %v2201, 0.0
      %v2241 = vadd.f32 %v2239, %v2240
      %v2242 = vsel %vm1627, %v2202, 0.0
      %v2243 = vadd.f32 %v2241, %v2242
      %v2244 = vsel %vm1627, %v2203, 0.0
      %v2245 = vadd.f32 %v2243, %v2244
      %v2246 = vsel %vm1627, %v2204, 0.0
      %v2247 = vadd.f32 %v2245, %v2246
      %v2248 = vsel %vm1627, %v2205, 0.0
      %v2249 = vadd.f32 %v2247, %v2248
      %v2250 = vsel %vm1627, %v2206, 0.0
      %v2251 = vadd.f32 %v2249, %v2250
      %v2252 = vsel %vm1627, %v2207, 0.0
      %v2253 = vadd.f32 %v2251, %v2252
      %v2254 = vsel %vm1627, %v2208, 0.0
      %v2255 = vadd.f32 %v2253, %v2254
      %v2256 = vsel %vm1627, %v2209, 0.0
      %v2257 = vadd.f32 %v2255, %v2256
      %v2258 = vsel %vm1627, %v2210, 0.0
      %v2259 = vadd.f32 %v2257, %v2258
      %v2260 = vsel %vm1627, %v2211, 0.0
      %v2261 = vadd.f32 %v2259, %v2260
      %v2262 = vsel %vm1627, %v2212, 0.0
      %v2263 = vadd.f32 %v2261, %v2262
      %v2264 = vsel %vm1627, %v2213, 0.0
      %v2265 = vadd.f32 %v2263, %v2264
      %v2266 = vsel %vm1627, %v2214, 0.0
      %v2267 = vadd.f32 %v2265, %v2266
      %v2268 = vsel %vm1627, %v2215, 0.0
      %v2269 = vadd.f32 %v2267, %v2268
      %v2270 = vsel %vm1627, %v2216, 0.0
      %v2271 = vadd.f32 %v2269, %v2270
      %v2272 = vsel %vm1627, %v2217, 0.0
      %v2273 = vadd.f32 %v2271, %v2272
      %v2274 = vsel %vm1627, %v2218, 0.0
      %v2275 = vadd.f32 %v2273, %v2274
      %v2276 = vsel %vm1627, %v2219, 0.0
      %v2277 = vadd.f32 %v2275, %v2276
      %v2278 = vsel %vm1627, %v2220, 0.0
      %v2279 = vadd.f32 %v2277, %v2278
      %v2280 = vsel %vm1627, %v2221, 0.0
      %v2281 = vadd.f32 %v2279, %v2280
      %v2282 = vsel %vm1627, %v2222, 0.0
      %v2283 = vadd.f32 %v2281, %v2282
      %v2284 = vsel %vm1627, %v2223, 0.0
      %v2285 = vadd.f32 %v2283, %v2284
      %v2286 = vsel %vm1627, %v2224, 0.0
      %v2287 = vadd.f32 %v2285, %v2286
      %v2288 = vsel %vm1627, %v2225, 0.0
      %v2289 = vadd.f32 %v2287, %v2288
      %v2290 = vsel %vm1627, %v2226, 0.0
      %v2291 = vadd.f32 %v2289, %v2290
      %v2292 = vsel %vm1627, %v2227, 0.0
      %v2293 = vadd.f32 %v2291, %v2292
      %v2294 = vsel %vm1627, %v2228, 0.0
      %v2295 = vadd.f32 %v2293, %v2294
      %v2296 = vsel %vm1627, %v2229, 0.0
      %v2297 = vadd.f32 %v2295, %v2296
      %v2298 = vsel %vm1627, %v2230, 0.0
      %v2299 = vadd.f32 %v2297, %v2298
      %v2300 = vsel %vm1627, %v2231, 0.0
      %v2301 = vadd.f32 %v2299, %v2300
      %v2302 = vsel %vm1627, %v2232, 0.0
      %v2303 = vadd.f32 %v2301, %v2302
      %v2304 = vrot.slane %v2303, 4
      %v2305 = vadd.f32 %v2303, %v2304
      %v2306 = vrot.slane %v2305, 2
      %v2307 = vadd.f32 %v2305, %v2306
      %v2308 = vrot.slane %v2307, 1
      %v2309 = vadd.f32 %v2307, %v2308
      %vm2310 = vcmask 1040384
      %v2311 = vsel %vm2310, %v2196, %v2309
      %v2312 = vld [vmem:[%s7] sm:$0xff]
      %v2313 = vld [vmem:[%s7 + $0x8] sm:$0xff]
      %v2314 = vld [vmem:[%s7 + $0x10] sm:$0xff]
      %v2315 = vld [vmem:[%s7 + $0x18] sm:$0xff]
      %v2317 = vsel %vm1627, %v2311, 0
      %2319 = vmatprep.subr.mxu0 0.0
      %2320 = vmatpush1.msra.mxu0 %v2312
      %2321 = vmatprep.subr.mxu0 0.0
      %2322 = vmatpush1.msra.mxu0 %v2313
      %2323 = vmatprep.subr.mxu0 0.0
      %2324 = vmatpush1.msra.mxu0 %v2314
      %2325 = vmatprep.subr.mxu0 0.0
      %2326 = vmatpush1.msra.mxu0 %v2315
      %2327 = vmatprep.subr.mxu0 0.0
      %2328 = vmatpush1.msra.mxu0 0.0
      %2329 = vmatprep.subr.mxu0 0.0
      %2330 = vmatpush1.msra.mxu0 0.0
      %2331 = vmatprep.subr.mxu0 0.0
      %2332 = vmatpush1.msra.mxu0 0.0
      %2333 = vmatprep.subr.mxu0 0.0
      %2334 = vmatpush1.msra.mxu0 0.0
      %2335 = vmatprep.subr.mxu0 0.0
      %2336 = vmatpush1.msra.mxu0 0.0
      %2337 = vmatprep.subr.mxu0 0.0
      %2338 = vmatpush1.msra.mxu0 0.0
      %2339 = vmatprep.subr.mxu0 0.0
      %2340 = vmatpush1.msra.mxu0 0.0
      %2341 = vmatprep.subr.mxu0 0.0
      %2342 = vmatpush1.msra.mxu0 0.0
      %2343 = vmatprep.subr.mxu0 0.0
      %2344 = vmatpush1.msra.mxu0 0.0
      %2345 = vmatprep.subr.mxu0 0.0
      %2346 = vmatpush1.msra.mxu0 0.0
      %2347 = vmatprep.subr.mxu0 0.0
      %2348 = vmatpush1.msra.mxu0 0.0
      %2349 = vmatprep.subr.mxu0 0.0
      %2350 = vmatpush1.msra.mxu0 0.0
      %2351 = vmatprep.subr.mxu0 0.0
      %2352 = vmatpush1.msra.mxu0 0.0
      %2353 = vmatprep.subr.mxu0 0.0
      %2354 = vmatpush1.msra.mxu0 0.0
      %2355 = vmatprep.subr.mxu0 0.0
      %2356 = vmatpush1.msra.mxu0 0.0
      %2357 = vmatprep.subr.mxu0 0.0
      %2358 = vmatpush1.msra.mxu0 0.0
      %2359 = vmatprep.subr.mxu0 0.0
      %2360 = vmatpush1.msra.mxu0 0.0
      %2361 = vmatprep.subr.mxu0 0.0
      %2362 = vmatpush1.msra.mxu0 0.0
      %2363 = vmatprep.subr.mxu0 0.0
      %2364 = vmatpush1.msra.mxu0 0.0
      %2365 = vmatprep.subr.mxu0 0.0
      %2366 = vmatpush1.msra.mxu0 0.0
      %2367 = vmatprep.subr.mxu0 0.0
      %2368 = vmatpush1.msra.mxu0 0.0
      %2369 = vmatprep.subr.mxu0 0.0
      %2370 = vmatpush1.msra.mxu0 0.0
      %2371 = vmatprep.subr.mxu0 0.0
      %2372 = vmatpush1.msra.mxu0 0.0
      %2373 = vmatprep.subr.mxu0 0.0
      %2374 = vmatpush1.msra.mxu0 0.0
      %2375 = vmatprep.subr.mxu0 0.0
      %2376 = vmatpush1.msra.mxu0 0.0
      %2377 = vmatprep.subr.mxu0 0.0
      %2378 = vmatpush1.msra.mxu0 0.0
      %2379 = vmatprep.subr.mxu0 0.0
      %2380 = vmatpush1.msra.mxu0 0.0
      %2381 = vmatprep.subr.mxu0 0.0
      %2382 = vmatpush1.msra.mxu0 0.0
      %2383 = vmatprep.mubr.f32.mxu0 0.0
      %2384 = vmatmul.mubr.f32.gmra.mrb[0].mxu0 %v2317
      %v2385 = vpop.f32.mrb[0].mxu0
      %v2386 = vadd.f32 0.0, %v2385
      %v2387 = vpop.f32.mrb[0].mxu0
      %2388 = vdwg.mxu0
      %v2389 = vmul.f32 %v2386, %v2386
      %v2391 = vrot.slane %v2389, 7
      %v2393 = vsub.f32 %v2386, %v2391
      %v2394 = vmax.f32 %v2393, 0.0
      %v2395 = vadd.f32 %v2394, 1e-05
      %v2396 = vrsqrt.pop %v2395
      %v2399 = vunpack.c.l.s4 1966171168
      %v2400 = vunpack.c.0.s8 %v2399
      %v2401 = vlaneseq
      %v2402 = vshrl.u32 %v2401, 7
      %v2403 = vsub.s32 %v2400, %v2402
      %v2404 = vrot.slane %v2396, %v2403
      %v2405 = vcombine.high %v2404, %v2404
      %v2407 = vunpack.c.l.s4 1966171168
      %v2408 = vunpack.c.0.s8 %v2407
      %v2409 = vlaneseq
      %v2410 = vshrl.u32 %v2409, 7
      %v2411 = vsub.s32 %v2408, %v2410
      %v2412 = vrot.slane %v2405, %v2411
      %v2414 = vmul.f32 %v1902, %v2412
      %v2415 = vmul.f32 %v2386, %v2414
      %v2416 = vsub.f32 %v1903, %v2415
      %v2418 = vlaneseq
      %v2419 = vshrl.u32 %v2418, 7
      %v2420 = vsub.s32 0, %v2419
      %v2421 = vrot.slane %v2414, %v2420
      %v2423 = vmul.f32 %v1760, %v2421
      %v2424 = vmul.f32 %v1763, %v2421
      %v2425 = vmul.f32 %v1768, %v2421
      %v2426 = vmul.f32 %v1771, %v2421
      %v2427 = vmul.f32 %v1776, %v2421
      %v2428 = vmul.f32 %v1779, %v2421
      %v2429 = vmul.f32 %v1784, %v2421
      %v2430 = vmul.f32 %v1787, %v2421
      %v2431 = vmul.f32 %v1792, %v2421
      %v2432 = vmul.f32 %v1795, %v2421
      %v2433 = vmul.f32 %v1800, %v2421
      %v2434 = vmul.f32 %v1803, %v2421
      %v2435 = vmul.f32 %v1808, %v2421
      %v2436 = vmul.f32 %v1811, %v2421
      %v2437 = vmul.f32 %v1816, %v2421
      %v2438 = vmul.f32 %v1819, %v2421
      %v2439 = vmul.f32 %v1824, %v2421
      %v2440 = vmul.f32 %v1827, %v2421
      %v2441 = vmul.f32 %v1832, %v2421
      %v2442 = vmul.f32 %v1835, %v2421
      %v2443 = vmul.f32 %v1840, %v2421
      %v2444 = vmul.f32 %v1843, %v2421
      %v2445 = vmul.f32 %v1848, %v2421
      %v2446 = vmul.f32 %v1851, %v2421
      %v2447 = vmul.f32 %v1856, %v2421
      %v2448 = vmul.f32 %v1859, %v2421
      %v2449 = vmul.f32 %v1864, %v2421
      %v2450 = vmul.f32 %v1867, %v2421
      %v2451 = vmul.f32 %v1872, %v2421
      %v2452 = vmul.f32 %v1875, %v2421
      %v2453 = vmul.f32 %v1880, %v2421
      %v2454 = vmul.f32 %v1883, %v2421
      %v2455 = vmul.f32 %v1888, %v2421
      %v2456 = vmul.f32 %v1891, %v2421
      %v2457 = vmul.f32 %v1896, %v2421
      %v2458 = vmul.f32 %v1899, %v2421
      %v2460 = vlaneseq
      %v2461 = vshrl.u32 %v2460, 7
      %v2462 = vsub.s32 0, %v2461
      %v2463 = vrot.slane %v2416, %v2462
      %v2465 = vadd.f32 %v2423, %v2463
      %v2466 = vadd.f32 %v2424, %v2463
      %v2467 = vadd.f32 %v2425, %v2463
      %v2468 = vadd.f32 %v2426, %v2463
      %v2469 = vadd.f32 %v2427, %v2463
      %v2470 = vadd.f32 %v2428, %v2463
      %v2471 = vadd.f32 %v2429, %v2463
      %v2472 = vadd.f32 %v2430, %v2463
      %v2473 = vadd.f32 %v2431, %v2463
      %v2474 = vadd.f32 %v2432, %v2463
      %v2475 = vadd.f32 %v2433, %v2463
      %v2476 = vadd.f32 %v2434, %v2463
      %v2477 = vadd.f32 %v2435, %v2463
      %v2478 = vadd.f32 %v2436, %v2463
      %v2479 = vadd.f32 %v2437, %v2463
      %v2480 = vadd.f32 %v2438, %v2463
      %v2481 = vadd.f32 %v2439, %v2463
      %v2482 = vadd.f32 %v2440, %v2463
      %v2483 = vadd.f32 %v2441, %v2463
      %v2484 = vadd.f32 %v2442, %v2463
      %v2485 = vadd.f32 %v2443, %v2463
      %v2486 = vadd.f32 %v2444, %v2463
      %v2487 = vadd.f32 %v2445, %v2463
      %v2488 = vadd.f32 %v2446, %v2463
      %v2489 = vadd.f32 %v2447, %v2463
      %v2490 = vadd.f32 %v2448, %v2463
      %v2491 = vadd.f32 %v2449, %v2463
      %v2492 = vadd.f32 %v2450, %v2463
      %v2493 = vadd.f32 %v2451, %v2463
      %v2494 = vadd.f32 %v2452, %v2463
      %v2495 = vadd.f32 %v2453, %v2463
      %v2496 = vadd.f32 %v2454, %v2463
      %v2497 = vadd.f32 %v2455, %v2463
      %v2498 = vadd.f32 %v2456, %v2463
      %v2499 = vadd.f32 %v2457, %v2463
      %v2500 = vadd.f32 %v2458, %v2463
      %vm2501 = vcmp.ge.f32.partialorder %v2465, 0.0
      %vm2502 = vcmp.ge.f32.partialorder %v2466, 0.0
      %vm2503 = vcmp.ge.f32.partialorder %v2467, 0.0
      %vm2504 = vcmp.ge.f32.partialorder %v2468, 0.0
      %vm2505 = vcmp.ge.f32.partialorder %v2469, 0.0
      %vm2506 = vcmp.ge.f32.partialorder %v2470, 0.0
      %vm2507 = vcmp.ge.f32.partialorder %v2471, 0.0
      %vm2508 = vcmp.ge.f32.partialorder %v2472, 0.0
      %vm2509 = vcmp.ge.f32.partialorder %v2473, 0.0
      %vm2510 = vcmp.ge.f32.partialorder %v2474, 0.0
      %vm2511 = vcmp.ge.f32.partialorder %v2475, 0.0
      %vm2512 = vcmp.ge.f32.partialorder %v2476, 0.0
      %vm2513 = vcmp.ge.f32.partialorder %v2477, 0.0
      %vm2514 = vcmp.ge.f32.partialorder %v2478, 0.0
      %vm2515 = vcmp.ge.f32.partialorder %v2479, 0.0
      %vm2516 = vcmp.ge.f32.partialorder %v2480, 0.0
      %vm2517 = vcmp.ge.f32.partialorder %v2481, 0.0
      %vm2518 = vcmp.ge.f32.partialorder %v2482, 0.0
      %vm2519 = vcmp.ge.f32.partialorder %v2483, 0.0
      %vm2520 = vcmp.ge.f32.partialorder %v2484, 0.0
      %vm2521 = vcmp.ge.f32.partialorder %v2485, 0.0
      %vm2522 = vcmp.ge.f32.partialorder %v2486, 0.0
      %vm2523 = vcmp.ge.f32.partialorder %v2487, 0.0
      %vm2524 = vcmp.ge.f32.partialorder %v2488, 0.0
      %vm2525 = vcmp.ge.f32.partialorder %v2489, 0.0
      %vm2526 = vcmp.ge.f32.partialorder %v2490, 0.0
      %vm2527 = vcmp.ge.f32.partialorder %v2491, 0.0
      %vm2528 = vcmp.ge.f32.partialorder %v2492, 0.0
      %vm2529 = vcmp.ge.f32.partialorder %v2493, 0.0
      %vm2530 = vcmp.ge.f32.partialorder %v2494, 0.0
      %vm2531 = vcmp.ge.f32.partialorder %v2495, 0.0
      %vm2532 = vcmp.ge.f32.partialorder %v2496, 0.0
      %vm2533 = vcmp.ge.f32.partialorder %v2497, 0.0
      %vm2534 = vcmp.ge.f32.partialorder %v2498, 0.0
      %vm2535 = vcmp.ge.f32.partialorder %v2499, 0.0
      %vm2536 = vcmp.ge.f32.partialorder %v2500, 0.0
      %v2537 = vmul.f32 %v2465, 0.01
      %v2538 = vmul.f32 %v2466, 0.01
      %v2539 = vmul.f32 %v2467, 0.01
      %v2540 = vmul.f32 %v2468, 0.01
      %v2541 = vmul.f32 %v2469, 0.01
      %v2542 = vmul.f32 %v2470, 0.01
      %v2543 = vmul.f32 %v2471, 0.01
      %v2544 = vmul.f32 %v2472, 0.01
      %v2545 = vmul.f32 %v2473, 0.01
      %v2546 = vmul.f32 %v2474, 0.01
      %v2547 = vmul.f32 %v2475, 0.01
      %v2548 = vmul.f32 %v2476, 0.01
      %v2549 = vmul.f32 %v2477, 0.01
      %v2550 = vmul.f32 %v2478, 0.01
      %v2551 = vmul.f32 %v2479, 0.01
      %v2552 = vmul.f32 %v2480, 0.01
      %v2553 = vmul.f32 %v2481, 0.01
      %v2554 = vmul.f32 %v2482, 0.01
      %v2555 = vmul.f32 %v2483, 0.01
      %v2556 = vmul.f32 %v2484, 0.01
      %v2557 = vmul.f32 %v2485, 0.01
      %v2558 = vmul.f32 %v2486, 0.01
      %v2559 = vmul.f32 %v2487, 0.01
      %v2560 = vmul.f32 %v2488, 0.01
      %v2561 = vmul.f32 %v2489, 0.01
      %v2562 = vmul.f32 %v2490, 0.01
      %v2563 = vmul.f32 %v2491, 0.01
      %v2564 = vmul.f32 %v2492, 0.01
      %v2565 = vmul.f32 %v2493, 0.01
      %v2566 = vmul.f32 %v2494, 0.01
      %v2567 = vmul.f32 %v2495, 0.01
      %v2568 = vmul.f32 %v2496, 0.01
      %v2569 = vmul.f32 %v2497, 0.01
      %v2570 = vmul.f32 %v2498, 0.01
      %v2571 = vmul.f32 %v2499, 0.01
      %v2572 = vmul.f32 %v2500, 0.01
      %v2573 = vsel %vm2501, %v2465, %v2537
      %v2574 = vsel %vm2502, %v2466, %v2538
      %v2575 = vsel %vm2503, %v2467, %v2539
      %v2576 = vsel %vm2504, %v2468, %v2540
      %v2577 = vsel %vm2505, %v2469, %v2541
      %v2578 = vsel %vm2506, %v2470, %v2542
      %v2579 = vsel %vm2507, %v2471, %v2543
      %v2580 = vsel %vm2508, %v2472, %v2544
      %v2581 = vsel %vm2509, %v2473, %v2545
      %v2582 = vsel %vm2510, %v2474, %v2546
      %v2583 = vsel %vm2511, %v2475, %v2547
      %v2584 = vsel %vm2512, %v2476, %v2548
      %v2585 = vsel %vm2513, %v2477, %v2549
      %v2586 = vsel %vm2514, %v2478, %v2550
      %v2587 = vsel %vm2515, %v2479, %v2551
      %v2588 = vsel %vm2516, %v2480, %v2552
      %v2589 = vsel %vm2517, %v2481, %v2553
      %v2590 = vsel %vm2518, %v2482, %v2554
      %v2591 = vsel %vm2519, %v2483, %v2555
      %v2592 = vsel %vm2520, %v2484, %v2556
      %v2593 = vsel %vm2521, %v2485, %v2557
      %v2594 = vsel %vm2522, %v2486, %v2558
      %v2595 = vsel %vm2523, %v2487, %v2559
      %v2596 = vsel %vm2524, %v2488, %v2560
      %v2597 = vsel %vm2525, %v2489, %v2561
      %v2598 = vsel %vm2526, %v2490, %v2562
      %v2599 = vsel %vm2527, %v2491, %v2563
      %v2600 = vsel %vm2528, %v2492, %v2564
      %v2601 = vsel %vm2529, %v2493, %v2565
      %v2602 = vsel %vm2530, %v2494, %v2566
      %v2603 = vsel %vm2531, %v2495, %v2567
      %v2604 = vsel %vm2532, %v2496, %v2568
      %v2605 = vsel %vm2533, %v2497, %v2569
      %v2606 = vsel %vm2534, %v2498, %v2570
      %v2607 = vsel %vm2535, %v2499, %v2571
      %v2608 = vsel %vm2536, %v2500, %v2572
      %v2645 = vrot.slane %v2573, 7
      %v2646 = vrot.slane %v2574, 7
      %v2647 = vsel %vm2310, %v2645, %v2646
      %v2648 = vrot.slane %v2575, 7
      %v2649 = vsel %vm2310, %v2646, %v2648
      %v2650 = vrot.slane %v2576, 7
      %v2651 = vsel %vm2310, %v2648, %v2650
      %v2652 = vrot.slane %v2577, 7
      %v2653 = vsel %vm2310, %v2650, %v2652
      %v2654 = vrot.slane %v2578, 7
      %v2655 = vsel %vm2310, %v2652, %v2654
      %v2656 = vrot.slane %v2579, 7
      %v2657 = vsel %vm2310, %v2654, %v2656
      %v2658 = vrot.slane %v2580, 7
      %v2659 = vsel %vm2310, %v2656, %v2658
      %v2660 = vrot.slane %v2581, 7
      %v2661 = vsel %vm2310, %v2658, %v2660
      %v2662 = vrot.slane %v2582, 7
      %v2663 = vsel %vm2310, %v2660, %v2662
      %v2664 = vrot.slane %v2583, 7
      %v2665 = vsel %vm2310, %v2662, %v2664
      %v2666 = vrot.slane %v2584, 7
      %v2667 = vsel %vm2310, %v2664, %v2666
      %v2668 = vrot.slane %v2585, 7
      %v2669 = vsel %vm2310, %v2666, %v2668
      %v2670 = vrot.slane %v2586, 7
      %v2671 = vsel %vm2310, %v2668, %v2670
      %v2672 = vrot.slane %v2587, 7
      %v2673 = vsel %vm2310, %v2670, %v2672
      %v2674 = vrot.slane %v2588, 7
      %v2675 = vsel %vm2310, %v2672, %v2674
      %v2676 = vrot.slane %v2589, 7
      %v2677 = vsel %vm2310, %v2674, %v2676
      %v2678 = vrot.slane %v2590, 7
      %v2679 = vsel %vm2310, %v2676, %v2678
      %v2680 = vrot.slane %v2591, 7
      %v2681 = vsel %vm2310, %v2678, %v2680
      %v2682 = vrot.slane %v2592, 7
      %v2683 = vsel %vm2310, %v2680, %v2682
      %v2684 = vrot.slane %v2593, 7
      %v2685 = vsel %vm2310, %v2682, %v2684
      %v2686 = vrot.slane %v2594, 7
      %v2687 = vsel %vm2310, %v2684, %v2686
      %v2688 = vrot.slane %v2595, 7
      %v2689 = vsel %vm2310, %v2686, %v2688
      %v2690 = vrot.slane %v2596, 7
      %v2691 = vsel %vm2310, %v2688, %v2690
      %v2692 = vrot.slane %v2597, 7
      %v2693 = vsel %vm2310, %v2690, %v2692
      %v2694 = vrot.slane %v2598, 7
      %v2695 = vsel %vm2310, %v2692, %v2694
      %v2696 = vrot.slane %v2599, 7
      %v2697 = vsel %vm2310, %v2694, %v2696
      %v2698 = vrot.slane %v2600, 7
      %v2699 = vsel %vm2310, %v2696, %v2698
      %v2700 = vrot.slane %v2601, 7
      %v2701 = vsel %vm2310, %v2698, %v2700
      %v2702 = vrot.slane %v2602, 7
      %v2703 = vsel %vm2310, %v2700, %v2702
      %v2704 = vrot.slane %v2603, 7
      %v2705 = vsel %vm2310, %v2702, %v2704
      %v2706 = vrot.slane %v2604, 7
      %v2707 = vsel %vm2310, %v2704, %v2706
      %v2708 = vrot.slane %v2605, 7
      %v2709 = vsel %vm2310, %v2706, %v2708
      %v2710 = vrot.slane %v2606, 7
      %v2711 = vsel %vm2310, %v2708, %v2710
      %v2712 = vrot.slane %v2607, 7
      %v2713 = vsel %vm2310, %v2710, %v2712
      %v2714 = vrot.slane %v2608, 7
      %v2715 = vsel %vm2310, %v2712, %v2714
      %v2752 = vsel %vm2310, %v2573, %v2645
      %vm2753 = vcmask 1046528
      %v2754 = vrot.slane %v2573, 1
      %v2755 = vrot.slane %v2574, 1
      %v2756 = vsel %vm2753, %v2754, %v2755
      %v2757 = vrot.slane %v2575, 1
      %v2758 = vsel %vm2753, %v2755, %v2757
      %v2759 = vrot.slane %v2576, 1
      %v2760 = vsel %vm2753, %v2757, %v2759
      %v2761 = vrot.slane %v2577, 1
      %v2762 = vsel %vm2753, %v2759, %v2761
      %v2763 = vrot.slane %v2578, 1
      %v2764 = vsel %vm2753, %v2761, %v2763
      %v2765 = vrot.slane %v2579, 1
      %v2766 = vsel %vm2753, %v2763, %v2765
      %v2767 = vrot.slane %v2580, 1
      %v2768 = vsel %vm2753, %v2765, %v2767
      %v2769 = vrot.slane %v2581, 1
      %v2770 = vsel %vm2753, %v2767, %v2769
      %v2771 = vrot.slane %v2582, 1
      %v2772 = vsel %vm2753, %v2769, %v2771
      %v2773 = vrot.slane %v2583, 1
      %v2774 = vsel %vm2753, %v2771, %v2773
      %v2775 = vrot.slane %v2584, 1
      %v2776 = vsel %vm2753, %v2773, %v2775
      %v2777 = vrot.slane %v2585, 1
      %v2778 = vsel %vm2753, %v2775, %v2777
      %v2779 = vrot.slane %v2586, 1
      %v2780 = vsel %vm2753, %v2777, %v2779
      %v2781 = vrot.slane %v2587, 1
      %v2782 = vsel %vm2753, %v2779, %v2781
      %v2783 = vrot.slane %v2588, 1
      %v2784 = vsel %vm2753, %v2781, %v2783
      %v2785 = vrot.slane %v2589, 1
      %v2786 = vsel %vm2753, %v2783, %v2785
      %v2787 = vrot.slane %v2590, 1
      %v2788 = vsel %vm2753, %v2785, %v2787
      %v2789 = vrot.slane %v2591, 1
      %v2790 = vsel %vm2753, %v2787, %v2789
      %v2791 = vrot.slane %v2592, 1
      %v2792 = vsel %vm2753, %v2789, %v2791
      %v2793 = vrot.slane %v2593, 1
      %v2794 = vsel %vm2753, %v2791, %v2793
      %v2795 = vrot.slane %v2594, 1
      %v2796 = vsel %vm2753, %v2793, %v2795
      %v2797 = vrot.slane %v2595, 1
      %v2798 = vsel %vm2753, %v2795, %v2797
      %v2799 = vrot.slane %v2596, 1
      %v2800 = vsel %vm2753, %v2797, %v2799
      %v2801 = vrot.slane %v2597, 1
      %v2802 = vsel %vm2753, %v2799, %v2801
      %v2803 = vrot.slane %v2598, 1
      %v2804 = vsel %vm2753, %v2801, %v2803
      %v2805 = vrot.slane %v2599, 1
      %v2806 = vsel %vm2753, %v2803, %v2805
      %v2807 = vrot.slane %v2600, 1
      %v2808 = vsel %vm2753, %v2805, %v2807
      %v2809 = vrot.slane %v2601, 1
      %v2810 = vsel %vm2753, %v2807, %v2809
      %v2811 = vrot.slane %v2602, 1
      %v2812 = vsel %vm2753, %v2809, %v2811
      %v2813 = vrot.slane %v2603, 1
      %v2814 = vsel %vm2753, %v2811, %v2813
      %v2815 = vrot.slane %v2604, 1
      %v2816 = vsel %vm2753, %v2813, %v2815
      %v2817 = vrot.slane %v2605, 1
      %v2818 = vsel %vm2753, %v2815, %v2817
      %v2819 = vrot.slane %v2606, 1
      %v2820 = vsel %vm2753, %v2817, %v2819
      %v2821 = vrot.slane %v2607, 1
      %v2822 = vsel %vm2753, %v2819, %v2821
      %v2823 = vrot.slane %v2608, 1
      %v2824 = vsel %vm2753, %v2821, %v2823
      %v2861 = vsel %vm2753, %v2823, %v2608
      %vm2862 = vcmask 1042432
      %v2863 = vrot.slane %v2573, 5
      %v2864 = vrot.slane %v2574, 5
      %v2865 = vsel %vm2862, %v2863, %v2864
      %v2866 = vrot.slane %v2575, 5
      %v2867 = vsel %vm2862, %v2864, %v2866
      %v2868 = vrot.slane %v2576, 5
      %v2869 = vsel %vm2862, %v2866, %v2868
      %v2870 = vrot.slane %v2577, 5
      %v2871 = vsel %vm2862, %v2868, %v2870
      %v2872 = vrot.slane %v2578, 5
      %v2873 = vsel %vm2862, %v2870, %v2872
      %v2874 = vrot.slane %v2579, 5
      %v2875 = vsel %vm2862, %v2872, %v2874
      %v2876 = vrot.slane %v2580, 5
      %v2877 = vsel %vm2862, %v2874, %v2876
      %v2878 = vrot.slane %v2581, 5
      %v2879 = vsel %vm2862, %v2876, %v2878
      %v2880 = vrot.slane %v2582, 5
      %v2881 = vsel %vm2862, %v2878, %v2880
      %v2882 = vrot.slane %v2583, 5
      %v2883 = vsel %vm2862, %v2880, %v2882
      %v2884 = vrot.slane %v2584, 5
      %v2885 = vsel %vm2862, %v2882, %v2884
      %v2886 = vrot.slane %v2585, 5
      %v2887 = vsel %vm2862, %v2884, %v2886
      %v2888 = vrot.slane %v2586, 5
      %v2889 = vsel %vm2862, %v2886, %v2888
      %v2890 = vrot.slane %v2587, 5
      %v2891 = vsel %vm2862, %v2888, %v2890
      %v2892 = vrot.slane %v2588, 5
      %v2893 = vsel %vm2862, %v2890, %v2892
      %v2894 = vrot.slane %v2589, 5
      %v2895 = vsel %vm2862, %v2892, %v2894
      %v2896 = vrot.slane %v2590, 5
      %v2897 = vsel %vm2862, %v2894, %v2896
      %v2898 = vrot.slane %v2591, 5
      %v2899 = vsel %vm2862, %v2896, %v2898
      %v2900 = vrot.slane %v2592, 5
      %v2901 = vsel %vm2862, %v2898, %v2900
      %v2902 = vrot.slane %v2593, 5
      %v2903 = vsel %vm2862, %v2900, %v2902
      %v2904 = vrot.slane %v2594, 5
      %v2905 = vsel %vm2862, %v2902, %v2904
      %v2906 = vrot.slane %v2595, 5
      %v2907 = vsel %vm2862, %v2904, %v2906
      %v2908 = vrot.slane %v2596, 5
      %v2909 = vsel %vm2862, %v2906, %v2908
      %v2910 = vrot.slane %v2597, 5
      %v2911 = vsel %vm2862, %v2908, %v2910
      %v2912 = vrot.slane %v2598, 5
      %v2913 = vsel %vm2862, %v2910, %v2912
      %v2914 = vrot.slane %v2599, 5
      %v2915 = vsel %vm2862, %v2912, %v2914
      %v2916 = vrot.slane %v2600, 5
      %v2917 = vsel %vm2862, %v2914, %v2916
      %v2918 = vrot.slane %v2601, 5
      %v2919 = vsel %vm2862, %v2916, %v2918
      %v2920 = vrot.slane %v2602, 5
      %v2921 = vsel %vm2862, %v2918, %v2920
      %v2922 = vrot.slane %v2603, 5
      %v2923 = vsel %vm2862, %v2920, %v2922
      %v2924 = vrot.slane %v2604, 5
      %v2925 = vsel %vm2862, %v2922, %v2924
      %v2926 = vrot.slane %v2605, 5
      %v2927 = vsel %vm2862, %v2924, %v2926
      %v2928 = vrot.slane %v2606, 5
      %v2929 = vsel %vm2862, %v2926, %v2928
      %v2930 = vrot.slane %v2607, 5
      %v2931 = vsel %vm2862, %v2928, %v2930
      %v2932 = vrot.slane %v2608, 5
      %v2933 = vsel %vm2862, %v2930, %v2932
      %v2970 = vsel %vm2862, %v2573, %v2863
      %v2971 = vsel %vm514, 1, 0
      %v2972 = vsel %vm515, 1, 0
      %v2973 = vsel %vm516, 1, 0
      %v2974 = vsel %vm517, 1, 0
      %v2975 = vsel %vm518, 1, 0
      %v2976 = vsel %vm519, 1, 0
      %v2977 = vsel %vm520, 1, 0
      %v2978 = vsel %vm521, 1, 0
      %v2979 = vsel %vm522, 1, 0
      %v2980 = vsel %vm523, 1, 0
      %v2981 = vsel %vm524, 1, 0
      %v2982 = vsel %vm525, 1, 0
      %v2983 = vsel %vm526, 1, 0
      %v2984 = vsel %vm527, 1, 0
      %v2985 = vsel %vm528, 1, 0
      %v2986 = vsel %vm529, 1, 0
      %v2987 = vsel %vm530, 1, 0
      %v2988 = vsel %vm531, 1, 0
      %v2989 = vsel %vm532, 1, 0
      %v2990 = vsel %vm533, 1, 0
      %v2991 = vsel %vm534, 1, 0
      %v2992 = vsel %vm535, 1, 0
      %v2993 = vsel %vm536, 1, 0
      %v2994 = vsel %vm537, 1, 0
      %v2995 = vsel %vm538, 1, 0
      %v2996 = vsel %vm539, 1, 0
      %v2997 = vsel %vm540, 1, 0
      %v2998 = vsel %vm541, 1, 0
      %v2999 = vsel %vm542, 1, 0
      %v3000 = vsel %vm543, 1, 0
      %v3001 = vsel %vm544, 1, 0
      %v3002 = vsel %vm545, 1, 0
      %v3003 = vsel %vm546, 1, 0
      %v3004 = vsel %vm547, 1, 0
      %v3005 = vsel %vm548, 1, 0
      %v3006 = vsel %vm549, 1, 0
      %3007 = vset.pattern.permute.xlu0 0
      %3008 = vperm.xlu0 %3007, %v2971
      %v3009 = vpop.permute.xlu0 %3008
      %3010 = vset.pattern.permute.xlu0 0
      %3011 = vperm.xlu0 %3010, %v2972
      %v3012 = vpop.permute.xlu0 %3011
      %3013 = vset.pattern.permute.xlu0 0
      %3014 = vperm.xlu0 %3013, %v2973
      %v3015 = vpop.permute.xlu0 %3014
      %3016 = vset.pattern.permute.xlu0 0
      %3017 = vperm.xlu0 %3016, %v2974
      %v3018 = vpop.permute.xlu0 %3017
      %3019 = vset.pattern.permute.xlu0 0
      %3020 = vperm.xlu0 %3019, %v2975
      %v3021 = vpop.permute.xlu0 %3020
      %3022 = vset.pattern.permute.xlu0 0
      %3023 = vperm.xlu0 %3022, %v2976
      %v3024 = vpop.permute.xlu0 %3023
      %3025 = vset.pattern.permute.xlu0 0
      %3026 = vperm.xlu0 %3025, %v2977
      %v3027 = vpop.permute.xlu0 %3026
      %3028 = vset.pattern.permute.xlu0 0
      %3029 = vperm.xlu0 %3028, %v2978
      %v3030 = vpop.permute.xlu0 %3029
      %3031 = vset.pattern.permute.xlu0 0
      %3032 = vperm.xlu0 %3031, %v2979
      %v3033 = vpop.permute.xlu0 %3032
      %3034 = vset.pattern.permute.xlu0 0
      %3035 = vperm.xlu0 %3034, %v2980
      %v3036 = vpop.permute.xlu0 %3035
      %3037 = vset.pattern.permute.xlu0 0
      %3038 = vperm.xlu0 %3037, %v2981
      %v3039 = vpop.permute.xlu0 %3038
      %3040 = vset.pattern.permute.xlu0 0
      %3041 = vperm.xlu0 %3040, %v2982
      %v3042 = vpop.permute.xlu0 %3041
      %3043 = vset.pattern.permute.xlu0 0
      %3044 = vperm.xlu0 %3043, %v2983
      %v3045 = vpop.permute.xlu0 %3044
      %3046 = vset.pattern.permute.xlu0 0
      %3047 = vperm.xlu0 %3046, %v2984
      %v3048 = vpop.permute.xlu0 %3047
      %3049 = vset.pattern.permute.xlu0 0
      %3050 = vperm.xlu0 %3049, %v2985
      %v3051 = vpop.permute.xlu0 %3050
      %3052 = vset.pattern.permute.xlu0 0
      %3053 = vperm.xlu0 %3052, %v2986
      %v3054 = vpop.permute.xlu0 %3053
      %3055 = vset.pattern.permute.xlu0 0
      %3056 = vperm.xlu0 %3055, %v2987
      %v3057 = vpop.permute.xlu0 %3056
      %3058 = vset.pattern.permute.xlu0 0
      %3059 = vperm.xlu0 %3058, %v2988
      %v3060 = vpop.permute.xlu0 %3059
      %3061 = vset.pattern.permute.xlu0 0
      %3062 = vperm.xlu0 %3061, %v2989
      %v3063 = vpop.permute.xlu0 %3062
      %3064 = vset.pattern.permute.xlu0 0
      %3065 = vperm.xlu0 %3064, %v2990
      %v3066 = vpop.permute.xlu0 %3065
      %3067 = vset.pattern.permute.xlu0 0
      %3068 = vperm.xlu0 %3067, %v2991
      %v3069 = vpop.permute.xlu0 %3068
      %3070 = vset.pattern.permute.xlu0 0
      %3071 = vperm.xlu0 %3070, %v2992
      %v3072 = vpop.permute.xlu0 %3071
      %3073 = vset.pattern.permute.xlu0 0
      %3074 = vperm.xlu0 %3073, %v2993
      %v3075 = vpop.permute.xlu0 %3074
      %3076 = vset.pattern.permute.xlu0 0
      %3077 = vperm.xlu0 %3076, %v2994
      %v3078 = vpop.permute.xlu0 %3077
      %3079 = vset.pattern.permute.xlu0 0
      %3080 = vperm.xlu0 %3079, %v2995
      %v3081 = vpop.permute.xlu0 %3080
      %3082 = vset.pattern.permute.xlu0 0
      %3083 = vperm.xlu0 %3082, %v2996
      %v3084 = vpop.permute.xlu0 %3083
      %3085 = vset.pattern.permute.xlu0 0
      %3086 = vperm.xlu0 %3085, %v2997
      %v3087 = vpop.permute.xlu0 %3086
      %3088 = vset.pattern.permute.xlu0 0
      %3089 = vperm.xlu0 %3088, %v2998
      %v3090 = vpop.permute.xlu0 %3089
      %3091 = vset.pattern.permute.xlu0 0
      %3092 = vperm.xlu0 %3091, %v2999
      %v3093 = vpop.permute.xlu0 %3092
      %3094 = vset.pattern.permute.xlu0 0
      %3095 = vperm.xlu0 %3094, %v3000
      %v3096 = vpop.permute.xlu0 %3095
      %3097 = vset.pattern.permute.xlu0 0
      %3098 = vperm.xlu0 %3097, %v3001
      %v3099 = vpop.permute.xlu0 %3098
      %3100 = vset.pattern.permute.xlu0 0
      %3101 = vperm.xlu0 %3100, %v3002
      %v3102 = vpop.permute.xlu0 %3101
      %3103 = vset.pattern.permute.xlu0 0
      %3104 = vperm.xlu0 %3103, %v3003
      %v3105 = vpop.permute.xlu0 %3104
      %3106 = vset.pattern.permute.xlu0 0
      %3107 = vperm.xlu0 %3106, %v3004
      %v3108 = vpop.permute.xlu0 %3107
      %3109 = vset.pattern.permute.xlu0 0
      %3110 = vperm.xlu0 %3109, %v3005
      %v3111 = vpop.permute.xlu0 %3110
      %3112 = vset.pattern.permute.xlu0 0
      %3113 = vperm.xlu0 %3112, %v3006
      %v3114 = vpop.permute.xlu0 %3113
      %vm3115 = vcmp.eq.s32.totalorder %v3009, 1
      %vm3116 = vcmp.eq.s32.totalorder %v3012, 1
      %vm3117 = vcmp.eq.s32.totalorder %v3015, 1
      %vm3118 = vcmp.eq.s32.totalorder %v3018, 1
      %vm3119 = vcmp.eq.s32.totalorder %v3021, 1
      %vm3120 = vcmp.eq.s32.totalorder %v3024, 1
      %vm3121 = vcmp.eq.s32.totalorder %v3027, 1
      %vm3122 = vcmp.eq.s32.totalorder %v3030, 1
      %vm3123 = vcmp.eq.s32.totalorder %v3033, 1
      %vm3124 = vcmp.eq.s32.totalorder %v3036, 1
      %vm3125 = vcmp.eq.s32.totalorder %v3039, 1
      %vm3126 = vcmp.eq.s32.totalorder %v3042, 1
      %vm3127 = vcmp.eq.s32.totalorder %v3045, 1
      %vm3128 = vcmp.eq.s32.totalorder %v3048, 1
      %vm3129 = vcmp.eq.s32.totalorder %v3051, 1
      %vm3130 = vcmp.eq.s32.totalorder %v3054, 1
      %vm3131 = vcmp.eq.s32.totalorder %v3057, 1
      %vm3132 = vcmp.eq.s32.totalorder %v3060, 1
      %vm3133 = vcmp.eq.s32.totalorder %v3063, 1
      %vm3134 = vcmp.eq.s32.totalorder %v3066, 1
      %vm3135 = vcmp.eq.s32.totalorder %v3069, 1
      %vm3136 = vcmp.eq.s32.totalorder %v3072, 1
      %vm3137 = vcmp.eq.s32.totalorder %v3075, 1
      %vm3138 = vcmp.eq.s32.totalorder %v3078, 1
      %vm3139 = vcmp.eq.s32.totalorder %v3081, 1
      %vm3140 = vcmp.eq.s32.totalorder %v3084, 1
      %vm3141 = vcmp.eq.s32.totalorder %v3087, 1
      %vm3142 = vcmp.eq.s32.totalorder %v3090, 1
      %vm3143 = vcmp.eq.s32.totalorder %v3093, 1
      %vm3144 = vcmp.eq.s32.totalorder %v3096, 1
      %vm3145 = vcmp.eq.s32.totalorder %v3099, 1
      %vm3146 = vcmp.eq.s32.totalorder %v3102, 1
      %vm3147 = vcmp.eq.s32.totalorder %v3105, 1
      %vm3148 = vcmp.eq.s32.totalorder %v3108, 1
      %vm3149 = vcmp.eq.s32.totalorder %v3111, 1
      %vm3150 = vcmp.eq.s32.totalorder %v3114, 1
      %v3151 = vsel %vm3115, %v2970, %v2752
      %v3152 = vsel %vm3116, %v2865, %v2647
      %v3153 = vsel %vm3117, %v2867, %v2649
      %v3154 = vsel %vm3118, %v2869, %v2651
      %v3155 = vsel %vm3119, %v2871, %v2653
      %v3156 = vsel %vm3120, %v2873, %v2655
      %v3157 = vsel %vm3121, %v2875, %v2657
      %v3158 = vsel %vm3122, %v2877, %v2659
      %v3159 = vsel %vm3123, %v2879, %v2661
      %v3160 = vsel %vm3124, %v2881, %v2663
      %v3161 = vsel %vm3125, %v2883, %v2665
      %v3162 = vsel %vm3126, %v2885, %v2667
      %v3163 = vsel %vm3127, %v2887, %v2669
      %v3164 = vsel %vm3128, %v2889, %v2671
      %v3165 = vsel %vm3129, %v2891, %v2673
      %v3166 = vsel %vm3130, %v2893, %v2675
      %v3167 = vsel %vm3131, %v2895, %v2677
      %v3168 = vsel %vm3132, %v2897, %v2679
      %v3169 = vsel %vm3133, %v2899, %v2681
      %v3170 = vsel %vm3134, %v2901, %v2683
      %v3171 = vsel %vm3135, %v2903, %v2685
      %v3172 = vsel %vm3136, %v2905, %v2687
      %v3173 = vsel %vm3137, %v2907, %v2689
      %v3174 = vsel %vm3138, %v2909, %v2691
      %v3175 = vsel %vm3139, %v2911, %v2693
      %v3176 = vsel %vm3140, %v2913, %v2695
      %v3177 = vsel %vm3141, %v2915, %v2697
      %v3178 = vsel %vm3142, %v2917, %v2699
      %v3179 = vsel %vm3143, %v2919, %v2701
      %v3180 = vsel %vm3144, %v2921, %v2703
      %v3181 = vsel %vm3145, %v2923, %v2705
      %v3182 = vsel %vm3146, %v2925, %v2707
      %v3183 = vsel %vm3147, %v2927, %v2709
      %v3184 = vsel %vm3148, %v2929, %v2711
      %v3185 = vsel %vm3149, %v2931, %v2713
      %v3186 = vsel %vm3150, %v2933, %v2715
      %v3187 = vsel %vm478, 1, 0
      %v3188 = vsel %vm479, 1, 0
      %v3189 = vsel %vm480, 1, 0
      %v3190 = vsel %vm481, 1, 0
      %v3191 = vsel %vm482, 1, 0
      %v3192 = vsel %vm483, 1, 0
      %v3193 = vsel %vm484, 1, 0
      %v3194 = vsel %vm485, 1, 0
      %v3195 = vsel %vm486, 1, 0
      %v3196 = vsel %vm487, 1, 0
      %v3197 = vsel %vm488, 1, 0
      %v3198 = vsel %vm489, 1, 0
      %v3199 = vsel %vm490, 1, 0
      %v3200 = vsel %vm491, 1, 0
      %v3201 = vsel %vm492, 1, 0
      %v3202 = vsel %vm493, 1, 0
      %v3203 = vsel %vm494, 1, 0
      %v3204 = vsel %vm495, 1, 0
      %v3205 = vsel %vm496, 1, 0
      %v3206 = vsel %vm497, 1, 0
      %v3207 = vsel %vm498, 1, 0
      %v3208 = vsel %vm499, 1, 0
      %v3209 = vsel %vm500, 1, 0
      %v3210 = vsel %vm501, 1, 0
      %v3211 = vsel %vm502, 1, 0
      %v3212 = vsel %vm503, 1, 0
      %v3213 = vsel %vm504, 1, 0
      %v3214 = vsel %vm505, 1, 0
      %v3215 = vsel %vm506, 1, 0
      %v3216 = vsel %vm507, 1, 0
      %v3217 = vsel %vm508, 1, 0
      %v3218 = vsel %vm509, 1, 0
      %v3219 = vsel %vm510, 1, 0
      %v3220 = vsel %vm511, 1, 0
      %v3221 = vsel %vm512, 1, 0
      %v3222 = vsel %vm513, 1, 0
      %3223 = vset.pattern.permute.xlu0 0
      %3224 = vperm.xlu0 %3223, %v3187
      %v3225 = vpop.permute.xlu0 %3224
      %3226 = vset.pattern.permute.xlu0 0
      %3227 = vperm.xlu0 %3226, %v3188
      %v3228 = vpop.permute.xlu0 %3227
      %3229 = vset.pattern.permute.xlu0 0
      %3230 = vperm.xlu0 %3229, %v3189
      %v3231 = vpop.permute.xlu0 %3230
      %3232 = vset.pattern.permute.xlu0 0
      %3233 = vperm.xlu0 %3232, %v3190
      %v3234 = vpop.permute.xlu0 %3233
      %3235 = vset.pattern.permute.xlu0 0
      %3236 = vperm.xlu0 %3235, %v3191
      %v3237 = vpop.permute.xlu0 %3236
      %3238 = vset.pattern.permute.xlu0 0
      %3239 = vperm.xlu0 %3238, %v3192
      %v3240 = vpop.permute.xlu0 %3239
      %3241 = vset.pattern.permute.xlu0 0
      %3242 = vperm.xlu0 %3241, %v3193
      %v3243 = vpop.permute.xlu0 %3242
      %3244 = vset.pattern.permute.xlu0 0
      %3245 = vperm.xlu0 %3244, %v3194
      %v3246 = vpop.permute.xlu0 %3245
      %3247 = vset.pattern.permute.xlu0 0
      %3248 = vperm.xlu0 %3247, %v3195
      %v3249 = vpop.permute.xlu0 %3248
      %3250 = vset.pattern.permute.xlu0 0
      %3251 = vperm.xlu0 %3250, %v3196
      %v3252 = vpop.permute.xlu0 %3251
      %3253 = vset.pattern.permute.xlu0 0
      %3254 = vperm.xlu0 %3253, %v3197
      %v3255 = vpop.permute.xlu0 %3254
      %3256 = vset.pattern.permute.xlu0 0
      %3257 = vperm.xlu0 %3256, %v3198
      %v3258 = vpop.permute.xlu0 %3257
      %3259 = vset.pattern.permute.xlu0 0
      %3260 = vperm.xlu0 %3259, %v3199
      %v3261 = vpop.permute.xlu0 %3260
      %3262 = vset.pattern.permute.xlu0 0
      %3263 = vperm.xlu0 %3262, %v3200
      %v3264 = vpop.permute.xlu0 %3263
      %3265 = vset.pattern.permute.xlu0 0
      %3266 = vperm.xlu0 %3265, %v3201
      %v3267 = vpop.permute.xlu0 %3266
      %3268 = vset.pattern.permute.xlu0 0
      %3269 = vperm.xlu0 %3268, %v3202
      %v3270 = vpop.permute.xlu0 %3269
      %3271 = vset.pattern.permute.xlu0 0
      %3272 = vperm.xlu0 %3271, %v3203
      %v3273 = vpop.permute.xlu0 %3272
      %3274 = vset.pattern.permute.xlu0 0
      %3275 = vperm.xlu0 %3274, %v3204
      %v3276 = vpop.permute.xlu0 %3275
      %3277 = vset.pattern.permute.xlu0 0
      %3278 = vperm.xlu0 %3277, %v3205
      %v3279 = vpop.permute.xlu0 %3278
      %3280 = vset.pattern.permute.xlu0 0
      %3281 = vperm.xlu0 %3280, %v3206
      %v3282 = vpop.permute.xlu0 %3281
      %3283 = vset.pattern.permute.xlu0 0
      %3284 = vperm.xlu0 %3283, %v3207
      %v3285 = vpop.permute.xlu0 %3284
      %3286 = vset.pattern.permute.xlu0 0
      %3287 = vperm.xlu0 %3286, %v3208
      %v3288 = vpop.permute.xlu0 %3287
      %3289 = vset.pattern.permute.xlu0 0
      %3290 = vperm.xlu0 %3289, %v3209
      %v3291 = vpop.permute.xlu0 %3290
      %3292 = vset.pattern.permute.xlu0 0
      %3293 = vperm.xlu0 %3292, %v3210
      %v3294 = vpop.permute.xlu0 %3293
      %3295 = vset.pattern.permute.xlu0 0
      %3296 = vperm.xlu0 %3295, %v3211
      %v3297 = vpop.permute.xlu0 %3296
      %3298 = vset.pattern.permute.xlu0 0
      %3299 = vperm.xlu0 %3298, %v3212
      %v3300 = vpop.permute.xlu0 %3299
      %3301 = vset.pattern.permute.xlu0 0
      %3302 = vperm.xlu0 %3301, %v3213
      %v3303 = vpop.permute.xlu0 %3302
      %3304 = vset.pattern.permute.xlu0 0
      %3305 = vperm.xlu0 %3304, %v3214
      %v3306 = vpop.permute.xlu0 %3305
      %3307 = vset.pattern.permute.xlu0 0
      %3308 = vperm.xlu0 %3307, %v3215
      %v3309 = vpop.permute.xlu0 %3308
      %3310 = vset.pattern.permute.xlu0 0
      %3311 = vperm.xlu0 %3310, %v3216
      %v3312 = vpop.permute.xlu0 %3311
      %3313 = vset.pattern.permute.xlu0 0
      %3314 = vperm.xlu0 %3313, %v3217
      %v3315 = vpop.permute.xlu0 %3314
      %3316 = vset.pattern.permute.xlu0 0
      %3317 = vperm.xlu0 %3316, %v3218
      %v3318 = vpop.permute.xlu0 %3317
      %3319 = vset.pattern.permute.xlu0 0
      %3320 = vperm.xlu0 %3319, %v3219
      %v3321 = vpop.permute.xlu0 %3320
      %3322 = vset.pattern.permute.xlu0 0
      %3323 = vperm.xlu0 %3322, %v3220
      %v3324 = vpop.permute.xlu0 %3323
      %3325 = vset.pattern.permute.xlu0 0
      %3326 = vperm.xlu0 %3325, %v3221
      %v3327 = vpop.permute.xlu0 %3326
      %3328 = vset.pattern.permute.xlu0 0
      %3329 = vperm.xlu0 %3328, %v3222
      %v3330 = vpop.permute.xlu0 %3329
      %vm3331 = vcmp.eq.s32.totalorder %v3225, 1
      %vm3332 = vcmp.eq.s32.totalorder %v3228, 1
      %vm3333 = vcmp.eq.s32.totalorder %v3231, 1
      %vm3334 = vcmp.eq.s32.totalorder %v3234, 1
      %vm3335 = vcmp.eq.s32.totalorder %v3237, 1
      %vm3336 = vcmp.eq.s32.totalorder %v3240, 1
      %vm3337 = vcmp.eq.s32.totalorder %v3243, 1
      %vm3338 = vcmp.eq.s32.totalorder %v3246, 1
      %vm3339 = vcmp.eq.s32.totalorder %v3249, 1
      %vm3340 = vcmp.eq.s32.totalorder %v3252, 1
      %vm3341 = vcmp.eq.s32.totalorder %v3255, 1
      %vm3342 = vcmp.eq.s32.totalorder %v3258, 1
      %vm3343 = vcmp.eq.s32.totalorder %v3261, 1
      %vm3344 = vcmp.eq.s32.totalorder %v3264, 1
      %vm3345 = vcmp.eq.s32.totalorder %v3267, 1
      %vm3346 = vcmp.eq.s32.totalorder %v3270, 1
      %vm3347 = vcmp.eq.s32.totalorder %v3273, 1
      %vm3348 = vcmp.eq.s32.totalorder %v3276, 1
      %vm3349 = vcmp.eq.s32.totalorder %v3279, 1
      %vm3350 = vcmp.eq.s32.totalorder %v3282, 1
      %vm3351 = vcmp.eq.s32.totalorder %v3285, 1
      %vm3352 = vcmp.eq.s32.totalorder %v3288, 1
      %vm3353 = vcmp.eq.s32.totalorder %v3291, 1
      %vm3354 = vcmp.eq.s32.totalorder %v3294, 1
      %vm3355 = vcmp.eq.s32.totalorder %v3297, 1
      %vm3356 = vcmp.eq.s32.totalorder %v3300, 1
      %vm3357 = vcmp.eq.s32.totalorder %v3303, 1
      %vm3358 = vcmp.eq.s32.totalorder %v3306, 1
      %vm3359 = vcmp.eq.s32.totalorder %v3309, 1
      %vm3360 = vcmp.eq.s32.totalorder %v3312, 1
      %vm3361 = vcmp.eq.s32.totalorder %v3315, 1
      %vm3362 = vcmp.eq.s32.totalorder %v3318, 1
      %vm3363 = vcmp.eq.s32.totalorder %v3321, 1
      %vm3364 = vcmp.eq.s32.totalorder %v3324, 1
      %vm3365 = vcmp.eq.s32.totalorder %v3327, 1
      %vm3366 = vcmp.eq.s32.totalorder %v3330, 1
      %v3367 = vsel %vm3331, %v2756, %v3151
      %v3368 = vsel %vm3332, %v2758, %v3152
      %v3369 = vsel %vm3333, %v2760, %v3153
      %v3370 = vsel %vm3334, %v2762, %v3154
      %v3371 = vsel %vm3335, %v2764, %v3155
      %v3372 = vsel %vm3336, %v2766, %v3156
      %v3373 = vsel %vm3337, %v2768, %v3157
      %v3374 = vsel %vm3338, %v2770, %v3158
      %v3375 = vsel %vm3339, %v2772, %v3159
      %v3376 = vsel %vm3340, %v2774, %v3160
      %v3377 = vsel %vm3341, %v2776, %v3161
      %v3378 = vsel %vm3342, %v2778, %v3162
      %v3379 = vsel %vm3343, %v2780, %v3163
      %v3380 = vsel %vm3344, %v2782, %v3164
      %v3381 = vsel %vm3345, %v2784, %v3165
      %v3382 = vsel %vm3346, %v2786, %v3166
      %v3383 = vsel %vm3347, %v2788, %v3167
      %v3384 = vsel %vm3348, %v2790, %v3168
      %v3385 = vsel %vm3349, %v2792, %v3169
      %v3386 = vsel %vm3350, %v2794, %v3170
      %v3387 = vsel %vm3351, %v2796, %v3171
      %v3388 = vsel %vm3352, %v2798, %v3172
      %v3389 = vsel %vm3353, %v2800, %v3173
      %v3390 = vsel %vm3354, %v2802, %v3174
      %v3391 = vsel %vm3355, %v2804, %v3175
      %v3392 = vsel %vm3356, %v2806, %v3176
      %v3393 = vsel %vm3357, %v2808, %v3177
      %v3394 = vsel %vm3358, %v2810, %v3178
      %v3395 = vsel %vm3359, %v2812, %v3179
      %v3396 = vsel %vm3360, %v2814, %v3180
      %v3397 = vsel %vm3361, %v2816, %v3181
      %v3398 = vsel %vm3362, %v2818, %v3182
      %v3399 = vsel %vm3363, %v2820, %v3183
      %v3400 = vsel %vm3364, %v2822, %v3184
      %v3401 = vsel %vm3365, %v2824, %v3185
      %v3402 = vsel %vm3366, %v2861, %v3186
      %vm3406 = vcmask 1045504
      %v3407 = vrot.slane %v3369, 2
      %v3408 = vrot.slane %v3370, 2
      %v3409 = vsel %vm3406, %v3407, %v3408
      %v3410 = vrot.slane %v3371, 2
      %v3411 = vsel %vm3406, %v3408, %v3410
      %v3448 = vrot.slane %v3367, 6
      %v3449 = vrot.slane %v3368, 6
      %v3450 = vsel %vm1721, %v3448, %v3449
      %v3451 = vrot.slane %v3369, 6
      %v3452 = vsel %vm1721, %v3449, %v3451
      %v3453 = vrot.slane %v3370, 6
      %v3454 = vsel %vm1721, %v3451, %v3453
      %v3455 = vrot.slane %v3371, 6
      %v3456 = vsel %vm1721, %v3453, %v3455
      %v3457 = vrot.slane %v3372, 6
      %v3458 = vsel %vm1721, %v3455, %v3457
      %v3459 = vrot.slane %v3373, 6
      %v3460 = vsel %vm1721, %v3457, %v3459
      %v3461 = vrot.slane %v3374, 6
      %v3462 = vsel %vm1721, %v3459, %v3461
      %v3463 = vrot.slane %v3375, 6
      %v3464 = vsel %vm1721, %v3461, %v3463
      %v3465 = vrot.slane %v3376, 6
      %v3466 = vsel %vm1721, %v3463, %v3465
      %v3467 = vrot.slane %v3377, 6
      %v3468 = vsel %vm1721, %v3465, %v3467
      %v3469 = vrot.slane %v3378, 6
      %v3470 = vsel %vm1721, %v3467, %v3469
      %v3471 = vrot.slane %v3379, 6
      %v3472 = vsel %vm1721, %v3469, %v3471
      %v3473 = vrot.slane %v3380, 6
      %v3474 = vsel %vm1721, %v3471, %v3473
      %v3475 = vrot.slane %v3381, 6
      %v3476 = vsel %vm1721, %v3473, %v3475
      %v3477 = vrot.slane %v3382, 6
      %v3478 = vsel %vm1721, %v3475, %v3477
      %v3479 = vrot.slane %v3383, 6
      %v3480 = vsel %vm1721, %v3477, %v3479
      %v3481 = vrot.slane %v3384, 6
      %v3482 = vsel %vm1721, %v3479, %v3481
      %v3483 = vrot.slane %v3385, 6
      %v3484 = vsel %vm1721, %v3481, %v3483
      %v3485 = vrot.slane %v3386, 6
      %v3486 = vsel %vm1721, %v3483, %v3485
      %v3487 = vrot.slane %v3387, 6
      %v3488 = vsel %vm1721, %v3485, %v3487
      %v3489 = vrot.slane %v3388, 6
      %v3490 = vsel %vm1721, %v3487, %v3489
      %v3491 = vrot.slane %v3389, 6
      %v3492 = vsel %vm1721, %v3489, %v3491
      %v3493 = vrot.slane %v3390, 6
      %v3494 = vsel %vm1721, %v3491, %v3493
      %v3495 = vrot.slane %v3391, 6
      %v3496 = vsel %vm1721, %v3493, %v3495
      %v3497 = vrot.slane %v3392, 6
      %v3498 = vsel %vm1721, %v3495, %v3497
      %v3499 = vrot.slane %v3393, 6
      %v3500 = vsel %vm1721, %v3497, %v3499
      %v3501 = vrot.slane %v3394, 6
      %v3502 = vsel %vm1721, %v3499, %v3501
      %v3503 = vrot.slane %v3395, 6
      %v3504 = vsel %vm1721, %v3501, %v3503
      %v3505 = vrot.slane %v3396, 6
      %v3506 = vsel %vm1721, %v3503, %v3505
      %v3507 = vrot.slane %v3397, 6
      %v3508 = vsel %vm1721, %v3505, %v3507
      %v3509 = vrot.slane %v3398, 6
      %v3510 = vsel %vm1721, %v3507, %v3509
      %v3511 = vrot.slane %v3399, 6
      %v3512 = vsel %vm1721, %v3509, %v3511
      %v3513 = vrot.slane %v3400, 6
      %v3514 = vsel %vm1721, %v3511, %v3513
      %v3515 = vrot.slane %v3401, 6
      %v3516 = vsel %vm1721, %v3513, %v3515
      %v3517 = vrot.slane %v3402, 6
      %v3518 = vsel %vm1721, %v3515, %v3517
      %v3556 = vrot.slane %v3398, 2
      %v3557 = vrot.slane %v3399, 2
      %v3558 = vsel %vm3406, %v3556, %v3557
      %v3559 = vrot.slane %v3400, 2
      %v3560 = vsel %vm3406, %v3557, %v3559
      %v3564 = vsel %vm1721, %v3410, %v3448
      %v3565 = vsel %vm1721, %v3517, %v3558
      %vm3566 = vcmask 1043456
      %v3567 = vsel %vm3566, %v3559, 0.0
      %v3568 = vpack.c.bf16 %v3411, %v3409
      %v3569 = vpack.c.bf16 %v3450, %v3564
      %v3570 = vpack.c.bf16 %v3454, %v3452
      %v3571 = vpack.c.bf16 %v3458, %v3456
      %v3572 = vpack.c.bf16 %v3462, %v3460
      %v3573 = vpack.c.bf16 %v3466, %v3464
      %v3574 = vpack.c.bf16 %v3470, %v3468
      %v3575 = vpack.c.bf16 %v3474, %v3472
      %v3576 = vpack.c.bf16 %v3478, %v3476
      %v3577 = vpack.c.bf16 %v3482, %v3480
      %v3578 = vpack.c.bf16 %v3486, %v3484
      %v3579 = vpack.c.bf16 %v3490, %v3488
      %v3580 = vpack.c.bf16 %v3494, %v3492
      %v3581 = vpack.c.bf16 %v3498, %v3496
      %v3582 = vpack.c.bf16 %v3502, %v3500
      %v3583 = vpack.c.bf16 %v3506, %v3504
      %v3584 = vpack.c.bf16 %v3510, %v3508
      %v3585 = vpack.c.bf16 %v3514, %v3512
      %v3586 = vpack.c.bf16 %v3516, %v3516
      %v3587 = vpack.c.bf16 %v3518, %v3516
      %v3588 = vpack.c.bf16 %v3565, %v3565
      %v3589 = vpack.c.bf16 %v3560, %v3565
      %v3590 = vpack.c.bf16 %v3567, %v3567
      %v3592 = vshrl.u32 %v3568, 16
      %v3594 = vshll.u32 %v3568, 16
      %v3596 = vrot.slane %v3594, 1
      %v3597 = vor.u32 %v3592, %v3596
      %v3599 = vshll.u32 %v3569, 16
      %v3601 = vrot.slane %v3599, 1
      %v3602 = vsel %vm614, %v3597, %v3601
      %v3603 = vshrl.u32 %v3569, 16
      %v3605 = vor.u32 %v3603, %v3601
      %v3607 = vshll.u32 %v3570, 16
      %v3609 = vrot.slane %v3607, 1
      %v3610 = vsel %vm614, %v3605, %v3609
      %v3611 = vshrl.u32 %v3570, 16
      %v3613 = vor.u32 %v3611, %v3609
      %v3615 = vshll.u32 %v3571, 16
      %v3617 = vrot.slane %v3615, 1
      %v3618 = vsel %vm614, %v3613, %v3617
      %v3619 = vshrl.u32 %v3571, 16
      %v3621 = vor.u32 %v3619, %v3617
      %v3623 = vshll.u32 %v3572, 16
      %v3625 = vrot.slane %v3623, 1
      %v3626 = vsel %vm614, %v3621, %v3625
      %v3627 = vshrl.u32 %v3572, 16
      %v3629 = vor.u32 %v3627, %v3625
      %v3631 = vshll.u32 %v3573, 16
      %v3633 = vrot.slane %v3631, 1
      %v3634 = vsel %vm614, %v3629, %v3633
      %v3635 = vshrl.u32 %v3573, 16
      %v3637 = vor.u32 %v3635, %v3633
      %v3639 = vshll.u32 %v3574, 16
      %v3641 = vrot.slane %v3639, 1
      %v3642 = vsel %vm614, %v3637, %v3641
      %v3643 = vshrl.u32 %v3574, 16
      %v3645 = vor.u32 %v3643, %v3641
      %v3647 = vshll.u32 %v3575, 16
      %v3649 = vrot.slane %v3647, 1
      %v3650 = vsel %vm614, %v3645, %v3649
      %v3651 = vshrl.u32 %v3575, 16
      %v3653 = vor.u32 %v3651, %v3649
      %v3655 = vshll.u32 %v3576, 16
      %v3657 = vrot.slane %v3655, 1
      %v3658 = vsel %vm614, %v3653, %v3657
      %v3659 = vshrl.u32 %v3576, 16
      %v3661 = vor.u32 %v3659, %v3657
      %v3663 = vshll.u32 %v3577, 16
      %v3665 = vrot.slane %v3663, 1
      %v3666 = vsel %vm614, %v3661, %v3665
      %v3667 = vshrl.u32 %v3577, 16
      %v3669 = vor.u32 %v3667, %v3665
      %v3671 = vshll.u32 %v3578, 16
      %v3673 = vrot.slane %v3671, 1
      %v3674 = vsel %vm614, %v3669, %v3673
      %v3675 = vshrl.u32 %v3578, 16
      %v3677 = vor.u32 %v3675, %v3673
      %v3679 = vshll.u32 %v3579, 16
      %v3681 = vrot.slane %v3679, 1
      %v3682 = vsel %vm614, %v3677, %v3681
      %v3683 = vshrl.u32 %v3579, 16
      %v3685 = vor.u32 %v3683, %v3681
      %v3687 = vshll.u32 %v3580, 16
      %v3689 = vrot.slane %v3687, 1
      %v3690 = vsel %vm614, %v3685, %v3689
      %v3691 = vshrl.u32 %v3580, 16
      %v3693 = vor.u32 %v3691, %v3689
      %v3695 = vshll.u32 %v3581, 16
      %v3697 = vrot.slane %v3695, 1
      %v3698 = vsel %vm614, %v3693, %v3697
      %v3699 = vshrl.u32 %v3581, 16
      %v3701 = vor.u32 %v3699, %v3697
      %v3703 = vshll.u32 %v3582, 16
      %v3705 = vrot.slane %v3703, 1
      %v3706 = vsel %vm614, %v3701, %v3705
      %v3707 = vshrl.u32 %v3582, 16
      %v3709 = vor.u32 %v3707, %v3705
      %v3711 = vshll.u32 %v3583, 16
      %v3713 = vrot.slane %v3711, 1
      %v3714 = vsel %vm614, %v3709, %v3713
      %v3715 = vshrl.u32 %v3583, 16
      %v3717 = vor.u32 %v3715, %v3713
      %v3719 = vshll.u32 %v3584, 16
      %v3721 = vrot.slane %v3719, 1
      %v3722 = vsel %vm614, %v3717, %v3721
      %v3723 = vshrl.u32 %v3584, 16
      %v3725 = vor.u32 %v3723, %v3721
      %v3727 = vshll.u32 %v3585, 16
      %v3729 = vrot.slane %v3727, 1
      %v3730 = vsel %vm614, %v3725, %v3729
      %v3731 = vshrl.u32 %v3585, 16
      %v3733 = vor.u32 %v3731, %v3729
      %v3735 = vshll.u32 %v3586, 16
      %v3737 = vrot.slane %v3735, 1
      %v3738 = vsel %vm614, %v3733, %v3737
      %3739 = vrot.lane.b32.xlu0 %v3602, 32
      %v3740 = vpop.permute.xlu0 %3739
      %3741 = vrot.lane.b32.xlu0 %v3610, 32
      %v3742 = vpop.permute.xlu0 %3741
      %3743 = vrot.lane.b32.xlu0 %v3618, 32
      %v3744 = vpop.permute.xlu0 %3743
      %3745 = vrot.lane.b32.xlu0 %v3626, 32
      %v3746 = vpop.permute.xlu0 %3745
      %3747 = vrot.lane.b32.xlu0 %v3634, 32
      %v3748 = vpop.permute.xlu0 %3747
      %3749 = vrot.lane.b32.xlu0 %v3642, 32
      %v3750 = vpop.permute.xlu0 %3749
      %3751 = vrot.lane.b32.xlu0 %v3650, 32
      %v3752 = vpop.permute.xlu0 %3751
      %3753 = vrot.lane.b32.xlu0 %v3658, 32
      %v3754 = vpop.permute.xlu0 %3753
      %3755 = vrot.lane.b32.xlu0 %v3666, 32
      %v3756 = vpop.permute.xlu0 %3755
      %3757 = vrot.lane.b32.xlu0 %v3674, 32
      %v3758 = vpop.permute.xlu0 %3757
      %3759 = vrot.lane.b32.xlu0 %v3682, 32
      %v3760 = vpop.permute.xlu0 %3759
      %3761 = vrot.lane.b32.xlu0 %v3690, 32
      %v3762 = vpop.permute.xlu0 %3761
      %3763 = vrot.lane.b32.xlu0 %v3698, 32
      %v3764 = vpop.permute.xlu0 %3763
      %3765 = vrot.lane.b32.xlu0 %v3706, 32
      %v3766 = vpop.permute.xlu0 %3765
      %3767 = vrot.lane.b32.xlu0 %v3714, 32
      %v3768 = vpop.permute.xlu0 %3767
      %3769 = vrot.lane.b32.xlu0 %v3722, 32
      %v3770 = vpop.permute.xlu0 %3769
      %3771 = vrot.lane.b32.xlu0 %v3730, 32
      %v3772 = vpop.permute.xlu0 %3771
      %3773 = vrot.lane.b32.xlu0 %v3738, 32
      %v3774 = vpop.permute.xlu0 %3773
      %v3794 = vrot.slane %v3568, 1
      %v3795 = vrot.slane %v3569, 1
      %v3796 = vsel %vm818, %v3794, %v3795
      %v3797 = vrot.slane %v3570, 1
      %v3798 = vsel %vm818, %v3795, %v3797
      %v3799 = vrot.slane %v3571, 1
      %v3800 = vsel %vm818, %v3797, %v3799
      %v3801 = vrot.slane %v3572, 1
      %v3802 = vsel %vm818, %v3799, %v3801
      %v3803 = vrot.slane %v3573, 1
      %v3804 = vsel %vm818, %v3801, %v3803
      %v3805 = vrot.slane %v3574, 1
      %v3806 = vsel %vm818, %v3803, %v3805
      %v3807 = vrot.slane %v3575, 1
      %v3808 = vsel %vm818, %v3805, %v3807
      %v3809 = vrot.slane %v3576, 1
      %v3810 = vsel %vm818, %v3807, %v3809
      %v3811 = vrot.slane %v3577, 1
      %v3812 = vsel %vm818, %v3809, %v3811
      %v3813 = vrot.slane %v3578, 1
      %v3814 = vsel %vm818, %v3811, %v3813
      %v3815 = vrot.slane %v3579, 1
      %v3816 = vsel %vm818, %v3813, %v3815
      %v3817 = vrot.slane %v3580, 1
      %v3818 = vsel %vm818, %v3815, %v3817
      %v3819 = vrot.slane %v3581, 1
      %v3820 = vsel %vm818, %v3817, %v3819
      %v3821 = vrot.slane %v3582, 1
      %v3822 = vsel %vm818, %v3819, %v3821
      %v3823 = vrot.slane %v3583, 1
      %v3824 = vsel %vm818, %v3821, %v3823
      %v3825 = vrot.slane %v3584, 1
      %v3826 = vsel %vm818, %v3823, %v3825
      %v3827 = vrot.slane %v3585, 1
      %v3828 = vsel %vm818, %v3825, %v3827
      %v3829 = vrot.slane %v3586, 1
      %v3830 = vsel %vm818, %v3827, %v3829
      %3831 = vrot.lane.b32.xlu0 %v3796, 64
      %v3832 = vpop.permute.xlu0 %3831
      %3833 = vrot.lane.b32.xlu0 %v3798, 64
      %v3834 = vpop.permute.xlu0 %3833
      %3835 = vrot.lane.b32.xlu0 %v3800, 64
      %v3836 = vpop.permute.xlu0 %3835
      %3837 = vrot.lane.b32.xlu0 %v3802, 64
      %v3838 = vpop.permute.xlu0 %3837
      %3839 = vrot.lane.b32.xlu0 %v3804, 64
      %v3840 = vpop.permute.xlu0 %3839
      %3841 = vrot.lane.b32.xlu0 %v3806, 64
      %v3842 = vpop.permute.xlu0 %3841
      %3843 = vrot.lane.b32.xlu0 %v3808, 64
      %v3844 = vpop.permute.xlu0 %3843
      %3845 = vrot.lane.b32.xlu0 %v3810, 64
      %v3846 = vpop.permute.xlu0 %3845
      %3847 = vrot.lane.b32.xlu0 %v3812, 64
      %v3848 = vpop.permute.xlu0 %3847
      %3849 = vrot.lane.b32.xlu0 %v3814, 64
      %v3850 = vpop.permute.xlu0 %3849
      %3851 = vrot.lane.b32.xlu0 %v3816, 64
      %v3852 = vpop.permute.xlu0 %3851
      %3853 = vrot.lane.b32.xlu0 %v3818, 64
      %v3854 = vpop.permute.xlu0 %3853
      %3855 = vrot.lane.b32.xlu0 %v3820, 64
      %v3856 = vpop.permute.xlu0 %3855
      %3857 = vrot.lane.b32.xlu0 %v3822, 64
      %v3858 = vpop.permute.xlu0 %3857
      %3859 = vrot.lane.b32.xlu0 %v3824, 64
      %v3860 = vpop.permute.xlu0 %3859
      %3861 = vrot.lane.b32.xlu0 %v3826, 64
      %v3862 = vpop.permute.xlu0 %3861
      %3863 = vrot.lane.b32.xlu0 %v3828, 64
      %v3864 = vpop.permute.xlu0 %3863
      %3865 = vrot.lane.b32.xlu0 %v3830, 64
      %v3866 = vpop.permute.xlu0 %3865
      %v3869 = vrot.slane %v3587, 1
      %v3870 = vsel %vm818, %v3827, %v3869
      %v3871 = vrot.slane %v3588, 1
      %v3872 = vsel %vm818, %v3869, %v3871
      %3873 = vrot.lane.b32.xlu0 %v3798, 96
      %v3874 = vpop.permute.xlu0 %3873
      %3875 = vrot.lane.b32.xlu0 %v3800, 96
      %v3876 = vpop.permute.xlu0 %3875
      %3877 = vrot.lane.b32.xlu0 %v3802, 96
      %v3878 = vpop.permute.xlu0 %3877
      %3879 = vrot.lane.b32.xlu0 %v3804, 96
      %v3880 = vpop.permute.xlu0 %3879
      %3881 = vrot.lane.b32.xlu0 %v3806, 96
      %v3882 = vpop.permute.xlu0 %3881
      %3883 = vrot.lane.b32.xlu0 %v3808, 96
      %v3884 = vpop.permute.xlu0 %3883
      %3885 = vrot.lane.b32.xlu0 %v3810, 96
      %v3886 = vpop.permute.xlu0 %3885
      %3887 = vrot.lane.b32.xlu0 %v3812, 96
      %v3888 = vpop.permute.xlu0 %3887
      %3889 = vrot.lane.b32.xlu0 %v3814, 96
      %v3890 = vpop.permute.xlu0 %3889
      %3891 = vrot.lane.b32.xlu0 %v3816, 96
      %v3892 = vpop.permute.xlu0 %3891
      %3893 = vrot.lane.b32.xlu0 %v3818, 96
      %v3894 = vpop.permute.xlu0 %3893
      %3895 = vrot.lane.b32.xlu0 %v3820, 96
      %v3896 = vpop.permute.xlu0 %3895
      %3897 = vrot.lane.b32.xlu0 %v3822, 96
      %v3898 = vpop.permute.xlu0 %3897
      %3899 = vrot.lane.b32.xlu0 %v3824, 96
      %v3900 = vpop.permute.xlu0 %3899
      %3901 = vrot.lane.b32.xlu0 %v3826, 96
      %v3902 = vpop.permute.xlu0 %3901
      %3903 = vrot.lane.b32.xlu0 %v3828, 96
      %v3904 = vpop.permute.xlu0 %3903
      %3905 = vrot.lane.b32.xlu0 %v3870, 96
      %v3906 = vpop.permute.xlu0 %3905
      %3907 = vrot.lane.b32.xlu0 %v3872, 96
      %v3908 = vpop.permute.xlu0 %3907
      %v3909 = vrot.slane %v3603, 1
      %v3910 = vrot.slane %v3599, 2
      %v3911 = vor.u32 %v3909, %v3910
      %v3912 = vrot.slane %v3611, 1
      %v3913 = vrot.slane %v3607, 2
      %v3914 = vor.u32 %v3912, %v3913
      %v3915 = vsel %vm934, %v3911, %v3914
      %v3916 = vrot.slane %v3619, 1
      %v3917 = vrot.slane %v3615, 2
      %v3918 = vor.u32 %v3916, %v3917
      %v3919 = vsel %vm934, %v3914, %v3918
      %v3920 = vrot.slane %v3627, 1
      %v3921 = vrot.slane %v3623, 2
      %v3922 = vor.u32 %v3920, %v3921
      %v3923 = vsel %vm934, %v3918, %v3922
      %v3924 = vrot.slane %v3635, 1
      %v3925 = vrot.slane %v3631, 2
      %v3926 = vor.u32 %v3924, %v3925
      %v3927 = vsel %vm934, %v3922, %v3926
      %v3928 = vrot.slane %v3643, 1
      %v3929 = vrot.slane %v3639, 2
      %v3930 = vor.u32 %v3928, %v3929
      %v3931 = vsel %vm934, %v3926, %v3930
      %v3932 = vrot.slane %v3651, 1
      %v3933 = vrot.slane %v3647, 2
      %v3934 = vor.u32 %v3932, %v3933
      %v3935 = vsel %vm934, %v3930, %v3934
      %v3936 = vrot.slane %v3659, 1
      %v3937 = vrot.slane %v3655, 2
      %v3938 = vor.u32 %v3936, %v3937
      %v3939 = vsel %vm934, %v3934, %v3938
      %v3940 = vrot.slane %v3667, 1
      %v3941 = vrot.slane %v3663, 2
      %v3942 = vor.u32 %v3940, %v3941
      %v3943 = vsel %vm934, %v3938, %v3942
      %v3944 = vrot.slane %v3675, 1
      %v3945 = vrot.slane %v3671, 2
      %v3946 = vor.u32 %v3944, %v3945
      %v3947 = vsel %vm934, %v3942, %v3946
      %v3948 = vrot.slane %v3683, 1
      %v3949 = vrot.slane %v3679, 2
      %v3950 = vor.u32 %v3948, %v3949
      %v3951 = vsel %vm934, %v3946, %v3950
      %v3952 = vrot.slane %v3691, 1
      %v3953 = vrot.slane %v3687, 2
      %v3954 = vor.u32 %v3952, %v3953
      %v3955 = vsel %vm934, %v3950, %v3954
      %v3956 = vrot.slane %v3699, 1
      %v3957 = vrot.slane %v3695, 2
      %v3958 = vor.u32 %v3956, %v3957
      %v3959 = vsel %vm934, %v3954, %v3958
      %v3960 = vrot.slane %v3707, 1
      %v3961 = vrot.slane %v3703, 2
      %v3962 = vor.u32 %v3960, %v3961
      %v3963 = vsel %vm934, %v3958, %v3962
      %v3964 = vrot.slane %v3715, 1
      %v3965 = vrot.slane %v3711, 2
      %v3966 = vor.u32 %v3964, %v3965
      %v3967 = vsel %vm934, %v3962, %v3966
      %v3968 = vrot.slane %v3723, 1
      %v3969 = vrot.slane %v3719, 2
      %v3970 = vor.u32 %v3968, %v3969
      %v3971 = vsel %vm934, %v3966, %v3970
      %v3972 = vrot.slane %v3731, 1
      %v3973 = vrot.slane %v3727, 2
      %v3974 = vor.u32 %v3972, %v3973
      %v3975 = vsel %vm934, %v3970, %v3974
      %v3977 = vshrl.u32 %v3587, 16
      %v3979 = vrot.slane %v3977, 1
      %v3980 = vshll.u32 %v3587, 16
      %v3982 = vrot.slane %v3980, 2
      %v3983 = vor.u32 %v3979, %v3982
      %v3984 = vsel %vm934, %v3974, %v3983
      %v3986 = vshrl.u32 %v3588, 16
      %v3988 = vrot.slane %v3986, 1
      %v3989 = vshll.u32 %v3588, 16
      %v3991 = vrot.slane %v3989, 2
      %v3992 = vor.u32 %v3988, %v3991
      %v3993 = vsel %vm934, %v3983, %v3992
      %v3994 = vrot.slane %v3569, 2
      %v3995 = vrot.slane %v3570, 2
      %v3996 = vsel %vm1056, %v3994, %v3995
      %v3997 = vrot.slane %v3571, 2
      %v3998 = vsel %vm1056, %v3995, %v3997
      %v3999 = vrot.slane %v3572, 2
      %v4000 = vsel %vm1056, %v3997, %v3999
      %v4001 = vrot.slane %v3573, 2
      %v4002 = vsel %vm1056, %v3999, %v4001
      %v4003 = vrot.slane %v3574, 2
      %v4004 = vsel %vm1056, %v4001, %v4003
      %v4005 = vrot.slane %v3575, 2
      %v4006 = vsel %vm1056, %v4003, %v4005
      %v4007 = vrot.slane %v3576, 2
      %v4008 = vsel %vm1056, %v4005, %v4007
      %v4009 = vrot.slane %v3577, 2
      %v4010 = vsel %vm1056, %v4007, %v4009
      %v4011 = vrot.slane %v3578, 2
      %v4012 = vsel %vm1056, %v4009, %v4011
      %v4013 = vrot.slane %v3579, 2
      %v4014 = vsel %vm1056, %v4011, %v4013
      %v4015 = vrot.slane %v3580, 2
      %v4016 = vsel %vm1056, %v4013, %v4015
      %v4017 = vrot.slane %v3581, 2
      %v4018 = vsel %vm1056, %v4015, %v4017
      %v4019 = vrot.slane %v3582, 2
      %v4020 = vsel %vm1056, %v4017, %v4019
      %v4021 = vrot.slane %v3583, 2
      %v4022 = vsel %vm1056, %v4019, %v4021
      %v4023 = vrot.slane %v3584, 2
      %v4024 = vsel %vm1056, %v4021, %v4023
      %v4025 = vrot.slane %v3585, 2
      %v4026 = vsel %vm1056, %v4023, %v4025
      %v4027 = vrot.slane %v3587, 2
      %v4028 = vsel %vm1056, %v4025, %v4027
      %v4029 = vrot.slane %v3588, 2
      %v4030 = vsel %vm1056, %v4027, %v4029
      %4031 = vrot.lane.b32.xlu0 %v3996, 32
      %v4032 = vpop.permute.xlu0 %4031
      %4033 = vrot.lane.b32.xlu0 %v3998, 32
      %v4034 = vpop.permute.xlu0 %4033
      %4035 = vrot.lane.b32.xlu0 %v4000, 32
      %v4036 = vpop.permute.xlu0 %4035
      %4037 = vrot.lane.b32.xlu0 %v4002, 32
      %v4038 = vpop.permute.xlu0 %4037
      %4039 = vrot.lane.b32.xlu0 %v4004, 32
      %v4040 = vpop.permute.xlu0 %4039
      %4041 = vrot.lane.b32.xlu0 %v4006, 32
      %v4042 = vpop.permute.xlu0 %4041
      %4043 = vrot.lane.b32.xlu0 %v4008, 32
      %v4044 = vpop.permute.xlu0 %4043
      %4045 = vrot.lane.b32.xlu0 %v4010, 32
      %v4046 = vpop.permute.xlu0 %4045
      %4047 = vrot.lane.b32.xlu0 %v4012, 32
      %v4048 = vpop.permute.xlu0 %4047
      %4049 = vrot.lane.b32.xlu0 %v4014, 32
      %v4050 = vpop.permute.xlu0 %4049
      %4051 = vrot.lane.b32.xlu0 %v4016, 32
      %v4052 = vpop.permute.xlu0 %4051
      %4053 = vrot.lane.b32.xlu0 %v4018, 32
      %v4054 = vpop.permute.xlu0 %4053
      %4055 = vrot.lane.b32.xlu0 %v4020, 32
      %v4056 = vpop.permute.xlu0 %4055
      %4057 = vrot.lane.b32.xlu0 %v4022, 32
      %v4058 = vpop.permute.xlu0 %4057
      %4059 = vrot.lane.b32.xlu0 %v4024, 32
      %v4060 = vpop.permute.xlu0 %4059
      %4061 = vrot.lane.b32.xlu0 %v4026, 32
      %v4062 = vpop.permute.xlu0 %4061
      %4063 = vrot.lane.b32.xlu0 %v4028, 32
      %v4064 = vpop.permute.xlu0 %4063
      %4065 = vrot.lane.b32.xlu0 %v4030, 32
      %v4066 = vpop.permute.xlu0 %4065
      %v4069 = vrot.slane %v3589, 2
      %v4070 = vsel %vm1056, %v4027, %v4069
      %v4071 = vrot.slane %v3590, 2
      %v4072 = vsel %vm1056, %v4069, %v4071
      %4073 = vrot.lane.b32.xlu0 %v3998, 64
      %v4074 = vpop.permute.xlu0 %4073
      %4075 = vrot.lane.b32.xlu0 %v4000, 64
      %v4076 = vpop.permute.xlu0 %4075
      %4077 = vrot.lane.b32.xlu0 %v4002, 64
      %v4078 = vpop.permute.xlu0 %4077
      %4079 = vrot.lane.b32.xlu0 %v4004, 64
      %v4080 = vpop.permute.xlu0 %4079
      %4081 = vrot.lane.b32.xlu0 %v4006, 64
      %v4082 = vpop.permute.xlu0 %4081
      %4083 = vrot.lane.b32.xlu0 %v4008, 64
      %v4084 = vpop.permute.xlu0 %4083
      %4085 = vrot.lane.b32.xlu0 %v4010, 64
      %v4086 = vpop.permute.xlu0 %4085
      %4087 = vrot.lane.b32.xlu0 %v4012, 64
      %v4088 = vpop.permute.xlu0 %4087
      %4089 = vrot.lane.b32.xlu0 %v4014, 64
      %v4090 = vpop.permute.xlu0 %4089
      %4091 = vrot.lane.b32.xlu0 %v4016, 64
      %v4092 = vpop.permute.xlu0 %4091
      %4093 = vrot.lane.b32.xlu0 %v4018, 64
      %v4094 = vpop.permute.xlu0 %4093
      %4095 = vrot.lane.b32.xlu0 %v4020, 64
      %v4096 = vpop.permute.xlu0 %4095
      %4097 = vrot.lane.b32.xlu0 %v4022, 64
      %v4098 = vpop.permute.xlu0 %4097
      %4099 = vrot.lane.b32.xlu0 %v4024, 64
      %v4100 = vpop.permute.xlu0 %4099
      %4101 = vrot.lane.b32.xlu0 %v4026, 64
      %v4102 = vpop.permute.xlu0 %4101
      %4103 = vrot.lane.b32.xlu0 %v4028, 64
      %v4104 = vpop.permute.xlu0 %4103
      %4105 = vrot.lane.b32.xlu0 %v4070, 64
      %v4106 = vpop.permute.xlu0 %4105
      %4107 = vrot.lane.b32.xlu0 %v4072, 64
      %v4108 = vpop.permute.xlu0 %4107
      %v4109 = vrot.slane %v3611, 2
      %v4110 = vrot.slane %v3607, 3
      %v4111 = vor.u32 %v4109, %v4110
      %v4112 = vrot.slane %v3619, 2
      %v4113 = vrot.slane %v3615, 3
      %v4114 = vor.u32 %v4112, %v4113
      %v4115 = vsel %vm1172, %v4111, %v4114
      %v4116 = vrot.slane %v3627, 2
      %v4117 = vrot.slane %v3623, 3
      %v4118 = vor.u32 %v4116, %v4117
      %v4119 = vsel %vm1172, %v4114, %v4118
      %v4120 = vrot.slane %v3635, 2
      %v4121 = vrot.slane %v3631, 3
      %v4122 = vor.u32 %v4120, %v4121
      %v4123 = vsel %vm1172, %v4118, %v4122
      %v4124 = vrot.slane %v3643, 2
      %v4125 = vrot.slane %v3639, 3
      %v4126 = vor.u32 %v4124, %v4125
      %v4127 = vsel %vm1172, %v4122, %v4126
      %v4128 = vrot.slane %v3651, 2
      %v4129 = vrot.slane %v3647, 3
      %v4130 = vor.u32 %v4128, %v4129
      %v4131 = vsel %vm1172, %v4126, %v4130
      %v4132 = vrot.slane %v3659, 2
      %v4133 = vrot.slane %v3655, 3
      %v4134 = vor.u32 %v4132, %v4133
      %v4135 = vsel %vm1172, %v4130, %v4134
      %v4136 = vrot.slane %v3667, 2
      %v4137 = vrot.slane %v3663, 3
      %v4138 = vor.u32 %v4136, %v4137
      %v4139 = vsel %vm1172, %v4134, %v4138
      %v4140 = vrot.slane %v3675, 2
      %v4141 = vrot.slane %v3671, 3
      %v4142 = vor.u32 %v4140, %v4141
      %v4143 = vsel %vm1172, %v4138, %v4142
      %v4144 = vrot.slane %v3683, 2
      %v4145 = vrot.slane %v3679, 3
      %v4146 = vor.u32 %v4144, %v4145
      %v4147 = vsel %vm1172, %v4142, %v4146
      %v4148 = vrot.slane %v3691, 2
      %v4149 = vrot.slane %v3687, 3
      %v4150 = vor.u32 %v4148, %v4149
      %v4151 = vsel %vm1172, %v4146, %v4150
      %v4152 = vrot.slane %v3699, 2
      %v4153 = vrot.slane %v3695, 3
      %v4154 = vor.u32 %v4152, %v4153
      %v4155 = vsel %vm1172, %v4150, %v4154
      %v4156 = vrot.slane %v3707, 2
      %v4157 = vrot.slane %v3703, 3
      %v4158 = vor.u32 %v4156, %v4157
      %v4159 = vsel %vm1172, %v4154, %v4158
      %v4160 = vrot.slane %v3715, 2
      %v4161 = vrot.slane %v3711, 3
      %v4162 = vor.u32 %v4160, %v4161
      %v4163 = vsel %vm1172, %v4158, %v4162
      %v4164 = vrot.slane %v3723, 2
      %v4165 = vrot.slane %v3719, 3
      %v4166 = vor.u32 %v4164, %v4165
      %v4167 = vsel %vm1172, %v4162, %v4166
      %v4168 = vrot.slane %v3731, 2
      %v4169 = vrot.slane %v3727, 3
      %v4170 = vor.u32 %v4168, %v4169
      %v4171 = vsel %vm1172, %v4166, %v4170
      %v4172 = vrot.slane %v3977, 2
      %v4173 = vrot.slane %v3980, 3
      %v4174 = vor.u32 %v4172, %v4173
      %v4175 = vsel %vm1172, %v4170, %v4174
      %v4177 = vshrl.u32 %v3589, 16
      %v4179 = vrot.slane %v4177, 2
      %v4180 = vshll.u32 %v3589, 16
      %v4182 = vrot.slane %v4180, 3
      %v4183 = vor.u32 %v4179, %v4182
      %v4184 = vsel %vm1172, %v4174, %v4183
      %v4186 = vshrl.u32 %v3590, 16
      %v4188 = vrot.slane %v4186, 2
      %v4189 = vshll.u32 %v3590, 16
      %v4191 = vrot.slane %v4189, 3
      %v4192 = vor.u32 %v4188, %v4191
      %v4193 = vsel %vm1172, %v4183, %v4192
      %4194 = vrot.lane.b32.xlu0 %v4115, 96
      %v4195 = vpop.permute.xlu0 %4194
      %4196 = vrot.lane.b32.xlu0 %v4119, 96
      %v4197 = vpop.permute.xlu0 %4196
      %4198 = vrot.lane.b32.xlu0 %v4123, 96
      %v4199 = vpop.permute.xlu0 %4198
      %4200 = vrot.lane.b32.xlu0 %v4127, 96
      %v4201 = vpop.permute.xlu0 %4200
      %4202 = vrot.lane.b32.xlu0 %v4131, 96
      %v4203 = vpop.permute.xlu0 %4202
      %4204 = vrot.lane.b32.xlu0 %v4135, 96
      %v4205 = vpop.permute.xlu0 %4204
      %4206 = vrot.lane.b32.xlu0 %v4139, 96
      %v4207 = vpop.permute.xlu0 %4206
      %4208 = vrot.lane.b32.xlu0 %v4143, 96
      %v4209 = vpop.permute.xlu0 %4208
      %4210 = vrot.lane.b32.xlu0 %v4147, 96
      %v4211 = vpop.permute.xlu0 %4210
      %4212 = vrot.lane.b32.xlu0 %v4151, 96
      %v4213 = vpop.permute.xlu0 %4212
      %4214 = vrot.lane.b32.xlu0 %v4155, 96
      %v4215 = vpop.permute.xlu0 %4214
      %4216 = vrot.lane.b32.xlu0 %v4159, 96
      %v4217 = vpop.permute.xlu0 %4216
      %4218 = vrot.lane.b32.xlu0 %v4163, 96
      %v4219 = vpop.permute.xlu0 %4218
      %4220 = vrot.lane.b32.xlu0 %v4167, 96
      %v4221 = vpop.permute.xlu0 %4220
      %4222 = vrot.lane.b32.xlu0 %v4171, 96
      %v4223 = vpop.permute.xlu0 %4222
      %4224 = vrot.lane.b32.xlu0 %v4175, 96
      %v4225 = vpop.permute.xlu0 %4224
      %4226 = vrot.lane.b32.xlu0 %v4184, 96
      %v4227 = vpop.permute.xlu0 %4226
      %4228 = vrot.lane.b32.xlu0 %v4193, 96
      %v4229 = vpop.permute.xlu0 %4228
      %v4230 = vrot.slane %v3570, 3
      %v4231 = vrot.slane %v3571, 3
      %v4232 = vsel %vm1294, %v4230, %v4231
      %v4233 = vrot.slane %v3572, 3
      %v4234 = vsel %vm1294, %v4231, %v4233
      %v4235 = vrot.slane %v3573, 3
      %v4236 = vsel %vm1294, %v4233, %v4235
      %v4237 = vrot.slane %v3574, 3
      %v4238 = vsel %vm1294, %v4235, %v4237
      %v4239 = vrot.slane %v3575, 3
      %v4240 = vsel %vm1294, %v4237, %v4239
      %v4241 = vrot.slane %v3576, 3
      %v4242 = vsel %vm1294, %v4239, %v4241
      %v4243 = vrot.slane %v3577, 3
      %v4244 = vsel %vm1294, %v4241, %v4243
      %v4245 = vrot.slane %v3578, 3
      %v4246 = vsel %vm1294, %v4243, %v4245
      %v4247 = vrot.slane %v3579, 3
      %v4248 = vsel %vm1294, %v4245, %v4247
      %v4249 = vrot.slane %v3580, 3
      %v4250 = vsel %vm1294, %v4247, %v4249
      %v4251 = vrot.slane %v3581, 3
      %v4252 = vsel %vm1294, %v4249, %v4251
      %v4253 = vrot.slane %v3582, 3
      %v4254 = vsel %vm1294, %v4251, %v4253
      %v4255 = vrot.slane %v3583, 3
      %v4256 = vsel %vm1294, %v4253, %v4255
      %v4257 = vrot.slane %v3584, 3
      %v4258 = vsel %vm1294, %v4255, %v4257
      %v4259 = vrot.slane %v3585, 3
      %v4260 = vsel %vm1294, %v4257, %v4259
      %v4261 = vrot.slane %v3587, 3
      %v4262 = vsel %vm1294, %v4259, %v4261
      %v4263 = vrot.slane %v3589, 3
      %v4264 = vsel %vm1294, %v4261, %v4263
      %v4265 = vrot.slane %v3590, 3
      %v4266 = vsel %vm1294, %v4263, %v4265
      %v4268 = vsel %vm1627, %v3568, %v3740
      %v4270 = vsel %vm1627, %v3569, %v3742
      %v4272 = vsel %vm1627, %v3570, %v3744
      %v4274 = vsel %vm1627, %v3571, %v3746
      %v4276 = vsel %vm1627, %v3572, %v3748
      %v4278 = vsel %vm1627, %v3573, %v3750
      %v4280 = vsel %vm1627, %v3574, %v3752
      %v4282 = vsel %vm1627, %v3575, %v3754
      %v4284 = vsel %vm1627, %v3576, %v3756
      %v4286 = vsel %vm1627, %v3577, %v3758
      %v4288 = vsel %vm1627, %v3578, %v3760
      %v4290 = vsel %vm1627, %v3579, %v3762
      %v4292 = vsel %vm1627, %v3580, %v3764
      %v4294 = vsel %vm1627, %v3581, %v3766
      %v4296 = vsel %vm1627, %v3582, %v3768
      %v4298 = vsel %vm1627, %v3583, %v3770
      %v4300 = vsel %vm1627, %v3584, %v3772
      %v4302 = vsel %vm1627, %v3585, %v3774
      %vm4303 = vcmask 523264
      %v4305 = vsel %vm4303, %v4268, %v3832
      %v4307 = vsel %vm4303, %v4270, %v3834
      %v4309 = vsel %vm4303, %v4272, %v3836
      %v4311 = vsel %vm4303, %v4274, %v3838
      %v4313 = vsel %vm4303, %v4276, %v3840
      %v4315 = vsel %vm4303, %v4278, %v3842
      %v4317 = vsel %vm4303, %v4280, %v3844
      %v4319 = vsel %vm4303, %v4282, %v3846
      %v4321 = vsel %vm4303, %v4284, %v3848
      %v4323 = vsel %vm4303, %v4286, %v3850
      %v4325 = vsel %vm4303, %v4288, %v3852
      %v4327 = vsel %vm4303, %v4290, %v3854
      %v4329 = vsel %vm4303, %v4292, %v3856
      %v4331 = vsel %vm4303, %v4294, %v3858
      %v4333 = vsel %vm4303, %v4296, %v3860
      %v4335 = vsel %vm4303, %v4298, %v3862
      %v4337 = vsel %vm4303, %v4300, %v3864
      %v4339 = vsel %vm4303, %v4302, %v3866
      %vm4340 = vcmask 785408
      %v4342 = vsel %vm4340, %v4305, %v3874
      %v4345 = vsel %vm4340, %v4307, %v3876
      %v4348 = vsel %vm4340, %v4309, %v3878
      %v4351 = vsel %vm4340, %v4311, %v3880
      %v4354 = vsel %vm4340, %v4313, %v3882
      %v4357 = vsel %vm4340, %v4315, %v3884
      %v4360 = vsel %vm4340, %v4317, %v3886
      %v4363 = vsel %vm4340, %v4319, %v3888
      %v4366 = vsel %vm4340, %v4321, %v3890
      %v4369 = vsel %vm4340, %v4323, %v3892
      %v4372 = vsel %vm4340, %v4325, %v3894
      %v4375 = vsel %vm4340, %v4327, %v3896
      %v4378 = vsel %vm4340, %v4329, %v3898
      %v4381 = vsel %vm4340, %v4331, %v3900
      %v4384 = vsel %vm4340, %v4333, %v3902
      %v4387 = vsel %vm4340, %v4335, %v3904
      %v4390 = vsel %vm4340, %v4337, %v3906
      %v4393 = vsel %vm4340, %v4339, %v3908
      %v4397 = vsel %vm1627, %v3915, %v4032
      %v4400 = vsel %vm1627, %v3919, %v4034
      %v4403 = vsel %vm1627, %v3923, %v4036
      %v4406 = vsel %vm1627, %v3927, %v4038
      %v4409 = vsel %vm1627, %v3931, %v4040
      %v4412 = vsel %vm1627, %v3935, %v4042
      %v4415 = vsel %vm1627, %v3939, %v4044
      %v4418 = vsel %vm1627, %v3943, %v4046
      %v4421 = vsel %vm1627, %v3947, %v4048
      %v4424 = vsel %vm1627, %v3951, %v4050
      %v4427 = vsel %vm1627, %v3955, %v4052
      %v4430 = vsel %vm1627, %v3959, %v4054
      %v4433 = vsel %vm1627, %v3963, %v4056
      %v4436 = vsel %vm1627, %v3967, %v4058
      %v4439 = vsel %vm1627, %v3971, %v4060
      %v4442 = vsel %vm1627, %v3975, %v4062
      %v4445 = vsel %vm1627, %v3984, %v4064
      %v4448 = vsel %vm1627, %v3993, %v4066
      %v4450 = vsel %vm4303, %v4397, %v4074
      %v4452 = vsel %vm4303, %v4400, %v4076
      %v4454 = vsel %vm4303, %v4403, %v4078
      %v4456 = vsel %vm4303, %v4406, %v4080
      %v4458 = vsel %vm4303, %v4409, %v4082
      %v4460 = vsel %vm4303, %v4412, %v4084
      %v4462 = vsel %vm4303, %v4415, %v4086
      %v4464 = vsel %vm4303, %v4418, %v4088
      %v4466 = vsel %vm4303, %v4421, %v4090
      %v4468 = vsel %vm4303, %v4424, %v4092
      %v4470 = vsel %vm4303, %v4427, %v4094
      %v4472 = vsel %vm4303, %v4430, %v4096
      %v4474 = vsel %vm4303, %v4433, %v4098
      %v4476 = vsel %vm4303, %v4436, %v4100
      %v4478 = vsel %vm4303, %v4439, %v4102
      %v4480 = vsel %vm4303, %v4442, %v4104
      %v4482 = vsel %vm4303, %v4445, %v4106
      %v4484 = vsel %vm4303, %v4448, %v4108
      %v4486 = vsel %vm4340, %v4450, %v4195
      %v4489 = vsel %vm4340, %v4452, %v4197
      %v4492 = vsel %vm4340, %v4454, %v4199
      %v4495 = vsel %vm4340, %v4456, %v4201
      %v4498 = vsel %vm4340, %v4458, %v4203
      %v4501 = vsel %vm4340, %v4460, %v4205
      %v4504 = vsel %vm4340, %v4462, %v4207
      %v4507 = vsel %vm4340, %v4464, %v4209
      %v4510 = vsel %vm4340, %v4466, %v4211
      %v4513 = vsel %vm4340, %v4468, %v4213
      %v4516 = vsel %vm4340, %v4470, %v4215
      %v4519 = vsel %vm4340, %v4472, %v4217
      %v4522 = vsel %vm4340, %v4474, %v4219
      %v4525 = vsel %vm4340, %v4476, %v4221
      %v4528 = vsel %vm4340, %v4478, %v4223
      %v4531 = vsel %vm4340, %v4480, %v4225
      %v4534 = vsel %vm4340, %v4482, %v4227
      %v4537 = vsel %vm4340, %v4484, %v4229
      %v4539 = vld [vmem:[%s4] sm:$0xf]
      %v4540 = vld [vmem:[%s4 + $0x4] sm:$0xf]
      %v4541 = vld [vmem:[%s4 + $0x8] sm:$0xf]
      %v4542 = vld [vmem:[%s4 + $0xc] sm:$0xf]
      %v4543 = vld [vmem:[%s4 + $0x10] sm:$0xf]
      %v4544 = vld [vmem:[%s4 + $0x14] sm:$0xf]
      %v4545 = vld [vmem:[%s4 + $0x18] sm:$0xf]
      %v4546 = vld [vmem:[%s4 + $0x1c] sm:$0xf]
      %v4547 = vld [vmem:[%s4 + $0x20] sm:$0xf]
      %v4548 = vld [vmem:[%s4 + $0x24] sm:$0xf]
      %v4549 = vld [vmem:[%s4 + $0x28] sm:$0xf]
      %v4550 = vld [vmem:[%s4 + $0x2c] sm:$0xf]
      %v4551 = vld [vmem:[%s4 + $0x30] sm:$0xf]
      %v4552 = vld [vmem:[%s4 + $0x34] sm:$0xf]
      %v4553 = vld [vmem:[%s4 + $0x38] sm:$0xf]
      %v4554 = vld [vmem:[%s4 + $0x3c] sm:$0xf]
      %v4555 = vld [vmem:[%s4 + $0x40] sm:$0xf]
      %v4556 = vld [vmem:[%s4 + $0x44] sm:$0xf]
      %v4557 = vld [vmem:[%s4 + $0x48] sm:$0xf]
      %v4558 = vld [vmem:[%s4 + $0x4c] sm:$0xf]
      %v4559 = vld [vmem:[%s4 + $0x50] sm:$0xf]
      %v4560 = vld [vmem:[%s4 + $0x54] sm:$0xf]
      %v4561 = vld [vmem:[%s4 + $0x58] sm:$0xf]
      %v4562 = vld [vmem:[%s4 + $0x5c] sm:$0xf]
      %v4563 = vld [vmem:[%s4 + $0x60] sm:$0xf]
      %v4564 = vld [vmem:[%s4 + $0x64] sm:$0xf]
      %v4565 = vld [vmem:[%s4 + $0x68] sm:$0xf]
      %v4566 = vld [vmem:[%s4 + $0x6c] sm:$0xf]
      %v4567 = vld [vmem:[%s4 + $0x70] sm:$0xf]
      %v4568 = vld [vmem:[%s4 + $0x74] sm:$0xf]
      %v4569 = vld [vmem:[%s4 + $0x78] sm:$0xf]
      %v4570 = vld [vmem:[%s4 + $0x7c] sm:$0xf]
      %v4571 = vld [vmem:[%s4 + $0x80] sm:$0xf]
      %v4572 = vld [vmem:[%s4 + $0x84] sm:$0xf]
      %v4573 = vld [vmem:[%s4 + $0x88] sm:$0xf]
      %v4574 = vld [vmem:[%s4 + $0x8c] sm:$0xf]
      %v4611 = vunpack.c.l.b16 %v4539
      %v4612 = vunpack.c.l.b16 %v4540
      %v4613 = vunpack.c.l.b16 %v4541
      %v4614 = vunpack.c.l.b16 %v4542
      %v4615 = vunpack.c.l.b16 %v4543
      %v4616 = vunpack.c.l.b16 %v4544
      %v4617 = vunpack.c.l.b16 %v4545
      %v4618 = vunpack.c.l.b16 %v4546
      %v4619 = vunpack.c.l.b16 %v4547
      %v4620 = vunpack.c.l.b16 %v4548
      %v4621 = vunpack.c.l.b16 %v4549
      %v4622 = vunpack.c.l.b16 %v4550
      %v4623 = vunpack.c.l.b16 %v4551
      %v4624 = vunpack.c.l.b16 %v4552
      %v4625 = vunpack.c.l.b16 %v4553
      %v4626 = vunpack.c.l.b16 %v4554
      %v4627 = vunpack.c.l.b16 %v4555
      %v4628 = vunpack.c.l.b16 %v4556
      %v4629 = vunpack.c.l.b16 %v4557
      %v4630 = vunpack.c.l.b16 %v4558
      %v4631 = vunpack.c.l.b16 %v4559
      %v4632 = vunpack.c.l.b16 %v4560
      %v4633 = vunpack.c.l.b16 %v4561
      %v4634 = vunpack.c.l.b16 %v4562
      %v4635 = vunpack.c.l.b16 %v4563
      %v4636 = vunpack.c.l.b16 %v4564
      %v4637 = vunpack.c.l.b16 %v4565
      %v4638 = vunpack.c.l.b16 %v4566
      %v4639 = vunpack.c.l.b16 %v4567
      %v4640 = vunpack.c.l.b16 %v4568
      %v4641 = vunpack.c.l.b16 %v4569
      %v4642 = vunpack.c.l.b16 %v4570
      %v4643 = vunpack.c.l.b16 %v4571
      %v4644 = vunpack.c.l.b16 %v4572
      %v4645 = vunpack.c.l.b16 %v4573
      %v4646 = vunpack.c.l.b16 %v4574
      %v4647 = vpack.c.b16 %v4612, %v4611
      %v4648 = vpack.c.b16 %v4614, %v4613
      %v4649 = vpack.c.b16 %v4616, %v4615
      %v4650 = vpack.c.b16 %v4618, %v4617
      %v4651 = vpack.c.b16 %v4620, %v4619
      %v4652 = vpack.c.b16 %v4622, %v4621
      %v4653 = vpack.c.b16 %v4624, %v4623
      %v4654 = vpack.c.b16 %v4626, %v4625
      %v4655 = vpack.c.b16 %v4628, %v4627
      %v4656 = vpack.c.b16 %v4630, %v4629
      %v4657 = vpack.c.b16 %v4632, %v4631
      %v4658 = vpack.c.b16 %v4634, %v4633
      %v4659 = vpack.c.b16 %v4636, %v4635
      %v4660 = vpack.c.b16 %v4638, %v4637
      %v4661 = vpack.c.b16 %v4640, %v4639
      %v4662 = vpack.c.b16 %v4642, %v4641
      %v4663 = vpack.c.b16 %v4644, %v4643
      %v4664 = vpack.c.b16 %v4646, %v4645
      %v4684 = vsel %vm1627, %v4232, 0
      %v4687 = vsel %vm1627, %v4234, 0
      %v4690 = vsel %vm1627, %v4236, 0
      %v4693 = vsel %vm1627, %v4238, 0
      %v4696 = vsel %vm1627, %v4240, 0
      %v4699 = vsel %vm1627, %v4242, 0
      %v4702 = vsel %vm1627, %v4244, 0
      %v4705 = vsel %vm1627, %v4246, 0
      %v4708 = vsel %vm1627, %v4248, 0
      %v4711 = vsel %vm1627, %v4250, 0
      %v4714 = vsel %vm1627, %v4252, 0
      %v4717 = vsel %vm1627, %v4254, 0
      %v4720 = vsel %vm1627, %v4256, 0
      %v4723 = vsel %vm1627, %v4258, 0
      %v4726 = vsel %vm1627, %v4260, 0
      %v4729 = vsel %vm1627, %v4262, 0
      %v4732 = vsel %vm1627, %v4264, 0
      %v4735 = vsel %vm1627, %v4266, 0
      %4737 = vmatprep.subr.bf16.mxu0 0
      %4738 = vmatpush1.bf16.msra.mxu0 %v4647
      %4739 = vmatprep.subr.bf16.mxu0 0
      %4740 = vmatpush1.bf16.msra.mxu0 %v4648
      %4741 = vmatprep.subr.bf16.mxu0 0
      %4742 = vmatpush1.bf16.msra.mxu0 %v4649
      %4743 = vmatprep.subr.bf16.mxu0 0
      %4744 = vmatpush1.bf16.msra.mxu0 %v4650
      %4745 = vmatprep.subr.bf16.mxu0 0
      %4746 = vmatpush1.bf16.msra.mxu0 %v4651
      %4747 = vmatprep.subr.bf16.mxu0 0
      %4748 = vmatpush1.bf16.msra.mxu0 %v4652
      %4749 = vmatprep.subr.bf16.mxu0 0
      %4750 = vmatpush1.bf16.msra.mxu0 %v4653
      %4751 = vmatprep.subr.bf16.mxu0 0
      %4752 = vmatpush1.bf16.msra.mxu0 %v4654
      %4753 = vmatprep.subr.bf16.mxu0 0
      %4754 = vmatpush1.bf16.msra.mxu0 %v4655
      %4755 = vmatprep.subr.bf16.mxu0 0
      %4756 = vmatpush1.bf16.msra.mxu0 %v4656
      %4757 = vmatprep.subr.bf16.mxu0 0
      %4758 = vmatpush1.bf16.msra.mxu0 %v4657
      %4759 = vmatprep.subr.bf16.mxu0 0
      %4760 = vmatpush1.bf16.msra.mxu0 %v4658
      %4761 = vmatprep.subr.bf16.mxu0 0
      %4762 = vmatpush1.bf16.msra.mxu0 %v4659
      %4763 = vmatprep.subr.bf16.mxu0 0
      %4764 = vmatpush1.bf16.msra.mxu0 %v4660
      %4765 = vmatprep.subr.bf16.mxu0 0
      %4766 = vmatpush1.bf16.msra.mxu0 %v4661
      %4767 = vmatprep.subr.bf16.mxu0 0
      %4768 = vmatpush1.bf16.msra.mxu0 %v4662
      %4769 = vmatprep.mubr.bf16.mxu0 %v4486
      %4770 = vmatmul.mubr.bf16.gmra.mrb[0].mxu0 %v4342
      %v4771 = vpop.f32.mrb[0].mxu0
      %v4772 = vadd.f32 0.0, %v4771
      %v4773 = vpop.f32.mrb[0].mxu0
      %v4774 = vpop.f32.mrb[0].mxu0
      %v4775 = vadd.f32 0.0, %v4774
      %v4776 = vpop.f32.mrb[0].mxu0
      %4777 = vmatprep.mubr.bf16.mxu0 %v4489
      %4778 = vmatmul.mubr.bf16.gmra.mrb[0].mxu0 %v4345
      %v4779 = vpop.f32.mrb[0].mxu0
      %v4780 = vadd.f32 0.0, %v4779
      %v4781 = vpop.f32.mrb[0].mxu0
      %v4782 = vpop.f32.mrb[0].mxu0
      %v4783 = vadd.f32 0.0, %v4782
      %v4784 = vpop.f32.mrb[0].mxu0
      %4785 = vmatprep.mubr.bf16.mxu0 %v4492
      %4786 = vmatmul.mubr.bf16.gmra.mrb[0].mxu0 %v4348
      %v4787 = vpop.f32.mrb[0].mxu0
      %v4788 = vadd.f32 0.0, %v4787
      %v4789 = vpop.f32.mrb[0].mxu0
      %v4790 = vpop.f32.mrb[0].mxu0
      %v4791 = vadd.f32 0.0, %v4790
      %v4792 = vpop.f32.mrb[0].mxu0
      %4793 = vmatprep.mubr.bf16.mxu0 %v4495
      %4794 = vmatmul.mubr.bf16.gmra.mrb[0].mxu0 %v4351
      %v4795 = vpop.f32.mrb[0].mxu0
      %v4796 = vadd.f32 0.0, %v4795
      %v4797 = vpop.f32.mrb[0].mxu0
      %v4798 = vpop.f32.mrb[0].mxu0
      %v4799 = vadd.f32 0.0, %v4798
      %v4800 = vpop.f32.mrb[0].mxu0
      %4801 = vmatprep.mubr.bf16.mxu0 %v4498
      %4802 = vmatmul.mubr.bf16.gmra.mrb[0].mxu0 %v4354
      %v4803 = vpop.f32.mrb[0].mxu0
      %v4804 = vadd.f32 0.0, %v4803
      %v4805 = vpop.f32.mrb[0].mxu0
      %v4806 = vpop.f32.mrb[0].mxu0
      %v4807 = vadd.f32 0.0, %v4806
      %v4808 = vpop.f32.mrb[0].mxu0
      %4809 = vmatprep.mubr.bf16.mxu0 %v4501
      %4810 = vmatmul.mubr.bf16.gmra.mrb[0].mxu0 %v4357
      %v4811 = vpop.f32.mrb[0].mxu0
      %v4812 = vadd.f32 0.0, %v4811
      %v4813 = vpop.f32.mrb[0].mxu0
      %v4814 = vpop.f32.mrb[0].mxu0
      %v4815 = vadd.f32 0.0, %v4814
      %v4816 = vpop.f32.mrb[0].mxu0
      %4817 = vmatprep.mubr.bf16.mxu0 %v4504
      %4818 = vmatmul.mubr.bf16.gmra.mrb[0].mxu0 %v4360
      %v4819 = vpop.f32.mrb[0].mxu0
      %v4820 = vadd.f32 0.0, %v4819
      %v4821 = vpop.f32.mrb[0].mxu0
      %v4822 = vpop.f32.mrb[0].mxu0
      %v4823 = vadd.f32 0.0, %v4822
      %v4824 = vpop.f32.mrb[0].mxu0
      %4825 = vmatprep.mubr.bf16.mxu0 %v4507
      %4826 = vmatmul.mubr.bf16.gmra.mrb[0].mxu0 %v4363
      %v4827 = vpop.f32.mrb[0].mxu0
      %v4828 = vadd.f32 0.0, %v4827
      %v4829 = vpop.f32.mrb[0].mxu0
      %v4830 = vpop.f32.mrb[0].mxu0
      %v4831 = vadd.f32 0.0, %v4830
      %v4832 = vpop.f32.mrb[0].mxu0
      %4833 = vmatprep.mubr.bf16.mxu0 %v4510
      %4834 = vmatmul.mubr.bf16.gmra.mrb[0].mxu0 %v4366
      %v4835 = vpop.f32.mrb[0].mxu0
      %v4836 = vadd.f32 0.0, %v4835
      %v4837 = vpop.f32.mrb[0].mxu0
      %v4838 = vpop.f32.mrb[0].mxu0
      %v4839 = vadd.f32 0.0, %v4838
      %v4840 = vpop.f32.mrb[0].mxu0
      %4841 = vmatprep.mubr.bf16.mxu0 %v4513
      %4842 = vmatmul.mubr.bf16.gmra.mrb[0].mxu0 %v4369
      %v4843 = vpop.f32.mrb[0].mxu0
      %v4844 = vadd.f32 0.0, %v4843
      %v4845 = vpop.f32.mrb[0].mxu0
      %v4846 = vpop.f32.mrb[0].mxu0
      %v4847 = vadd.f32 0.0, %v4846
      %v4848 = vpop.f32.mrb[0].mxu0
      %4849 = vmatprep.mubr.bf16.mxu0 %v4516
      %4850 = vmatmul.mubr.bf16.gmra.mrb[0].mxu0 %v4372
      %v4851 = vpop.f32.mrb[0].mxu0
      %v4852 = vadd.f32 0.0, %v4851
      %v4853 = vpop.f32.mrb[0].mxu0
      %v4854 = vpop.f32.mrb[0].mxu0
      %v4855 = vadd.f32 0.0, %v4854
      %v4856 = vpop.f32.mrb[0].mxu0
      %4857 = vmatprep.mubr.bf16.mxu0 %v4519
      %4858 = vmatmul.mubr.bf16.gmra.mrb[0].mxu0 %v4375
      %v4859 = vpop.f32.mrb[0].mxu0
      %v4860 = vadd.f32 0.0, %v4859
      %v4861 = vpop.f32.mrb[0].mxu0
      %v4862 = vpop.f32.mrb[0].mxu0
      %v4863 = vadd.f32 0.0, %v4862
      %v4864 = vpop.f32.mrb[0].mxu0
      %4865 = vmatprep.mubr.bf16.mxu0 %v4522
      %4866 = vmatmul.mubr.bf16.gmra.mrb[0].mxu0 %v4378
      %v4867 = vpop.f32.mrb[0].mxu0
      %v4868 = vadd.f32 0.0, %v4867
      %v4869 = vpop.f32.mrb[0].mxu0
      %v4870 = vpop.f32.mrb[0].mxu0
      %v4871 = vadd.f32 0.0, %v4870
      %v4872 = vpop.f32.mrb[0].mxu0
      %4873 = vmatprep.mubr.bf16.mxu0 %v4525
      %4874 = vmatmul.mubr.bf16.gmra.mrb[0].mxu0 %v4381
      %v4875 = vpop.f32.mrb[0].mxu0
      %v4876 = vadd.f32 0.0, %v4875
      %v4877 = vpop.f32.mrb[0].mxu0
      %v4878 = vpop.f32.mrb[0].mxu0
      %v4879 = vadd.f32 0.0, %v4878
      %v4880 = vpop.f32.mrb[0].mxu0
      %4881 = vmatprep.mubr.bf16.mxu0 %v4528
      %4882 = vmatmul.mubr.bf16.gmra.mrb[0].mxu0 %v4384
      %v4883 = vpop.f32.mrb[0].mxu0
      %v4884 = vadd.f32 0.0, %v4883
      %v4885 = vpop.f32.mrb[0].mxu0
      %v4886 = vpop.f32.mrb[0].mxu0
      %v4887 = vadd.f32 0.0, %v4886
      %v4888 = vpop.f32.mrb[0].mxu0
      %4889 = vmatprep.mubr.bf16.mxu0 %v4531
      %4890 = vmatmul.mubr.bf16.gmra.mrb[0].mxu0 %v4387
      %v4891 = vpop.f32.mrb[0].mxu0
      %v4892 = vadd.f32 0.0, %v4891
      %v4893 = vpop.f32.mrb[0].mxu0
      %v4894 = vpop.f32.mrb[0].mxu0
      %v4895 = vadd.f32 0.0, %v4894
      %v4896 = vpop.f32.mrb[0].mxu0
      %4897 = vmatprep.mubr.bf16.mxu0 %v4534
      %4898 = vmatmul.mubr.bf16.gmra.mrb[0].mxu0 %v4390
      %v4899 = vpop.f32.mrb[0].mxu0
      %v4900 = vadd.f32 0.0, %v4899
      %v4901 = vpop.f32.mrb[0].mxu0
      %v4902 = vpop.f32.mrb[0].mxu0
      %v4903 = vadd.f32 0.0, %v4902
      %v4904 = vpop.f32.mrb[0].mxu0
      %4905 = vmatprep.mubr.bf16.mxu0 %v4537
      %4906 = vmatmul.mubr.bf16.gmra.mrb[0].mxu0 %v4393
      %v4907 = vpop.f32.mrb[0].mxu0
      %v4908 = vadd.f32 0.0, %v4907
      %v4909 = vpop.f32.mrb[0].mxu0
      %v4910 = vpop.f32.mrb[0].mxu0
      %v4911 = vadd.f32 0.0, %v4910
      %v4912 = vpop.f32.mrb[0].mxu0
      %4913 = vdwg.mxu0
      %4914 = vmatprep.subr.bf16.mxu0 0
      %4915 = vmatpush1.bf16.msra.mxu0 %v4663
      %4916 = vmatprep.subr.bf16.mxu0 0
      %4917 = vmatpush1.bf16.msra.mxu0 %v4664
      %4918 = vmatprep.subr.bf16.mxu0 0
      %4919 = vmatpush1.bf16.msra.mxu0 0
      %4920 = vmatprep.subr.bf16.mxu0 0
      %4921 = vmatpush1.bf16.msra.mxu0 0
      %4922 = vmatprep.subr.bf16.mxu0 0
      %4923 = vmatpush1.bf16.msra.mxu0 0
      %4924 = vmatprep.subr.bf16.mxu0 0
      %4925 = vmatpush1.bf16.msra.mxu0 0
      %4926 = vmatprep.subr.bf16.mxu0 0
      %4927 = vmatpush1.bf16.msra.mxu0 0
      %4928 = vmatprep.subr.bf16.mxu0 0
      %4929 = vmatpush1.bf16.msra.mxu0 0
      %4930 = vmatprep.subr.bf16.mxu0 0
      %4931 = vmatpush1.bf16.msra.mxu0 0
      %4932 = vmatprep.subr.bf16.mxu0 0
      %4933 = vmatpush1.bf16.msra.mxu0 0
      %4934 = vmatprep.subr.bf16.mxu0 0
      %4935 = vmatpush1.bf16.msra.mxu0 0
      %4936 = vmatprep.subr.bf16.mxu0 0
      %4937 = vmatpush1.bf16.msra.mxu0 0
      %4938 = vmatprep.subr.bf16.mxu0 0
      %4939 = vmatpush1.bf16.msra.mxu0 0
      %4940 = vmatprep.subr.bf16.mxu0 0
      %4941 = vmatpush1.bf16.msra.mxu0 0
      %4942 = vmatprep.subr.bf16.mxu0 0
      %4943 = vmatpush1.bf16.msra.mxu0 0
      %4944 = vmatprep.subr.bf16.mxu0 0
      %4945 = vmatpush1.bf16.msra.mxu0 0
      %4946 = vmatprep.mubr.bf16.mxu0 0
      %4947 = vmatmul.mubr.bf16.gmra.mrb[0].mxu0 %v4684
      %v4948 = vpop.f32.mrb[0].mxu0
      %v4949 = vadd.f32 %v4772, %v4948
      %v4950 = vpop.f32.mrb[0].mxu0
      %v4951 = vpop.f32.mrb[0].mxu0
      %v4952 = vadd.f32 %v4775, %v4951
      %v4953 = vpop.f32.mrb[0].mxu0
      %4954 = vmatprep.mubr.bf16.mxu0 0
      %4955 = vmatmul.mubr.bf16.gmra.mrb[0].mxu0 %v4687
      %v4956 = vpop.f32.mrb[0].mxu0
      %v4957 = vadd.f32 %v4780, %v4956
      %v4958 = vpop.f32.mrb[0].mxu0
      %v4959 = vpop.f32.mrb[0].mxu0
      %v4960 = vadd.f32 %v4783, %v4959
      %v4961 = vpop.f32.mrb[0].mxu0
      %4962 = vmatprep.mubr.bf16.mxu0 0
      %4963 = vmatmul.mubr.bf16.gmra.mrb[0].mxu0 %v4690
      %v4964 = vpop.f32.mrb[0].mxu0
      %v4965 = vadd.f32 %v4788, %v4964
      %v4966 = vpop.f32.mrb[0].mxu0
      %v4967 = vpop.f32.mrb[0].mxu0
      %v4968 = vadd.f32 %v4791, %v4967
      %v4969 = vpop.f32.mrb[0].mxu0
      %4970 = vmatprep.mubr.bf16.mxu0 0
      %4971 = vmatmul.mubr.bf16.gmra.mrb[0].mxu0 %v4693
      %v4972 = vpop.f32.mrb[0].mxu0
      %v4973 = vadd.f32 %v4796, %v4972
      %v4974 = vpop.f32.mrb[0].mxu0
      %v4975 = vpop.f32.mrb[0].mxu0
      %v4976 = vadd.f32 %v4799, %v4975
      %v4977 = vpop.f32.mrb[0].mxu0
      %4978 = vmatprep.mubr.bf16.mxu0 0
      %4979 = vmatmul.mubr.bf16.gmra.mrb[0].mxu0 %v4696
      %v4980 = vpop.f32.mrb[0].mxu0
      %v4981 = vadd.f32 %v4804, %v4980
      %v4982 = vpop.f32.mrb[0].mxu0
      %v4983 = vpop.f32.mrb[0].mxu0
      %v4984 = vadd.f32 %v4807, %v4983
      %v4985 = vpop.f32.mrb[0].mxu0
      %4986 = vmatprep.mubr.bf16.mxu0 0
      %4987 = vmatmul.mubr.bf16.gmra.mrb[0].mxu0 %v4699
      %v4988 = vpop.f32.mrb[0].mxu0
      %v4989 = vadd.f32 %v4812, %v4988
      %v4990 = vpop.f32.mrb[0].mxu0
      %v4991 = vpop.f32.mrb[0].mxu0
      %v4992 = vadd.f32 %v4815, %v4991
      %v4993 = vpop.f32.mrb[0].mxu0
      %4994 = vmatprep.mubr.bf16.mxu0 0
      %4995 = vmatmul.mubr.bf16.gmra.mrb[0].mxu0 %v4702
      %v4996 = vpop.f32.mrb[0].mxu0
      %v4997 = vadd.f32 %v4820, %v4996
      %v4998 = vpop.f32.mrb[0].mxu0
      %v4999 = vpop.f32.mrb[0].mxu0
      %v5000 = vadd.f32 %v4823, %v4999
      %v5001 = vpop.f32.mrb[0].mxu0
      %5002 = vmatprep.mubr.bf16.mxu0 0
      %5003 = vmatmul.mubr.bf16.gmra.mrb[0].mxu0 %v4705
      %v5004 = vpop.f32.mrb[0].mxu0
      %v5005 = vadd.f32 %v4828, %v5004
      %v5006 = vpop.f32.mrb[0].mxu0
      %v5007 = vpop.f32.mrb[0].mxu0
      %v5008 = vadd.f32 %v4831, %v5007
      %v5009 = vpop.f32.mrb[0].mxu0
      %5010 = vmatprep.mubr.bf16.mxu0 0
      %5011 = vmatmul.mubr.bf16.gmra.mrb[0].mxu0 %v4708
      %v5012 = vpop.f32.mrb[0].mxu0
      %v5013 = vadd.f32 %v4836, %v5012
      %v5014 = vpop.f32.mrb[0].mxu0
      %v5015 = vpop.f32.mrb[0].mxu0
      %v5016 = vadd.f32 %v4839, %v5015
      %v5017 = vpop.f32.mrb[0].mxu0
      %5018 = vmatprep.mubr.bf16.mxu0 0
      %5019 = vmatmul.mubr.bf16.gmra.mrb[0].mxu0 %v4711
      %v5020 = vpop.f32.mrb[0].mxu0
      %v5021 = vadd.f32 %v4844, %v5020
      %v5022 = vpop.f32.mrb[0].mxu0
      %v5023 = vpop.f32.mrb[0].mxu0
      %v5024 = vadd.f32 %v4847, %v5023
      %v5025 = vpop.f32.mrb[0].mxu0
      %5026 = vmatprep.mubr.bf16.mxu0 0
      %5027 = vmatmul.mubr.bf16.gmra.mrb[0].mxu0 %v4714
      %v5028 = vpop.f32.mrb[0].mxu0
      %v5029 = vadd.f32 %v4852, %v5028
      %v5030 = vpop.f32.mrb[0].mxu0
      %v5031 = vpop.f32.mrb[0].mxu0
      %v5032 = vadd.f32 %v4855, %v5031
      %v5033 = vpop.f32.mrb[0].mxu0
      %5034 = vmatprep.mubr.bf16.mxu0 0
      %5035 = vmatmul.mubr.bf16.gmra.mrb[0].mxu0 %v4717
      %v5036 = vpop.f32.mrb[0].mxu0
      %v5037 = vadd.f32 %v4860, %v5036
      %v5038 = vpop.f32.mrb[0].mxu0
      %v5039 = vpop.f32.mrb[0].mxu0
      %v5040 = vadd.f32 %v4863, %v5039
      %v5041 = vpop.f32.mrb[0].mxu0
      %5042 = vmatprep.mubr.bf16.mxu0 0
      %5043 = vmatmul.mubr.bf16.gmra.mrb[0].mxu0 %v4720
      %v5044 = vpop.f32.mrb[0].mxu0
      %v5045 = vadd.f32 %v4868, %v5044
      %v5046 = vpop.f32.mrb[0].mxu0
      %v5047 = vpop.f32.mrb[0].mxu0
      %v5048 = vadd.f32 %v4871, %v5047
      %v5049 = vpop.f32.mrb[0].mxu0
      %5050 = vmatprep.mubr.bf16.mxu0 0
      %5051 = vmatmul.mubr.bf16.gmra.mrb[0].mxu0 %v4723
      %v5052 = vpop.f32.mrb[0].mxu0
      %v5053 = vadd.f32 %v4876, %v5052
      %v5054 = vpop.f32.mrb[0].mxu0
      %v5055 = vpop.f32.mrb[0].mxu0
      %v5056 = vadd.f32 %v4879, %v5055
      %v5057 = vpop.f32.mrb[0].mxu0
      %5058 = vmatprep.mubr.bf16.mxu0 0
      %5059 = vmatmul.mubr.bf16.gmra.mrb[0].mxu0 %v4726
      %v5060 = vpop.f32.mrb[0].mxu0
      %v5061 = vadd.f32 %v4884, %v5060
      %v5062 = vpop.f32.mrb[0].mxu0
      %v5063 = vpop.f32.mrb[0].mxu0
      %v5064 = vadd.f32 %v4887, %v5063
      %v5065 = vpop.f32.mrb[0].mxu0
      %5066 = vmatprep.mubr.bf16.mxu0 0
      %5067 = vmatmul.mubr.bf16.gmra.mrb[0].mxu0 %v4729
      %v5068 = vpop.f32.mrb[0].mxu0
      %v5069 = vadd.f32 %v4892, %v5068
      %v5070 = vpop.f32.mrb[0].mxu0
      %v5071 = vpop.f32.mrb[0].mxu0
      %v5072 = vadd.f32 %v4895, %v5071
      %v5073 = vpop.f32.mrb[0].mxu0
      %5074 = vmatprep.mubr.bf16.mxu0 0
      %5075 = vmatmul.mubr.bf16.gmra.mrb[0].mxu0 %v4732
      %v5076 = vpop.f32.mrb[0].mxu0
      %v5077 = vadd.f32 %v4900, %v5076
      %v5078 = vpop.f32.mrb[0].mxu0
      %v5079 = vpop.f32.mrb[0].mxu0
      %v5080 = vadd.f32 %v4903, %v5079
      %v5081 = vpop.f32.mrb[0].mxu0
      %5082 = vmatprep.mubr.bf16.mxu0 0
      %5083 = vmatmul.mubr.bf16.gmra.mrb[0].mxu0 %v4735
      %v5084 = vpop.f32.mrb[0].mxu0
      %v5085 = vadd.f32 %v4908, %v5084
      %v5086 = vpop.f32.mrb[0].mxu0
      %v5087 = vpop.f32.mrb[0].mxu0
      %v5088 = vadd.f32 %v4911, %v5087
      %v5089 = vpop.f32.mrb[0].mxu0
      %5090 = vdwg.mxu0
      %v5091 = vld [vmem:[%s5] sm:$0x1]
      %v5092 = vld [vmem:[%s6] sm:$0x1]
      %v5093 = vmul.f32 %v4949, %v1907
      %v5094 = vmul.f32 %v4952, %v1912
      %v5095 = vmul.f32 %v4957, %v1917
      %v5096 = vmul.f32 %v4960, %v1922
      %v5097 = vmul.f32 %v4965, %v1927
      %v5098 = vmul.f32 %v4968, %v1932
      %v5099 = vmul.f32 %v4973, %v1937
      %v5100 = vmul.f32 %v4976, %v1942
      %v5101 = vmul.f32 %v4981, %v1947
      %v5102 = vmul.f32 %v4984, %v1952
      %v5103 = vmul.f32 %v4989, %v1957
      %v5104 = vmul.f32 %v4992, %v1962
      %v5105 = vmul.f32 %v4997, %v1967
      %v5106 = vmul.f32 %v5000, %v1972
      %v5107 = vmul.f32 %v5005, %v1977
      %v5108 = vmul.f32 %v5008, %v1982
      %v5109 = vmul.f32 %v5013, %v1987
      %v5110 = vmul.f32 %v5016, %v1992
      %v5111 = vmul.f32 %v5021, %v1997
      %v5112 = vmul.f32 %v5024, %v2002
      %v5113 = vmul.f32 %v5029, %v2007
      %v5114 = vmul.f32 %v5032, %v2012
      %v5115 = vmul.f32 %v5037, %v2017
      %v5116 = vmul.f32 %v5040, %v2022
      %v5117 = vmul.f32 %v5045, %v2027
      %v5118 = vmul.f32 %v5048, %v2032
      %v5119 = vmul.f32 %v5053, %v2037
      %v5120 = vmul.f32 %v5056, %v2042
      %v5121 = vmul.f32 %v5061, %v2047
      %v5122 = vmul.f32 %v5064, %v2052
      %v5123 = vmul.f32 %v5069, %v2057
      %v5124 = vmul.f32 %v5072, %v2062
      %v5125 = vmul.f32 %v5077, %v2067
      %v5126 = vmul.f32 %v5080, %v2072
      %v5127 = vmul.f32 %v5085, %v2077
      %v5128 = vmul.f32 %v5088, %v2082
      %v5129 = vsel %vm1627, %v5093, 0.0
      %v5130 = vsel %vm1627, %v5094, 0.0
      %v5131 = vadd.f32 %v5129, %v5130
      %v5132 = vsel %vm1627, %v5095, 0.0
      %v5133 = vadd.f32 %v5131, %v5132
      %v5134 = vsel %vm1627, %v5096, 0.0
      %v5135 = vadd.f32 %v5133, %v5134
      %v5136 = vsel %vm1627, %v5097, 0.0
      %v5137 = vadd.f32 %v5135, %v5136
      %v5138 = vsel %vm1627, %v5098, 0.0
      %v5139 = vadd.f32 %v5137, %v5138
      %v5140 = vsel %vm1627, %v5099, 0.0
      %v5141 = vadd.f32 %v5139, %v5140
      %v5142 = vsel %vm1627, %v5100, 0.0
      %v5143 = vadd.f32 %v5141, %v5142
      %v5144 = vsel %vm1627, %v5101, 0.0
      %v5145 = vadd.f32 %v5143, %v5144
      %v5146 = vsel %vm1627, %v5102, 0.0
      %v5147 = vadd.f32 %v5145, %v5146
      %v5148 = vsel %vm1627, %v5103, 0.0
      %v5149 = vadd.f32 %v5147, %v5148
      %v5150 = vsel %vm1627, %v5104, 0.0
      %v5151 = vadd.f32 %v5149, %v5150
      %v5152 = vsel %vm1627, %v5105, 0.0
      %v5153 = vadd.f32 %v5151, %v5152
      %v5154 = vsel %vm1627, %v5106, 0.0
      %v5155 = vadd.f32 %v5153, %v5154
      %v5156 = vsel %vm1627, %v5107, 0.0
      %v5157 = vadd.f32 %v5155, %v5156
      %v5158 = vsel %vm1627, %v5108, 0.0
      %v5159 = vadd.f32 %v5157, %v5158
      %v5160 = vsel %vm1627, %v5109, 0.0
      %v5161 = vadd.f32 %v5159, %v5160
      %v5162 = vsel %vm1627, %v5110, 0.0
      %v5163 = vadd.f32 %v5161, %v5162
      %v5164 = vsel %vm1627, %v5111, 0.0
      %v5165 = vadd.f32 %v5163, %v5164
      %v5166 = vsel %vm1627, %v5112, 0.0
      %v5167 = vadd.f32 %v5165, %v5166
      %v5168 = vsel %vm1627, %v5113, 0.0
      %v5169 = vadd.f32 %v5167, %v5168
      %v5170 = vsel %vm1627, %v5114, 0.0
      %v5171 = vadd.f32 %v5169, %v5170
      %v5172 = vsel %vm1627, %v5115, 0.0
      %v5173 = vadd.f32 %v5171, %v5172
      %v5174 = vsel %vm1627, %v5116, 0.0
      %v5175 = vadd.f32 %v5173, %v5174
      %v5176 = vsel %vm1627, %v5117, 0.0
      %v5177 = vadd.f32 %v5175, %v5176
      %v5178 = vsel %vm1627, %v5118, 0.0
      %v5179 = vadd.f32 %v5177, %v5178
      %v5180 = vsel %vm1627, %v5119, 0.0
      %v5181 = vadd.f32 %v5179, %v5180
      %v5182 = vsel %vm1627, %v5120, 0.0
      %v5183 = vadd.f32 %v5181, %v5182
      %v5184 = vsel %vm1627, %v5121, 0.0
      %v5185 = vadd.f32 %v5183, %v5184
      %v5186 = vsel %vm1627, %v5122, 0.0
      %v5187 = vadd.f32 %v5185, %v5186
      %v5188 = vsel %vm1627, %v5123, 0.0
      %v5189 = vadd.f32 %v5187, %v5188
      %v5190 = vsel %vm1627, %v5124, 0.0
      %v5191 = vadd.f32 %v5189, %v5190
      %v5192 = vsel %vm1627, %v5125, 0.0
      %v5193 = vadd.f32 %v5191, %v5192
      %v5194 = vsel %vm1627, %v5126, 0.0
      %v5195 = vadd.f32 %v5193, %v5194
      %v5196 = vsel %vm1627, %v5127, 0.0
      %v5197 = vadd.f32 %v5195, %v5196
      %v5198 = vsel %vm1627, %v5128, 0.0
      %v5199 = vadd.f32 %v5197, %v5198
      %v5200 = vrot.slane %v5199, 4
      %v5201 = vadd.f32 %v5199, %v5200
      %v5202 = vrot.slane %v5201, 2
      %v5203 = vadd.f32 %v5201, %v5202
      %v5204 = vrot.slane %v5203, 1
      %v5205 = vadd.f32 %v5203, %v5204
      %v5206 = vmul.f32 %v5093, %v4949
      %v5207 = vmul.f32 %v5094, %v4952
      %v5208 = vmul.f32 %v5095, %v4957
      %v5209 = vmul.f32 %v5096, %v4960
      %v5210 = vmul.f32 %v5097, %v4965
      %v5211 = vmul.f32 %v5098, %v4968
      %v5212 = vmul.f32 %v5099, %v4973
      %v5213 = vmul.f32 %v5100, %v4976
      %v5214 = vmul.f32 %v5101, %v4981
      %v5215 = vmul.f32 %v5102, %v4984
      %v5216 = vmul.f32 %v5103, %v4989
      %v5217 = vmul.f32 %v5104, %v4992
      %v5218 = vmul.f32 %v5105, %v4997
      %v5219 = vmul.f32 %v5106, %v5000
      %v5220 = vmul.f32 %v5107, %v5005
      %v5221 = vmul.f32 %v5108, %v5008
      %v5222 = vmul.f32 %v5109, %v5013
      %v5223 = vmul.f32 %v5110, %v5016
      %v5224 = vmul.f32 %v5111, %v5021
      %v5225 = vmul.f32 %v5112, %v5024
      %v5226 = vmul.f32 %v5113, %v5029
      %v5227 = vmul.f32 %v5114, %v5032
      %v5228 = vmul.f32 %v5115, %v5037
      %v5229 = vmul.f32 %v5116, %v5040
      %v5230 = vmul.f32 %v5117, %v5045
      %v5231 = vmul.f32 %v5118, %v5048
      %v5232 = vmul.f32 %v5119, %v5053
      %v5233 = vmul.f32 %v5120, %v5056
      %v5234 = vmul.f32 %v5121, %v5061
      %v5235 = vmul.f32 %v5122, %v5064
      %v5236 = vmul.f32 %v5123, %v5069
      %v5237 = vmul.f32 %v5124, %v5072
      %v5238 = vmul.f32 %v5125, %v5077
      %v5239 = vmul.f32 %v5126, %v5080
      %v5240 = vmul.f32 %v5127, %v5085
      %v5241 = vmul.f32 %v5128, %v5088
      %v5242 = vsel %vm1627, %v5206, 0.0
      %v5243 = vsel %vm1627, %v5207, 0.0
      %v5244 = vadd.f32 %v5242, %v5243
      %v5245 = vsel %vm1627, %v5208, 0.0
      %v5246 = vadd.f32 %v5244, %v5245
      %v5247 = vsel %vm1627, %v5209, 0.0
      %v5248 = vadd.f32 %v5246, %v5247
      %v5249 = vsel %vm1627, %v5210, 0.0
      %v5250 = vadd.f32 %v5248, %v5249
      %v5251 = vsel %vm1627, %v5211, 0.0
      %v5252 = vadd.f32 %v5250, %v5251
      %v5253 = vsel %vm1627, %v5212, 0.0
      %v5254 = vadd.f32 %v5252, %v5253
      %v5255 = vsel %vm1627, %v5213, 0.0
      %v5256 = vadd.f32 %v5254, %v5255
      %v5257 = vsel %vm1627, %v5214, 0.0
      %v5258 = vadd.f32 %v5256, %v5257
      %v5259 = vsel %vm1627, %v5215, 0.0
      %v5260 = vadd.f32 %v5258, %v5259
      %v5261 = vsel %vm1627, %v5216, 0.0
      %v5262 = vadd.f32 %v5260, %v5261
      %v5263 = vsel %vm1627, %v5217, 0.0
      %v5264 = vadd.f32 %v5262, %v5263
      %v5265 = vsel %vm1627, %v5218, 0.0
      %v5266 = vadd.f32 %v5264, %v5265
      %v5267 = vsel %vm1627, %v5219, 0.0
      %v5268 = vadd.f32 %v5266, %v5267
      %v5269 = vsel %vm1627, %v5220, 0.0
      %v5270 = vadd.f32 %v5268, %v5269
      %v5271 = vsel %vm1627, %v5221, 0.0
      %v5272 = vadd.f32 %v5270, %v5271
      %v5273 = vsel %vm1627, %v5222, 0.0
      %v5274 = vadd.f32 %v5272, %v5273
      %v5275 = vsel %vm1627, %v5223, 0.0
      %v5276 = vadd.f32 %v5274, %v5275
      %v5277 = vsel %vm1627, %v5224, 0.0
      %v5278 = vadd.f32 %v5276, %v5277
      %v5279 = vsel %vm1627, %v5225, 0.0
      %v5280 = vadd.f32 %v5278, %v5279
      %v5281 = vsel %vm1627, %v5226, 0.0
      %v5282 = vadd.f32 %v5280, %v5281
      %v5283 = vsel %vm1627, %v5227, 0.0
      %v5284 = vadd.f32 %v5282, %v5283
      %v5285 = vsel %vm1627, %v5228, 0.0
      %v5286 = vadd.f32 %v5284, %v5285
      %v5287 = vsel %vm1627, %v5229, 0.0
      %v5288 = vadd.f32 %v5286, %v5287
      %v5289 = vsel %vm1627, %v5230, 0.0
      %v5290 = vadd.f32 %v5288, %v5289
      %v5291 = vsel %vm1627, %v5231, 0.0
      %v5292 = vadd.f32 %v5290, %v5291
      %v5293 = vsel %vm1627, %v5232, 0.0
      %v5294 = vadd.f32 %v5292, %v5293
      %v5295 = vsel %vm1627, %v5233, 0.0
      %v5296 = vadd.f32 %v5294, %v5295
      %v5297 = vsel %vm1627, %v5234, 0.0
      %v5298 = vadd.f32 %v5296, %v5297
      %v5299 = vsel %vm1627, %v5235, 0.0
      %v5300 = vadd.f32 %v5298, %v5299
      %v5301 = vsel %vm1627, %v5236, 0.0
      %v5302 = vadd.f32 %v5300, %v5301
      %v5303 = vsel %vm1627, %v5237, 0.0
      %v5304 = vadd.f32 %v5302, %v5303
      %v5305 = vsel %vm1627, %v5238, 0.0
      %v5306 = vadd.f32 %v5304, %v5305
      %v5307 = vsel %vm1627, %v5239, 0.0
      %v5308 = vadd.f32 %v5306, %v5307
      %v5309 = vsel %vm1627, %v5240, 0.0
      %v5310 = vadd.f32 %v5308, %v5309
      %v5311 = vsel %vm1627, %v5241, 0.0
      %v5312 = vadd.f32 %v5310, %v5311
      %v5313 = vrot.slane %v5312, 4
      %v5314 = vadd.f32 %v5312, %v5313
      %v5315 = vrot.slane %v5314, 2
      %v5316 = vadd.f32 %v5314, %v5315
      %v5317 = vrot.slane %v5316, 1
      %v5318 = vadd.f32 %v5316, %v5317
      %v5319 = vsel %vm2310, %v5205, %v5318
      %v5321 = vsel %vm1627, %v5319, 0
      %5323 = vmatprep.subr.mxu0 0.0
      %5324 = vmatpush1.msra.mxu0 %v2312
      %5325 = vmatprep.subr.mxu0 0.0
      %5326 = vmatpush1.msra.mxu0 %v2313
      %5327 = vmatprep.subr.mxu0 0.0
      %5328 = vmatpush1.msra.mxu0 %v2314
      %5329 = vmatprep.subr.mxu0 0.0
      %5330 = vmatpush1.msra.mxu0 %v2315
      %5331 = vmatprep.subr.mxu0 0.0
      %5332 = vmatpush1.msra.mxu0 0.0
      %5333 = vmatprep.subr.mxu0 0.0
      %5334 = vmatpush1.msra.mxu0 0.0
      %5335 = vmatprep.subr.mxu0 0.0
      %5336 = vmatpush1.msra.mxu0 0.0
      %5337 = vmatprep.subr.mxu0 0.0
      %5338 = vmatpush1.msra.mxu0 0.0
      %5339 = vmatprep.subr.mxu0 0.0
      %5340 = vmatpush1.msra.mxu0 0.0
      %5341 = vmatprep.subr.mxu0 0.0
      %5342 = vmatpush1.msra.mxu0 0.0
      %5343 = vmatprep.subr.mxu0 0.0
      %5344 = vmatpush1.msra.mxu0 0.0
      %5345 = vmatprep.subr.mxu0 0.0
      %5346 = vmatpush1.msra.mxu0 0.0
      %5347 = vmatprep.subr.mxu0 0.0
      %5348 = vmatpush1.msra.mxu0 0.0
      %5349 = vmatprep.subr.mxu0 0.0
      %5350 = vmatpush1.msra.mxu0 0.0
      %5351 = vmatprep.subr.mxu0 0.0
      %5352 = vmatpush1.msra.mxu0 0.0
      %5353 = vmatprep.subr.mxu0 0.0
      %5354 = vmatpush1.msra.mxu0 0.0
      %5355 = vmatprep.subr.mxu0 0.0
      %5356 = vmatpush1.msra.mxu0 0.0
      %5357 = vmatprep.subr.mxu0 0.0
      %5358 = vmatpush1.msra.mxu0 0.0
      %5359 = vmatprep.subr.mxu0 0.0
      %5360 = vmatpush1.msra.mxu0 0.0
      %5361 = vmatprep.subr.mxu0 0.0
      %5362 = vmatpush1.msra.mxu0 0.0
      %5363 = vmatprep.subr.mxu0 0.0
      %5364 = vmatpush1.msra.mxu0 0.0
      %5365 = vmatprep.subr.mxu0 0.0
      %5366 = vmatpush1.msra.mxu0 0.0
      %5367 = vmatprep.subr.mxu0 0.0
      %5368 = vmatpush1.msra.mxu0 0.0
      %5369 = vmatprep.subr.mxu0 0.0
      %5370 = vmatpush1.msra.mxu0 0.0
      %5371 = vmatprep.subr.mxu0 0.0
      %5372 = vmatpush1.msra.mxu0 0.0
      %5373 = vmatprep.subr.mxu0 0.0
      %5374 = vmatpush1.msra.mxu0 0.0
      %5375 = vmatprep.subr.mxu0 0.0
      %5376 = vmatpush1.msra.mxu0 0.0
      %5377 = vmatprep.subr.mxu0 0.0
      %5378 = vmatpush1.msra.mxu0 0.0
      %5379 = vmatprep.subr.mxu0 0.0
      %5380 = vmatpush1.msra.mxu0 0.0
      %5381 = vmatprep.subr.mxu0 0.0
      %5382 = vmatpush1.msra.mxu0 0.0
      %5383 = vmatprep.subr.mxu0 0.0
      %5384 = vmatpush1.msra.mxu0 0.0
      %5385 = vmatprep.subr.mxu0 0.0
      %5386 = vmatpush1.msra.mxu0 0.0
      %5387 = vmatprep.mubr.f32.mxu0 0.0
      %5388 = vmatmul.mubr.f32.gmra.mrb[0].mxu0 %v5321
      %v5389 = vpop.f32.mrb[0].mxu0
      %v5390 = vadd.f32 0.0, %v5389
      %v5391 = vpop.f32.mrb[0].mxu0
      %5392 = vdwg.mxu0
      %v5393 = vmul.f32 %v5390, %v5390
      %v5395 = vrot.slane %v5393, 7
      %v5397 = vsub.f32 %v5390, %v5395
      %v5398 = vmax.f32 %v5397, 0.0
      %v5399 = vadd.f32 %v5398, 1e-05
      %v5400 = vrsqrt.pop %v5399
      %v5403 = vunpack.c.l.s4 1966171168
      %v5404 = vunpack.c.0.s8 %v5403
      %v5405 = vlaneseq
      %v5406 = vshrl.u32 %v5405, 7
      %v5407 = vsub.s32 %v5404, %v5406
      %v5408 = vrot.slane %v5400, %v5407
      %v5409 = vcombine.high %v5408, %v5408
      %v5411 = vunpack.c.l.s4 1966171168
      %v5412 = vunpack.c.0.s8 %v5411
      %v5413 = vlaneseq
      %v5414 = vshrl.u32 %v5413, 7
      %v5415 = vsub.s32 %v5412, %v5414
      %v5416 = vrot.slane %v5409, %v5415
      %v5418 = vmul.f32 %v5091, %v5416
      %v5419 = vmul.f32 %v5390, %v5418
      %v5420 = vsub.f32 %v5092, %v5419
      %v5422 = vlaneseq
      %v5423 = vshrl.u32 %v5422, 7
      %v5424 = vsub.s32 0, %v5423
      %v5425 = vrot.slane %v5418, %v5424
      %v5427 = vmul.f32 %v4949, %v5425
      %v5428 = vmul.f32 %v4952, %v5425
      %v5429 = vmul.f32 %v4957, %v5425
      %v5430 = vmul.f32 %v4960, %v5425
      %v5431 = vmul.f32 %v4965, %v5425
      %v5432 = vmul.f32 %v4968, %v5425
      %v5433 = vmul.f32 %v4973, %v5425
      %v5434 = vmul.f32 %v4976, %v5425
      %v5435 = vmul.f32 %v4981, %v5425
      %v5436 = vmul.f32 %v4984, %v5425
      %v5437 = vmul.f32 %v4989, %v5425
      %v5438 = vmul.f32 %v4992, %v5425
      %v5439 = vmul.f32 %v4997, %v5425
      %v5440 = vmul.f32 %v5000, %v5425
      %v5441 = vmul.f32 %v5005, %v5425
      %v5442 = vmul.f32 %v5008, %v5425
      %v5443 = vmul.f32 %v5013, %v5425
      %v5444 = vmul.f32 %v5016, %v5425
      %v5445 = vmul.f32 %v5021, %v5425
      %v5446 = vmul.f32 %v5024, %v5425
      %v5447 = vmul.f32 %v5029, %v5425
      %v5448 = vmul.f32 %v5032, %v5425
      %v5449 = vmul.f32 %v5037, %v5425
      %v5450 = vmul.f32 %v5040, %v5425
      %v5451 = vmul.f32 %v5045, %v5425
      %v5452 = vmul.f32 %v5048, %v5425
      %v5453 = vmul.f32 %v5053, %v5425
      %v5454 = vmul.f32 %v5056, %v5425
      %v5455 = vmul.f32 %v5061, %v5425
      %v5456 = vmul.f32 %v5064, %v5425
      %v5457 = vmul.f32 %v5069, %v5425
      %v5458 = vmul.f32 %v5072, %v5425
      %v5459 = vmul.f32 %v5077, %v5425
      %v5460 = vmul.f32 %v5080, %v5425
      %v5461 = vmul.f32 %v5085, %v5425
      %v5462 = vmul.f32 %v5088, %v5425
      %v5464 = vlaneseq
      %v5465 = vshrl.u32 %v5464, 7
      %v5466 = vsub.s32 0, %v5465
      %v5467 = vrot.slane %v5420, %v5466
      %v5469 = vadd.f32 %v5427, %v5467
      %v5470 = vadd.f32 %v5428, %v5467
      %v5471 = vadd.f32 %v5429, %v5467
      %v5472 = vadd.f32 %v5430, %v5467
      %v5473 = vadd.f32 %v5431, %v5467
      %v5474 = vadd.f32 %v5432, %v5467
      %v5475 = vadd.f32 %v5433, %v5467
      %v5476 = vadd.f32 %v5434, %v5467
      %v5477 = vadd.f32 %v5435, %v5467
      %v5478 = vadd.f32 %v5436, %v5467
      %v5479 = vadd.f32 %v5437, %v5467
      %v5480 = vadd.f32 %v5438, %v5467
      %v5481 = vadd.f32 %v5439, %v5467
      %v5482 = vadd.f32 %v5440, %v5467
      %v5483 = vadd.f32 %v5441, %v5467
      %v5484 = vadd.f32 %v5442, %v5467
      %v5485 = vadd.f32 %v5443, %v5467
      %v5486 = vadd.f32 %v5444, %v5467
      %v5487 = vadd.f32 %v5445, %v5467
      %v5488 = vadd.f32 %v5446, %v5467
      %v5489 = vadd.f32 %v5447, %v5467
      %v5490 = vadd.f32 %v5448, %v5467
      %v5491 = vadd.f32 %v5449, %v5467
      %v5492 = vadd.f32 %v5450, %v5467
      %v5493 = vadd.f32 %v5451, %v5467
      %v5494 = vadd.f32 %v5452, %v5467
      %v5495 = vadd.f32 %v5453, %v5467
      %v5496 = vadd.f32 %v5454, %v5467
      %v5497 = vadd.f32 %v5455, %v5467
      %v5498 = vadd.f32 %v5456, %v5467
      %v5499 = vadd.f32 %v5457, %v5467
      %v5500 = vadd.f32 %v5458, %v5467
      %v5501 = vadd.f32 %v5459, %v5467
      %v5502 = vadd.f32 %v5460, %v5467
      %v5503 = vadd.f32 %v5461, %v5467
      %v5504 = vadd.f32 %v5462, %v5467
      %vm5505 = vcmp.ge.f32.partialorder %v5469, 0.0
      %vm5506 = vcmp.ge.f32.partialorder %v5470, 0.0
      %vm5507 = vcmp.ge.f32.partialorder %v5471, 0.0
      %vm5508 = vcmp.ge.f32.partialorder %v5472, 0.0
      %vm5509 = vcmp.ge.f32.partialorder %v5473, 0.0
      %vm5510 = vcmp.ge.f32.partialorder %v5474, 0.0
      %vm5511 = vcmp.ge.f32.partialorder %v5475, 0.0
      %vm5512 = vcmp.ge.f32.partialorder %v5476, 0.0
      %vm5513 = vcmp.ge.f32.partialorder %v5477, 0.0
      %vm5514 = vcmp.ge.f32.partialorder %v5478, 0.0
      %vm5515 = vcmp.ge.f32.partialorder %v5479, 0.0
      %vm5516 = vcmp.ge.f32.partialorder %v5480, 0.0
      %vm5517 = vcmp.ge.f32.partialorder %v5481, 0.0
      %vm5518 = vcmp.ge.f32.partialorder %v5482, 0.0
      %vm5519 = vcmp.ge.f32.partialorder %v5483, 0.0
      %vm5520 = vcmp.ge.f32.partialorder %v5484, 0.0
      %vm5521 = vcmp.ge.f32.partialorder %v5485, 0.0
      %vm5522 = vcmp.ge.f32.partialorder %v5486, 0.0
      %vm5523 = vcmp.ge.f32.partialorder %v5487, 0.0
      %vm5524 = vcmp.ge.f32.partialorder %v5488, 0.0
      %vm5525 = vcmp.ge.f32.partialorder %v5489, 0.0
      %vm5526 = vcmp.ge.f32.partialorder %v5490, 0.0
      %vm5527 = vcmp.ge.f32.partialorder %v5491, 0.0
      %vm5528 = vcmp.ge.f32.partialorder %v5492, 0.0
      %vm5529 = vcmp.ge.f32.partialorder %v5493, 0.0
      %vm5530 = vcmp.ge.f32.partialorder %v5494, 0.0
      %vm5531 = vcmp.ge.f32.partialorder %v5495, 0.0
      %vm5532 = vcmp.ge.f32.partialorder %v5496, 0.0
      %vm5533 = vcmp.ge.f32.partialorder %v5497, 0.0
      %vm5534 = vcmp.ge.f32.partialorder %v5498, 0.0
      %vm5535 = vcmp.ge.f32.partialorder %v5499, 0.0
      %vm5536 = vcmp.ge.f32.partialorder %v5500, 0.0
      %vm5537 = vcmp.ge.f32.partialorder %v5501, 0.0
      %vm5538 = vcmp.ge.f32.partialorder %v5502, 0.0
      %vm5539 = vcmp.ge.f32.partialorder %v5503, 0.0
      %vm5540 = vcmp.ge.f32.partialorder %v5504, 0.0
      %v5541 = vmul.f32 %v5469, 0.01
      %v5542 = vmul.f32 %v5470, 0.01
      %v5543 = vmul.f32 %v5471, 0.01
      %v5544 = vmul.f32 %v5472, 0.01
      %v5545 = vmul.f32 %v5473, 0.01
      %v5546 = vmul.f32 %v5474, 0.01
      %v5547 = vmul.f32 %v5475, 0.01
      %v5548 = vmul.f32 %v5476, 0.01
      %v5549 = vmul.f32 %v5477, 0.01
      %v5550 = vmul.f32 %v5478, 0.01
      %v5551 = vmul.f32 %v5479, 0.01
      %v5552 = vmul.f32 %v5480, 0.01
      %v5553 = vmul.f32 %v5481, 0.01
      %v5554 = vmul.f32 %v5482, 0.01
      %v5555 = vmul.f32 %v5483, 0.01
      %v5556 = vmul.f32 %v5484, 0.01
      %v5557 = vmul.f32 %v5485, 0.01
      %v5558 = vmul.f32 %v5486, 0.01
      %v5559 = vmul.f32 %v5487, 0.01
      %v5560 = vmul.f32 %v5488, 0.01
      %v5561 = vmul.f32 %v5489, 0.01
      %v5562 = vmul.f32 %v5490, 0.01
      %v5563 = vmul.f32 %v5491, 0.01
      %v5564 = vmul.f32 %v5492, 0.01
      %v5565 = vmul.f32 %v5493, 0.01
      %v5566 = vmul.f32 %v5494, 0.01
      %v5567 = vmul.f32 %v5495, 0.01
      %v5568 = vmul.f32 %v5496, 0.01
      %v5569 = vmul.f32 %v5497, 0.01
      %v5570 = vmul.f32 %v5498, 0.01
      %v5571 = vmul.f32 %v5499, 0.01
      %v5572 = vmul.f32 %v5500, 0.01
      %v5573 = vmul.f32 %v5501, 0.01
      %v5574 = vmul.f32 %v5502, 0.01
      %v5575 = vmul.f32 %v5503, 0.01
      %v5576 = vmul.f32 %v5504, 0.01
      %v5577 = vsel %vm5505, %v5469, %v5541
      %v5578 = vsel %vm5506, %v5470, %v5542
      %v5579 = vsel %vm5507, %v5471, %v5543
      %v5580 = vsel %vm5508, %v5472, %v5544
      %v5581 = vsel %vm5509, %v5473, %v5545
      %v5582 = vsel %vm5510, %v5474, %v5546
      %v5583 = vsel %vm5511, %v5475, %v5547
      %v5584 = vsel %vm5512, %v5476, %v5548
      %v5585 = vsel %vm5513, %v5477, %v5549
      %v5586 = vsel %vm5514, %v5478, %v5550
      %v5587 = vsel %vm5515, %v5479, %v5551
      %v5588 = vsel %vm5516, %v5480, %v5552
      %v5589 = vsel %vm5517, %v5481, %v5553
      %v5590 = vsel %vm5518, %v5482, %v5554
      %v5591 = vsel %vm5519, %v5483, %v5555
      %v5592 = vsel %vm5520, %v5484, %v5556
      %v5593 = vsel %vm5521, %v5485, %v5557
      %v5594 = vsel %vm5522, %v5486, %v5558
      %v5595 = vsel %vm5523, %v5487, %v5559
      %v5596 = vsel %vm5524, %v5488, %v5560
      %v5597 = vsel %vm5525, %v5489, %v5561
      %v5598 = vsel %vm5526, %v5490, %v5562
      %v5599 = vsel %vm5527, %v5491, %v5563
      %v5600 = vsel %vm5528, %v5492, %v5564
      %v5601 = vsel %vm5529, %v5493, %v5565
      %v5602 = vsel %vm5530, %v5494, %v5566
      %v5603 = vsel %vm5531, %v5495, %v5567
      %v5604 = vsel %vm5532, %v5496, %v5568
      %v5605 = vsel %vm5533, %v5497, %v5569
      %v5606 = vsel %vm5534, %v5498, %v5570
      %v5607 = vsel %vm5535, %v5499, %v5571
      %v5608 = vsel %vm5536, %v5500, %v5572
      %v5609 = vsel %vm5537, %v5501, %v5573
      %v5610 = vsel %vm5538, %v5502, %v5574
      %v5611 = vsel %vm5539, %v5503, %v5575
      %v5612 = vsel %vm5540, %v5504, %v5576
      %5613 = vst.msk [vmem:[%s332] sm:$0xff] %vm1627, %v5577
      %5614 = vst.msk [vmem:[%s332 + $0x8] sm:$0xff] %vm1627, %v5578
      %5615 = vst.msk [vmem:[%s332 + $0x10] sm:$0xff] %vm1627, %v5579
      %5616 = vst.msk [vmem:[%s332 + $0x18] sm:$0xff] %vm1627, %v5580
      %5617 = vst.msk [vmem:[%s332 + $0x20] sm:$0xff] %vm1627, %v5581
      %5618 = vst.msk [vmem:[%s332 + $0x28] sm:$0xff] %vm1627, %v5582
      %5619 = vst.msk [vmem:[%s332 + $0x30] sm:$0xff] %vm1627, %v5583
      %5620 = vst.msk [vmem:[%s332 + $0x38] sm:$0xff] %vm1627, %v5584
      %5621 = vst.msk [vmem:[%s332 + $0x40] sm:$0xff] %vm1627, %v5585
      %5622 = vst.msk [vmem:[%s332 + $0x48] sm:$0xff] %vm1627, %v5586
      %5623 = vst.msk [vmem:[%s332 + $0x50] sm:$0xff] %vm1627, %v5587
      %5624 = vst.msk [vmem:[%s332 + $0x58] sm:$0xff] %vm1627, %v5588
      %5625 = vst.msk [vmem:[%s332 + $0x60] sm:$0xff] %vm1627, %v5589
      %5626 = vst.msk [vmem:[%s332 + $0x68] sm:$0xff] %vm1627, %v5590
      %5627 = vst.msk [vmem:[%s332 + $0x70] sm:$0xff] %vm1627, %v5591
      %5628 = vst.msk [vmem:[%s332 + $0x78] sm:$0xff] %vm1627, %v5592
      %5629 = vst.msk [vmem:[%s332 + $0x80] sm:$0xff] %vm1627, %v5593
      %5630 = vst.msk [vmem:[%s332 + $0x88] sm:$0xff] %vm1627, %v5594
      %5631 = vst.msk [vmem:[%s332 + $0x90] sm:$0xff] %vm1627, %v5595
      %5632 = vst.msk [vmem:[%s332 + $0x98] sm:$0xff] %vm1627, %v5596
      %5633 = vst.msk [vmem:[%s332 + $0xa0] sm:$0xff] %vm1627, %v5597
      %5634 = vst.msk [vmem:[%s332 + $0xa8] sm:$0xff] %vm1627, %v5598
      %5635 = vst.msk [vmem:[%s332 + $0xb0] sm:$0xff] %vm1627, %v5599
      %5636 = vst.msk [vmem:[%s332 + $0xb8] sm:$0xff] %vm1627, %v5600
      %5637 = vst.msk [vmem:[%s332 + $0xc0] sm:$0xff] %vm1627, %v5601
      %5638 = vst.msk [vmem:[%s332 + $0xc8] sm:$0xff] %vm1627, %v5602
      %5639 = vst.msk [vmem:[%s332 + $0xd0] sm:$0xff] %vm1627, %v5603
      %5640 = vst.msk [vmem:[%s332 + $0xd8] sm:$0xff] %vm1627, %v5604
      %5641 = vst.msk [vmem:[%s332 + $0xe0] sm:$0xff] %vm1627, %v5605
      %5642 = vst.msk [vmem:[%s332 + $0xe8] sm:$0xff] %vm1627, %v5606
      %5643 = vst.msk [vmem:[%s332 + $0xf0] sm:$0xff] %vm1627, %v5607
      %5644 = vst.msk [vmem:[%s332 + $0xf8] sm:$0xff] %vm1627, %v5608
      %5645 = vst.msk [vmem:[%s332 + $0x100] sm:$0xff] %vm1627, %v5609
      %5646 = vst.msk [vmem:[%s332 + $0x108] sm:$0xff] %vm1627, %v5610
      %5647 = vst.msk [vmem:[%s332 + $0x110] sm:$0xff] %vm1627, %v5611
      %5648 = vst.msk [vmem:[%s332 + $0x118] sm:$0xff] %vm1627, %v5612
      %p5649 = scmp.lt.s32.totalorder %s20, 1
      %s5650 = scalar_select %p5649, %s20, 1
      %s5651 = smul.addr %s5650, 36
      %s5652 = smul.addr %s5651, 8
      %s5653 = scalar_lea.vmem %s9, %s5652
      // Predicated region
      $region57: #{tpu_custom_call.1} parent=55 // pred_check
        %p5654 = pneg %p232
      $region58: #{tpu_custom_call.1} parent=55 // pred_check_branch
        %5656 = sbr.rel (%p5654) target = $region60
      $region59: #{tpu_custom_call.1} parent=55 // pred_region
        _
      $region60: #{tpu_custom_call.1} parent=55 // pred_fallthru
        _
    $region56: #{tpu_custom_call.1} parent=5 // pred_fallthru
      _
    %p5657 = scmp.le.s32.totalorder 2, %s15
    // Predicated region
    $region61: #{tpu_custom_call.1} parent=5 // pred_check
      %p5658 = pneg %p5657
    $region62: #{tpu_custom_call.1} parent=5 // pred_check_branch
      %5660 = sbr.rel (%p5658) target = $region64
    $region63: #{tpu_custom_call.1} parent=5 // pred_region
      %s5661 = ssub.s32 %s15, 2
      // Predicated region
      $region65: #{tpu_custom_call.1} parent=63 // pred_check
        %p5662 = pneg %p238
      $region66: #{tpu_custom_call.1} parent=63 // pred_check_branch
        %5664 = sbr.rel (%p5662) target = $region68
      $region67: #{tpu_custom_call.1} parent=63 // pred_region
        %p5665 = scmp.lt.s32.totalorder %s21, 1
        %s5666 = scalar_select %p5665, %s21, 1
        %s5667 = smul.addr %s5666, 36
        %s5668 = smul.addr %s5667, 8
        %s5669 = scalar_lea.vmem %s9, %s5668
      $region68: #{tpu_custom_call.1} parent=63 // pred_fallthru
        _
    $region64: #{tpu_custom_call.1} parent=5 // pred_fallthru
      _
  $region6: #{tpu_custom_call.1} parent=0 // loop_footer
    %s19 = sadd.s32 1, %s15
  $region7: #{tpu_custom_call.1} parent=0 // loop_footer_branch
    %14 = sbr.rel target = $region3
  $region8: #{tpu_custom_call.1} parent=0 // loop_exit
    _

</llo_original>
